<compile_context>
chip_gen: v7x
topology: tpu7x:2x2x1
jax: 0.10.0
libtpu: 0.0.40
codegen_flags: <defaults>
</compile_context>

<pallas_src>
import functools
import math

import jax
import jax.numpy as jnp
from jax.experimental import pallas as pl
from jax.experimental.pallas import tpu as pltpu

LANE = 128  # lane-dense padding width for the 5-wide decoder outputs


def _layernorm(x, w, b, eps=1e-5):
    # PyTorch LayerNorm: biased variance over the last axis, eps inside rsqrt.
    mu = jnp.mean(x, axis=-1, keepdims=True)
    var = jnp.mean((x - mu) ** 2, axis=-1, keepdims=True)
    return (x - mu) * jax.lax.rsqrt(var + eps) * w + b


def transformer_kernel(
    v_ref,                          # [TB, S, 1]  f32   this batch block of V
    we_ref, be_ref, pe_ref,         # [1,D], [1,D], [S,D]           f32
    wq_ref, bq_ref,                 # [1,D,D] bf16, [1,1,D] f32     (scale folded in)
    wk_ref, bk_ref,                 # [1,D,D] bf16, [1,1,D] f32
    wv_ref, bv_ref,                 # [1,D,D] bf16, [1,1,D] f32
    wo_ref, bo_ref,                 # [1,D,D] bf16, [1,1,D] f32
    w1_ref, b1_ref,                 # [1,D,4D] bf16, [1,1,4D] f32
    w2_ref, b2_ref,                 # [1,4D,D] bf16, [1,1,D] f32
    n1w_ref, n1b_ref,               # [1,1,D] f32
    n2w_ref, n2b_ref,               # [1,1,D] f32
    ew1_ref, eb1_ref,               # [D,D] bf16, [1,D] f32         energy decoder
    ew2_ref, eb2_ref,               # [D,LANE] bf16, [1,LANE] f32   (zero-padded past 5)
    pw1_ref, pb1_ref,               # [D,D] bf16, [1,D] f32         wavefunction decoder
    pw2_ref, pb2_ref,               # [D,LANE] bf16, [1,LANE] f32
    e_ref,                          # [TB, 1, LANE]  output E_pred   (padded)
    psi_ref,                        # [TB, S, LANE]  output psi_pred (padded)
    x_scr,                          # [TB*S, D] f32 scratch, carried across the L axis
    q_scr, k_scr, v_scr, ctx_scr,   # [TB, S, D] f32 scratch each
    *, num_heads,
):
    l = pl.program_id(1)
    num_layers = pl.num_programs(1)
    TB, S, _ = v_ref.shape
    D = we_ref.shape[1]
    H = num_heads
    hd = D // H
    N = TB * S
    bf16 = jnp.bfloat16
    f32 = jnp.float32

    # ---- first layer step: embedding Linear(1, D) + positional encoding ----
    @pl.when(l == 0)
    def _():
        x0 = v_ref[...] * we_ref[...] + be_ref[...] + pe_ref[...]    # [TB,S,D]
        x_scr[...] = x0.reshape(N, D)

    x_in = x_scr[...]                                                # [N, D] f32
    xb = x_in.astype(bf16)

    # ---- fused, lane-dense Q/K/V projections ([N,D] x [D,D], bf16 on MXU) ----
    q = jnp.dot(xb, wq_ref[0], preferred_element_type=f32) + bq_ref[0]
    k = jnp.dot(xb, wk_ref[0], preferred_element_type=f32) + bk_ref[0]
    vv = jnp.dot(xb, wv_ref[0], preferred_element_type=f32) + bv_ref[0]
    q_scr[...] = q.reshape(TB, S, D)
    k_scr[...] = k.reshape(TB, S, D)
    v_scr[...] = vv.reshape(TB, S, D)

    # ---- per-head attention (score/ctx matmuls are head-sized by nature) ----
    for h in range(H):
        sl = slice(h * hd, (h + 1) * hd)
        qh = q_scr[:, :, sl].astype(bf16)                            # [TB,S,hd]
        kh = k_scr[:, :, sl].astype(bf16)
        vh = v_scr[:, :, sl].astype(bf16)
        s = jnp.einsum("bqe,bke->bqk", qh, kh,
                       preferred_element_type=f32)                   # [TB,S,S] f32
        s = s - jnp.max(s, axis=-1, keepdims=True)
        p = jnp.exp(s)
        p = p * pl.reciprocal(jnp.sum(p, axis=-1, keepdims=True), approx=True)
        ctx_scr[:, :, sl] = jnp.einsum("bqk,bke->bqe", p.astype(bf16), vh,
                                       preferred_element_type=f32)

    # ---- output projection: one lane-dense [N,D] x [D,D] matmul (no H-reduce) ----
    ctx = ctx_scr[...].reshape(N, D)
    attn = jnp.dot(ctx.astype(bf16), wo_ref[0],
                   preferred_element_type=f32) + bo_ref[0]
    x1 = _layernorm(x_in + attn, n1w_ref[0], n1b_ref[0])

    # ---- feed-forward (ReLU) ----
    h1 = jnp.maximum(
        jnp.dot(x1.astype(bf16), w1_ref[0], preferred_element_type=f32) + b1_ref[0],
        0.0)                                                         # [N, 4D]
    ff = jnp.dot(h1.astype(bf16), w2_ref[0], preferred_element_type=f32) + b2_ref[0]
    x2 = _layernorm(x1 + ff, n2w_ref[0], n2b_ref[0])
    x_scr[...] = x2

    # ---- decoders only after the last layer ----
    @pl.when(l == num_layers - 1)
    def _():
        # energy head on mean-pooled tokens
        xm = jnp.mean(x2.reshape(TB, S, D), axis=1)                  # [TB, D]
        eh = jnp.maximum(
            jnp.dot(xm.astype(bf16), ew1_ref[...],
                    preferred_element_type=f32) + eb1_ref[...], 0.0)
        e = jnp.dot(eh.astype(bf16), ew2_ref[...],
                    preferred_element_type=f32) + eb2_ref[...]       # [TB, LANE]
        e_ref[:, 0, :] = e

        # wavefunction head, L2-normalized over the sequence axis (dim=1)
        ph = jnp.maximum(
            jnp.dot(x2.astype(bf16), pw1_ref[...],
                    preferred_element_type=f32) + pb1_ref[...], 0.0)
        psi = jnp.dot(ph.astype(bf16), pw2_ref[...],
                      preferred_element_type=f32) + pb2_ref[...]     # [N, LANE]
        psi3 = psi.reshape(TB, S, LANE)
        # torch F.normalize(dim=1): x / max(||x||, 1e-12)  ==  x * rsqrt(max(||x||^2, 1e-24))
        nrm2 = jnp.sum(psi3 * psi3, axis=1, keepdims=True)           # [TB,1,LANE]
        psi_ref[...] = psi3 * jax.lax.rsqrt(jnp.maximum(nrm2, 1e-24))


def transformer_operator_forward(V, kp, *, num_heads, block_b=None):
    """V: [B, S, 1] float32; kp: prepare_params output.
    Returns (E_pred [B,5], psi_pred [B,S,5])."""
    B, S, _ = V.shape
    D = kp["we"].shape[1]
    L = kp["wq"].shape[0]
    F = kp["w1"].shape[2]

    # batch blocking: TB batch elements per grid step (amortizes per-step
    # overhead and the per-layer weight stream). TB>1 relies on S % 8 == 0
    # for layout-preserving [TB*S,D] <-> [TB,S,D] reshapes.
    if block_b is None:
        TB = min(B, 8) if S % 8 == 0 else 1
    else:
        TB = block_b
    n_bblk = -(-B // TB)
    Bp = n_bblk * TB
    if Bp != B:
        V = jnp.pad(V, ((0, Bp - B), (0, 0), (0, 0)))

    pe = kp["pe"][:S]  # PositionalEncoding uses pe[:seq_len]

    per_layer_names = ("wq", "bq", "wk", "bk", "wv", "bv", "wo", "bo",
                       "w1", "b1", "w2", "b2", "n1w", "n1b", "n2w", "n2b")
    decoder_names = ("ew1", "eb1", "ew2", "eb2", "pw1", "pb1", "pw2", "pb2")

    args = [V, kp["we"], kp["be"], pe]
    args += [kp[n] for n in per_layer_names]
    args += [kp[n] for n in decoder_names]

    def invariant(a):
        zeros = (0,) * a.ndim
        return pl.BlockSpec(a.shape, lambda b, l: zeros)

    def per_layer(a):
        tail = (0,) * (a.ndim - 1)
        return pl.BlockSpec((1,) + tuple(a.shape[1:]), lambda b, l: (l,) + tail)

    in_specs = [pl.BlockSpec((TB, S, 1), lambda b, l: (b, 0, 0))]
    in_specs += [invariant(a) for a in args[1:4]]        # embedding + PE
    in_specs += [per_layer(a) for a in args[4:20]]       # streamed per-layer weights
    in_specs += [invariant(a) for a in args[20:]]        # decoder weights

    out_specs = (
        pl.BlockSpec((TB, 1, LANE), lambda b, l: (b, 0, 0)),
        pl.BlockSpec((TB, S, LANE), lambda b, l: (b, 0, 0)),
    )
    out_shape = (
        jax.ShapeDtypeStruct((Bp, 1, LANE), jnp.float32),
        jax.ShapeDtypeStruct((Bp, S, LANE), jnp.float32),
    )

    scratch_shapes = [
        pltpu.VMEM((TB * S, D), jnp.float32),   # x, carried across the L grid axis
        pltpu.VMEM((TB, S, D), jnp.float32),    # q
        pltpu.VMEM((TB, S, D), jnp.float32),    # k
        pltpu.VMEM((TB, S, D), jnp.float32),    # v
        pltpu.VMEM((TB, S, D), jnp.float32),    # attention context (head-concat)
    ]

    # advisory cost estimate for XLA scheduling
    def _nbytes(a):
        return a.size * a.dtype.itemsize

    layer_stream_bytes = sum(_nbytes(a) for a in args[4:20])
    const_bytes = sum(_nbytes(a) for a in args[1:4]) + sum(_nbytes(a) for a in args[20:])
    flops = Bp * L * (S * (6 * D * D + 2 * D * D + 4 * D * F) + 4 * S * S * D)
    flops += Bp * (S + 1) * 2 * D * (D + LANE)
    cost = pl.CostEstimate(
        flops=int(flops),
        transcendentals=int(Bp * L * num_heads * S * S),
        bytes_accessed=int(_nbytes(V) + n_bblk * layer_stream_bytes + const_bytes
                           + Bp * (1 + S) * LANE * 4),
    )

    kernel = functools.partial(transformer_kernel, num_heads=num_heads)

    e_pad, psi_pad = pl.pallas_call(
        kernel,
        grid=(n_bblk, L),                     # batch blocks (parallel) x layers (streamed)
        in_specs=in_specs,
        out_specs=out_specs,
        out_shape=out_shape,
        scratch_shapes=scratch_shapes,
        compiler_params=pltpu.CompilerParams(
            dimension_semantics=("parallel", "arbitrary"),
            vmem_limit_bytes=48 * 1024 * 1024,
        ),
        cost_estimate=cost,
    )(*args)

    return e_pad[:B, 0, :5], psi_pad[:B, :, :5]


# ----------------------------------------------------------------------------
# parameter construction (PyTorch nn.Module shapes) + one-time preprocessing
# ----------------------------------------------------------------------------
def init_torch_style_params(key, n_points, embed_dim, num_layers):
    """Deterministic synthetic parameters in PyTorch nn.Module [out, in] shapes."""
    D, L, F = embed_dim, num_layers, 4 * embed_dim
    keys = jax.random.split(key, 16)

    def w(k, shape, scale=0.02):
        return scale * jax.random.normal(k, shape, jnp.float32)

    # sinusoidal positional encoding [n_points, D]
    pos = jnp.arange(n_points, dtype=jnp.float32)[:, None]
    div = jnp.exp(jnp.arange(0, D, 2, dtype=jnp.float32) * (-math.log(10000.0) / D))
    pe = jnp.zeros((n_points, D), jnp.float32)
    pe = pe.at[:, 0::2].set(jnp.sin(pos * div))
    pe = pe.at[:, 1::2].set(jnp.cos(pos * div))

    return {
        "emb_w": w(keys[0], (D, 1)),
        "emb_b": jnp.zeros((D,), jnp.float32),
        "pe": pe,
        "wqkv": w(keys[1], (L, 3 * D, D)),
        "bqkv": jnp.zeros((L, 3 * D), jnp.float32),
        "wo": w(keys[2], (L, D, D)),
        "bo": jnp.zeros((L, D), jnp.float32),
        "w1": w(keys[3], (L, F, D)),
        "b1": jnp.zeros((L, F), jnp.float32),
        "w2": w(keys[4], (L, D, F)),
        "b2": jnp.zeros((L, D), jnp.float32),
        "n1w": jnp.ones((L, D), jnp.float32),
        "n1b": jnp.zeros((L, D), jnp.float32),
        "n2w": jnp.ones((L, D), jnp.float32),
        "n2b": jnp.zeros((L, D), jnp.float32),
        "ew1": w(keys[5], (D, D)),
        "eb1": jnp.zeros((D,), jnp.float32),
        "ew2": w(keys[6], (5, D)),
        "eb2": jnp.zeros((5,), jnp.float32),
        "pw1": w(keys[7], (D, D)),
        "pb1": jnp.zeros((D,), jnp.float32),
        "pw2": w(keys[8], (5, D)),
        "pb2": jnp.zeros((5,), jnp.float32),
    }


def prepare_params(p, num_heads):
    """ONE-TIME preprocess (outside the forward path):
      * transpose PyTorch [out, in] weights so the kernel computes x @ W + b,
      * fold the 1/sqrt(head_dim) attention scale into Wq / bq,
      * cast all matmul weights to bf16 (f32 accumulation in-kernel),
      * zero-pad the 5-wide decoder output weights/biases to 128 lanes.
    """
    D = p["emb_w"].shape[0]
    hd = D // num_heads
    scale = 1.0 / math.sqrt(hd)
    bf16 = jnp.bfloat16

    wq_t = p["wqkv"][:, :D, :]            # torch [L, out, in]
    wk_t = p["wqkv"][:, D:2 * D, :]
    wv_t = p["wqkv"][:, 2 * D:, :]

    def t(w):                             # [L, out, in] -> [L, in, out]
        return jnp.transpose(w, (0, 2, 1))

    def pad_lane(w):                      # [*, 5] -> [*, LANE] (zero pad)
        return jnp.pad(w, ((0, 0), (0, LANE - w.shape[-1])))

    return {
        "we": p["emb_w"].T,                                   # [1, D] f32
        "be": p["emb_b"][None, :],                            # [1, D]
        "pe": p["pe"],                                        # [n_points, D]
        "wq": (t(wq_t) * scale).astype(bf16),                 # [L, D, D]
        "bq": (p["bqkv"][:, :D] * scale)[:, None, :],         # [L, 1, D] f32
        "wk": t(wk_t).astype(bf16),
        "bk": p["bqkv"][:, D:2 * D][:, None, :],
        "wv": t(wv_t).astype(bf16),
        "bv": p["bqkv"][:, 2 * D:][:, None, :],
        "wo": t(p["wo"]).astype(bf16),
        "bo": p["bo"][:, None, :],
        "w1": t(p["w1"]).astype(bf16),                        # [L, D, 4D]
        "b1": p["b1"][:, None, :],
        "w2": t(p["w2"]).astype(bf16),                        # [L, 4D, D]
        "b2": p["b2"][:, None, :],
        "n1w": p["n1w"][:, None, :], "n1b": p["n1b"][:, None, :],
        "n2w": p["n2w"][:, None, :], "n2b": p["n2b"][:, None, :],
        "ew1": p["ew1"].T.astype(bf16), "eb1": p["eb1"][None, :],
        "ew2": pad_lane(p["ew2"].T).astype(bf16), "eb2": pad_lane(p["eb2"][None, :]),
        "pw1": p["pw1"].T.astype(bf16), "pb1": p["pb1"][None, :],
        "pw2": pad_lane(p["pw2"].T).astype(bf16), "pb2": pad_lane(p["pb2"][None, :]),
    }


if __name__ == "__main__":
    # small shapes consistent with the module: n_points (seq) = 8, embed = 32
    B, S, D, H, L = 2, 8, 32, 4, 2

    key = jax.random.PRNGKey(0)
    k_params, k_v = jax.random.split(key)
    torch_params = init_torch_style_params(k_params, n_points=S, embed_dim=D, num_layers=L)
    kparams = prepare_params(torch_params, num_heads=H)      # one-time, outside forward
    V = jax.random.normal(k_v, (B, S, 1), jnp.float32)

    fwd = jax.jit(transformer_operator_forward, static_argnames=("num_heads", "block_b"))
    E_pred, psi_pred = fwd(V, kparams, num_heads=H)
    jax.block_until_ready((E_pred, psi_pred))

    assert E_pred.shape == (B, 5) and psi_pred.shape == (B, S, 5)
    assert bool(jnp.all(jnp.isfinite(E_pred))) and bool(jnp.all(jnp.isfinite(psi_pred)))
    print("KERNEL_OK")
</pallas_src>

<mosaic_0001>
module attributes {stable_mosaic.version = 11 : i64} {
  func.func @transformer_kernel(%arg0: i32, %arg1: i32, %arg2: memref<2x8x1xf32, #tpu.memory_space<vmem>>, %arg3: memref<1x32xf32, #tpu.memory_space<vmem>>, %arg4: memref<1x32xf32, #tpu.memory_space<vmem>>, %arg5: memref<8x32xf32, #tpu.memory_space<vmem>>, %arg6: memref<1x32x32xbf16, #tpu.memory_space<vmem>>, %arg7: memref<1x1x32xf32, #tpu.memory_space<vmem>>, %arg8: memref<1x32x32xbf16, #tpu.memory_space<vmem>>, %arg9: memref<1x1x32xf32, #tpu.memory_space<vmem>>, %arg10: memref<1x32x32xbf16, #tpu.memory_space<vmem>>, %arg11: memref<1x1x32xf32, #tpu.memory_space<vmem>>, %arg12: memref<1x32x32xbf16, #tpu.memory_space<vmem>>, %arg13: memref<1x1x32xf32, #tpu.memory_space<vmem>>, %arg14: memref<1x32x128xbf16, #tpu.memory_space<vmem>>, %arg15: memref<1x1x128xf32, #tpu.memory_space<vmem>>, %arg16: memref<1x128x32xbf16, #tpu.memory_space<vmem>>, %arg17: memref<1x1x32xf32, #tpu.memory_space<vmem>>, %arg18: memref<1x1x32xf32, #tpu.memory_space<vmem>>, %arg19: memref<1x1x32xf32, #tpu.memory_space<vmem>>, %arg20: memref<1x1x32xf32, #tpu.memory_space<vmem>>, %arg21: memref<1x1x32xf32, #tpu.memory_space<vmem>>, %arg22: memref<32x32xbf16, #tpu.memory_space<vmem>>, %arg23: memref<1x32xf32, #tpu.memory_space<vmem>>, %arg24: memref<32x128xbf16, #tpu.memory_space<vmem>>, %arg25: memref<1x128xf32, #tpu.memory_space<vmem>>, %arg26: memref<32x32xbf16, #tpu.memory_space<vmem>>, %arg27: memref<1x32xf32, #tpu.memory_space<vmem>>, %arg28: memref<32x128xbf16, #tpu.memory_space<vmem>>, %arg29: memref<1x128xf32, #tpu.memory_space<vmem>>, %arg30: memref<2x1x128xf32, #tpu.memory_space<vmem>>, %arg31: memref<2x8x128xf32, #tpu.memory_space<vmem>>, %arg32: memref<16x32xf32, #tpu.memory_space<vmem>>, %arg33: memref<2x8x32xf32, #tpu.memory_space<vmem>>, %arg34: memref<2x8x32xf32, #tpu.memory_space<vmem>>, %arg35: memref<2x8x32xf32, #tpu.memory_space<vmem>>, %arg36: memref<2x8x32xf32, #tpu.memory_space<vmem>>) attributes {dimension_semantics = [#tpu.dimension_semantics<parallel>, #tpu.dimension_semantics<arbitrary>], iteration_bounds = array<i64: 1, 2>, scalar_prefetch = 0 : i64, scratch_operands = 5 : i64, tpu.core_type = #tpu.core_type<tc>, window_params = [{transform_indices = @transform_0, window_bounds = array<i64: 2, 8, 1>}, {pipeline_mode = #tpu.pipeline_mode<synchronous>, transform_indices = @transform_1, window_bounds = array<i64: 1, 32>}, {pipeline_mode = #tpu.pipeline_mode<synchronous>, transform_indices = @transform_2, window_bounds = array<i64: 1, 32>}, {pipeline_mode = #tpu.pipeline_mode<synchronous>, transform_indices = @transform_3, window_bounds = array<i64: 8, 32>}, {transform_indices = @transform_4, window_bounds = array<i64: 1, 32, 32>}, {transform_indices = @transform_5, window_bounds = array<i64: 1, 1, 32>}, {transform_indices = @transform_6, window_bounds = array<i64: 1, 32, 32>}, {transform_indices = @transform_7, window_bounds = array<i64: 1, 1, 32>}, {transform_indices = @transform_8, window_bounds = array<i64: 1, 32, 32>}, {transform_indices = @transform_9, window_bounds = array<i64: 1, 1, 32>}, {transform_indices = @transform_10, window_bounds = array<i64: 1, 32, 32>}, {transform_indices = @transform_11, window_bounds = array<i64: 1, 1, 32>}, {transform_indices = @transform_12, window_bounds = array<i64: 1, 32, 128>}, {transform_indices = @transform_13, window_bounds = array<i64: 1, 1, 128>}, {transform_indices = @transform_14, window_bounds = array<i64: 1, 128, 32>}, {transform_indices = @transform_15, window_bounds = array<i64: 1, 1, 32>}, {transform_indices = @transform_16, window_bounds = array<i64: 1, 1, 32>}, {transform_indices = @transform_17, window_bounds = array<i64: 1, 1, 32>}, {transform_indices = @transform_18, window_bounds = array<i64: 1, 1, 32>}, {transform_indices = @transform_19, window_bounds = array<i64: 1, 1, 32>}, {pipeline_mode = #tpu.pipeline_mode<synchronous>, transform_indices = @transform_20, window_bounds = array<i64: 32, 32>}, {pipeline_mode = #tpu.pipeline_mode<synchronous>, transform_indices = @transform_21, window_bounds = array<i64: 1, 32>}, {pipeline_mode = #tpu.pipeline_mode<synchronous>, transform_indices = @transform_22, window_bounds = array<i64: 32, 128>}, {pipeline_mode = #tpu.pipeline_mode<synchronous>, transform_indices = @transform_23, window_bounds = array<i64: 1, 128>}, {pipeline_mode = #tpu.pipeline_mode<synchronous>, transform_indices = @transform_24, window_bounds = array<i64: 32, 32>}, {pipeline_mode = #tpu.pipeline_mode<synchronous>, transform_indices = @transform_25, window_bounds = array<i64: 1, 32>}, {pipeline_mode = #tpu.pipeline_mode<synchronous>, transform_indices = @transform_26, window_bounds = array<i64: 32, 128>}, {pipeline_mode = #tpu.pipeline_mode<synchronous>, transform_indices = @transform_27, window_bounds = array<i64: 1, 128>}, {transform_indices = @transform_28, window_bounds = array<i64: 2, 1, 128>}, {transform_indices = @transform_29, window_bounds = array<i64: 2, 8, 128>}]} {
    %c0_i32 = arith.constant 0 : i32
    %0 = arith.cmpi eq, %arg1, %c0_i32 : i32
    %1 = arith.extui %0 : i1 to i32
    %c0_i32_0 = arith.constant 0 : i32
    %2 = arith.cmpi ne, %1, %c0_i32_0 : i32
    scf.if %2 {
      %c0_142 = arith.constant 0 : index
      %c0_143 = arith.constant 0 : index
      %c0_144 = arith.constant 0 : index
      %198 = vector.load %arg2[%c0_142, %c0_143, %c0_144] : memref<2x8x1xf32, #tpu.memory_space<vmem>>, vector<2x8x1xf32>
      %c0_145 = arith.constant 0 : index
      %c0_146 = arith.constant 0 : index
      %199 = vector.load %arg3[%c0_145, %c0_146] : memref<1x32xf32, #tpu.memory_space<vmem>>, vector<1x32xf32>
      %200 = vector.shape_cast %199 : vector<1x32xf32> to vector<1x1x32xf32>
      %201 = vector.broadcast %198 : vector<2x8x1xf32> to vector<2x8x32xf32>
      %202 = vector.broadcast %200 : vector<1x1x32xf32> to vector<2x8x32xf32>
      %203 = arith.mulf %201, %202 : vector<2x8x32xf32>
      %c0_147 = arith.constant 0 : index
      %c0_148 = arith.constant 0 : index
      %204 = vector.load %arg4[%c0_147, %c0_148] : memref<1x32xf32, #tpu.memory_space<vmem>>, vector<1x32xf32>
      %205 = vector.shape_cast %204 : vector<1x32xf32> to vector<1x1x32xf32>
      %206 = vector.broadcast %205 : vector<1x1x32xf32> to vector<2x8x32xf32>
      %207 = arith.addf %203, %206 : vector<2x8x32xf32>
      %c0_149 = arith.constant 0 : index
      %c0_150 = arith.constant 0 : index
      %208 = vector.load %arg5[%c0_149, %c0_150] : memref<8x32xf32, #tpu.memory_space<vmem>>, vector<8x32xf32>
      %209 = vector.shape_cast %208 : vector<8x32xf32> to vector<1x8x32xf32>
      %210 = vector.broadcast %209 : vector<1x8x32xf32> to vector<2x8x32xf32>
      %211 = arith.addf %207, %210 : vector<2x8x32xf32>
      %212 = vector.shape_cast %211 : vector<2x8x32xf32> to vector<16x32xf32>
      %c0_151 = arith.constant 0 : index
      %c0_152 = arith.constant 0 : index
      %213 = vector.load %arg32[%c0_151, %c0_152] : memref<16x32xf32, #tpu.memory_space<vmem>>, vector<16x32xf32>
      tpu.vector_store %arg32[%c0_151, %c0_152], %212 {strides = array<i32>} : memref<16x32xf32, #tpu.memory_space<vmem>>, vector<16x32xf32>,
    } else {
    }
    %c0 = arith.constant 0 : index
    %c0_1 = arith.constant 0 : index
    %3 = vector.load %arg32[%c0, %c0_1] : memref<16x32xf32, #tpu.memory_space<vmem>>, vector<16x32xf32>
    %4 = arith.truncf %3 : vector<16x32xf32> to vector<16x32xbf16>
    %c0_2 = arith.constant 0 : index
    %c0_3 = arith.constant 0 : index
    %c0_4 = arith.constant 0 : index
    %5 = vector.load %arg6[%c0_2, %c0_3, %c0_4] : memref<1x32x32xbf16, #tpu.memory_space<vmem>>, vector<1x32x32xbf16>
    %6 = vector.shape_cast %5 : vector<1x32x32xbf16> to vector<32x32xbf16>
    %cst = arith.constant dense<0.000000e+00> : vector<16x32xf32>
    %7 = tpu.matmul %4, %6, %cst {dimension_numbers = #tpu.dot_dimension_numbers<[1], [0], [0], [1], [0, 0, 1, 1], [], []>} : vector<16x32xbf16>, vector<32x32xbf16>, vector<16x32xf32> -> vector<16x32xf32>
    %c0_5 = arith.constant 0 : index
    %c0_6 = arith.constant 0 : index
    %c0_7 = arith.constant 0 : index
    %8 = vector.load %arg7[%c0_5, %c0_6, %c0_7] : memref<1x1x32xf32, #tpu.memory_space<vmem>>, vector<1x1x32xf32>
    %9 = vector.shape_cast %8 : vector<1x1x32xf32> to vector<1x32xf32>
    %10 = vector.broadcast %9 : vector<1x32xf32> to vector<16x32xf32>
    %11 = arith.addf %7, %10 : vector<16x32xf32>
    %c0_8 = arith.constant 0 : index
    %c0_9 = arith.constant 0 : index
    %c0_10 = arith.constant 0 : index
    %12 = vector.load %arg8[%c0_8, %c0_9, %c0_10] : memref<1x32x32xbf16, #tpu.memory_space<vmem>>, vector<1x32x32xbf16>
    %13 = vector.shape_cast %12 : vector<1x32x32xbf16> to vector<32x32xbf16>
    %cst_11 = arith.constant dense<0.000000e+00> : vector<16x32xf32>
    %14 = tpu.matmul %4, %13, %cst_11 {dimension_numbers = #tpu.dot_dimension_numbers<[1], [0], [0], [1], [0, 0, 1, 1], [], []>} : vector<16x32xbf16>, vector<32x32xbf16>, vector<16x32xf32> -> vector<16x32xf32>
    %c0_12 = arith.constant 0 : index
    %c0_13 = arith.constant 0 : index
    %c0_14 = arith.constant 0 : index
    %15 = vector.load %arg9[%c0_12, %c0_13, %c0_14] : memref<1x1x32xf32, #tpu.memory_space<vmem>>, vector<1x1x32xf32>
    %16 = vector.shape_cast %15 : vector<1x1x32xf32> to vector<1x32xf32>
    %17 = vector.broadcast %16 : vector<1x32xf32> to vector<16x32xf32>
    %18 = arith.addf %14, %17 : vector<16x32xf32>
    %c0_15 = arith.constant 0 : index
    %c0_16 = arith.constant 0 : index
    %c0_17 = arith.constant 0 : index
    %19 = vector.load %arg10[%c0_15, %c0_16, %c0_17] : memref<1x32x32xbf16, #tpu.memory_space<vmem>>, vector<1x32x32xbf16>
    %20 = vector.shape_cast %19 : vector<1x32x32xbf16> to vector<32x32xbf16>
    %cst_18 = arith.constant dense<0.000000e+00> : vector<16x32xf32>
    %21 = tpu.matmul %4, %20, %cst_18 {dimension_numbers = #tpu.dot_dimension_numbers<[1], [0], [0], [1], [0, 0, 1, 1], [], []>} : vector<16x32xbf16>, vector<32x32xbf16>, vector<16x32xf32> -> vector<16x32xf32>
    %c0_19 = arith.constant 0 : index
    %c0_20 = arith.constant 0 : index
    %c0_21 = arith.constant 0 : index
    %22 = vector.load %arg11[%c0_19, %c0_20, %c0_21] : memref<1x1x32xf32, #tpu.memory_space<vmem>>, vector<1x1x32xf32>
    %23 = vector.shape_cast %22 : vector<1x1x32xf32> to vector<1x32xf32>
    %24 = vector.broadcast %23 : vector<1x32xf32> to vector<16x32xf32>
    %25 = arith.addf %21, %24 : vector<16x32xf32>
    %26 = vector.shape_cast %11 : vector<16x32xf32> to vector<2x8x32xf32>
    %c0_22 = arith.constant 0 : index
    %c0_23 = arith.constant 0 : index
    %c0_24 = arith.constant 0 : index
    %27 = vector.load %arg33[%c0_22, %c0_23, %c0_24] : memref<2x8x32xf32, #tpu.memory_space<vmem>>, vector<2x8x32xf32>
    tpu.vector_store %arg33[%c0_22, %c0_23, %c0_24], %26 {strides = array<i32>} : memref<2x8x32xf32, #tpu.memory_space<vmem>>, vector<2x8x32xf32>,
    %28 = vector.shape_cast %18 : vector<16x32xf32> to vector<2x8x32xf32>
    %c0_25 = arith.constant 0 : index
    %c0_26 = arith.constant 0 : index
    %c0_27 = arith.constant 0 : index
    %29 = vector.load %arg34[%c0_25, %c0_26, %c0_27] : memref<2x8x32xf32, #tpu.memory_space<vmem>>, vector<2x8x32xf32>
    tpu.vector_store %arg34[%c0_25, %c0_26, %c0_27], %28 {strides = array<i32>} : memref<2x8x32xf32, #tpu.memory_space<vmem>>, vector<2x8x32xf32>,
    %30 = vector.shape_cast %25 : vector<16x32xf32> to vector<2x8x32xf32>
    %c0_28 = arith.constant 0 : index
    %c0_29 = arith.constant 0 : index
    %c0_30 = arith.constant 0 : index
    %31 = vector.load %arg35[%c0_28, %c0_29, %c0_30] : memref<2x8x32xf32, #tpu.memory_space<vmem>>, vector<2x8x32xf32>
    tpu.vector_store %arg35[%c0_28, %c0_29, %c0_30], %30 {strides = array<i32>} : memref<2x8x32xf32, #tpu.memory_space<vmem>>, vector<2x8x32xf32>,
    %c0_31 = arith.constant 0 : index
    %c0_32 = arith.constant 0 : index
    %c0_33 = arith.constant 0 : index
    %32 = vector.load %arg33[%c0_31, %c0_32, %c0_33] : memref<2x8x32xf32, #tpu.memory_space<vmem>>, vector<2x8x8xf32>
    %33 = arith.truncf %32 : vector<2x8x8xf32> to vector<2x8x8xbf16>
    %c0_34 = arith.constant 0 : index
    %c0_35 = arith.constant 0 : index
    %c0_36 = arith.constant 0 : index
    %34 = vector.load %arg34[%c0_34, %c0_35, %c0_36] : memref<2x8x32xf32, #tpu.memory_space<vmem>>, vector<2x8x8xf32>
    %35 = arith.truncf %34 : vector<2x8x8xf32> to vector<2x8x8xbf16>
    %c0_37 = arith.constant 0 : index
    %c0_38 = arith.constant 0 : index
    %c0_39 = arith.constant 0 : index
    %36 = vector.load %arg35[%c0_37, %c0_38, %c0_39] : memref<2x8x32xf32, #tpu.memory_space<vmem>>, vector<2x8x8xf32>
    %37 = arith.truncf %36 : vector<2x8x8xf32> to vector<2x8x8xbf16>
    "tpu.trace_start"() <{level = 10 : i32, message = "bqe,bke->bqk"}> : () -> ()
    %cst_40 = arith.constant dense<0.000000e+00> : vector<2x8x8xf32>
    %38 = tpu.matmul %33, %35, %cst_40 {dimension_numbers = #tpu.dot_dimension_numbers<[2], [2], [1], [1], [0, 0, 0, 1, 1, 1], [0], [0]>} : vector<2x8x8xbf16>, vector<2x8x8xbf16>, vector<2x8x8xf32> -> vector<2x8x8xf32>
    "tpu.trace_stop"() : () -> ()
    %cst_41 = arith.constant dense<0xFF800000> : vector<2x8xf32>
    %39 = vector.multi_reduction <maximumf>, %38, %cst_41 [2] : vector<2x8x8xf32> to vector<2x8xf32>
    %40 = vector.shape_cast %39 : vector<2x8xf32> to vector<2x8x1xf32>
    %41 = vector.broadcast %40 : vector<2x8x1xf32> to vector<2x8x8xf32>
    %42 = arith.subf %38, %41 : vector<2x8x8xf32>
    %43 = math.exp %42 : vector<2x8x8xf32>
    %cst_42 = arith.constant dense<0.000000e+00> : vector<2x8xf32>
    %44 = vector.multi_reduction <add>, %43, %cst_42 [2] : vector<2x8x8xf32> to vector<2x8xf32>
    %45 = vector.shape_cast %44 : vector<2x8xf32> to vector<2x8x1xf32>
    %46 = tpu.reciprocal %45 {approx = true} : vector<2x8x1xf32> -> vector<2x8x1xf32>
    %47 = vector.broadcast %46 : vector<2x8x1xf32> to vector<2x8x8xf32>
    %48 = arith.mulf %43, %47 : vector<2x8x8xf32>
    %49 = arith.truncf %48 : vector<2x8x8xf32> to vector<2x8x8xbf16>
    "tpu.trace_start"() <{level = 10 : i32, message = "bqk,bke->bqe"}> : () -> ()
    %cst_43 = arith.constant dense<0.000000e+00> : vector<2x8x8xf32>
    %50 = tpu.matmul %49, %37, %cst_43 {dimension_numbers = #tpu.dot_dimension_numbers<[2], [1], [1], [2], [0, 0, 0, 1, 1, 2], [0], [0]>} : vector<2x8x8xbf16>, vector<2x8x8xbf16>, vector<2x8x8xf32> -> vector<2x8x8xf32>
    "tpu.trace_stop"() : () -> ()
    %c0_44 = arith.constant 0 : index
    %c0_45 = arith.constant 0 : index
    %c0_46 = arith.constant 0 : index
    %51 = vector.load %arg36[%c0_44, %c0_45, %c0_46] : memref<2x8x32xf32, #tpu.memory_space<vmem>>, vector<2x8x8xf32>
    tpu.vector_store %arg36[%c0_44, %c0_45, %c0_46], %50 {strides = array<i32>} : memref<2x8x32xf32, #tpu.memory_space<vmem>>, vector<2x8x8xf32>,
    %c0_47 = arith.constant 0 : index
    %c0_48 = arith.constant 0 : index
    %c8 = arith.constant 8 : index
    %52 = vector.load %arg33[%c0_47, %c0_48, %c8] : memref<2x8x32xf32, #tpu.memory_space<vmem>>, vector<2x8x8xf32>
    %53 = arith.truncf %52 : vector<2x8x8xf32> to vector<2x8x8xbf16>
    %c0_49 = arith.constant 0 : index
    %c0_50 = arith.constant 0 : index
    %c8_51 = arith.constant 8 : index
    %54 = vector.load %arg34[%c0_49, %c0_50, %c8_51] : memref<2x8x32xf32, #tpu.memory_space<vmem>>, vector<2x8x8xf32>
    %55 = arith.truncf %54 : vector<2x8x8xf32> to vector<2x8x8xbf16>
    %c0_52 = arith.constant 0 : index
    %c0_53 = arith.constant 0 : index
    %c8_54 = arith.constant 8 : index
    %56 = vector.load %arg35[%c0_52, %c0_53, %c8_54] : memref<2x8x32xf32, #tpu.memory_space<vmem>>, vector<2x8x8xf32>
    %57 = arith.truncf %56 : vector<2x8x8xf32> to vector<2x8x8xbf16>
    "tpu.trace_start"() <{level = 10 : i32, message = "bqe,bke->bqk"}> : () -> ()
    %cst_55 = arith.constant dense<0.000000e+00> : vector<2x8x8xf32>
    %58 = tpu.matmul %53, %55, %cst_55 {dimension_numbers = #tpu.dot_dimension_numbers<[2], [2], [1], [1], [0, 0, 0, 1, 1, 1], [0], [0]>} : vector<2x8x8xbf16>, vector<2x8x8xbf16>, vector<2x8x8xf32> -> vector<2x8x8xf32>
    "tpu.trace_stop"() : () -> ()
    %cst_56 = arith.constant dense<0xFF800000> : vector<2x8xf32>
    %59 = vector.multi_reduction <maximumf>, %58, %cst_56 [2] : vector<2x8x8xf32> to vector<2x8xf32>
    %60 = vector.shape_cast %59 : vector<2x8xf32> to vector<2x8x1xf32>
    %61 = vector.broadcast %60 : vector<2x8x1xf32> to vector<2x8x8xf32>
    %62 = arith.subf %58, %61 : vector<2x8x8xf32>
    %63 = math.exp %62 : vector<2x8x8xf32>
    %cst_57 = arith.constant dense<0.000000e+00> : vector<2x8xf32>
    %64 = vector.multi_reduction <add>, %63, %cst_57 [2] : vector<2x8x8xf32> to vector<2x8xf32>
    %65 = vector.shape_cast %64 : vector<2x8xf32> to vector<2x8x1xf32>
    %66 = tpu.reciprocal %65 {approx = true} : vector<2x8x1xf32> -> vector<2x8x1xf32>
    %67 = vector.broadcast %66 : vector<2x8x1xf32> to vector<2x8x8xf32>
    %68 = arith.mulf %63, %67 : vector<2x8x8xf32>
    %69 = arith.truncf %68 : vector<2x8x8xf32> to vector<2x8x8xbf16>
    "tpu.trace_start"() <{level = 10 : i32, message = "bqk,bke->bqe"}> : () -> ()
    %cst_58 = arith.constant dense<0.000000e+00> : vector<2x8x8xf32>
    %70 = tpu.matmul %69, %57, %cst_58 {dimension_numbers = #tpu.dot_dimension_numbers<[2], [1], [1], [2], [0, 0, 0, 1, 1, 2], [0], [0]>} : vector<2x8x8xbf16>, vector<2x8x8xbf16>, vector<2x8x8xf32> -> vector<2x8x8xf32>
    "tpu.trace_stop"() : () -> ()
    %c0_59 = arith.constant 0 : index
    %c0_60 = arith.constant 0 : index
    %c8_61 = arith.constant 8 : index
    %71 = vector.load %arg36[%c0_59, %c0_60, %c8_61] : memref<2x8x32xf32, #tpu.memory_space<vmem>>, vector<2x8x8xf32>
    tpu.vector_store %arg36[%c0_59, %c0_60, %c8_61], %70 {strides = array<i32>} : memref<2x8x32xf32, #tpu.memory_space<vmem>>, vector<2x8x8xf32>,
    %c0_62 = arith.constant 0 : index
    %c0_63 = arith.constant 0 : index
    %c16 = arith.constant 16 : index
    %72 = vector.load %arg33[%c0_62, %c0_63, %c16] : memref<2x8x32xf32, #tpu.memory_space<vmem>>, vector<2x8x8xf32>
    %73 = arith.truncf %72 : vector<2x8x8xf32> to vector<2x8x8xbf16>
    %c0_64 = arith.constant 0 : index
    %c0_65 = arith.constant 0 : index
    %c16_66 = arith.constant 16 : index
    %74 = vector.load %arg34[%c0_64, %c0_65, %c16_66] : memref<2x8x32xf32, #tpu.memory_space<vmem>>, vector<2x8x8xf32>
    %75 = arith.truncf %74 : vector<2x8x8xf32> to vector<2x8x8xbf16>
    %c0_67 = arith.constant 0 : index
    %c0_68 = arith.constant 0 : index
    %c16_69 = arith.constant 16 : index
    %76 = vector.load %arg35[%c0_67, %c0_68, %c16_69] : memref<2x8x32xf32, #tpu.memory_space<vmem>>, vector<2x8x8xf32>
    %77 = arith.truncf %76 : vector<2x8x8xf32> to vector<2x8x8xbf16>
    "tpu.trace_start"() <{level = 10 : i32, message = "bqe,bke->bqk"}> : () -> ()
    %cst_70 = arith.constant dense<0.000000e+00> : vector<2x8x8xf32>
    %78 = tpu.matmul %73, %75, %cst_70 {dimension_numbers = #tpu.dot_dimension_numbers<[2], [2], [1], [1], [0, 0, 0, 1, 1, 1], [0], [0]>} : vector<2x8x8xbf16>, vector<2x8x8xbf16>, vector<2x8x8xf32> -> vector<2x8x8xf32>
    "tpu.trace_stop"() : () -> ()
    %cst_71 = arith.constant dense<0xFF800000> : vector<2x8xf32>
    %79 = vector.multi_reduction <maximumf>, %78, %cst_71 [2] : vector<2x8x8xf32> to vector<2x8xf32>
    %80 = vector.shape_cast %79 : vector<2x8xf32> to vector<2x8x1xf32>
    %81 = vector.broadcast %80 : vector<2x8x1xf32> to vector<2x8x8xf32>
    %82 = arith.subf %78, %81 : vector<2x8x8xf32>
    %83 = math.exp %82 : vector<2x8x8xf32>
    %cst_72 = arith.constant dense<0.000000e+00> : vector<2x8xf32>
    %84 = vector.multi_reduction <add>, %83, %cst_72 [2] : vector<2x8x8xf32> to vector<2x8xf32>
    %85 = vector.shape_cast %84 : vector<2x8xf32> to vector<2x8x1xf32>
    %86 = tpu.reciprocal %85 {approx = true} : vector<2x8x1xf32> -> vector<2x8x1xf32>
    %87 = vector.broadcast %86 : vector<2x8x1xf32> to vector<2x8x8xf32>
    %88 = arith.mulf %83, %87 : vector<2x8x8xf32>
    %89 = arith.truncf %88 : vector<2x8x8xf32> to vector<2x8x8xbf16>
    "tpu.trace_start"() <{level = 10 : i32, message = "bqk,bke->bqe"}> : () -> ()
    %cst_73 = arith.constant dense<0.000000e+00> : vector<2x8x8xf32>
    %90 = tpu.matmul %89, %77, %cst_73 {dimension_numbers = #tpu.dot_dimension_numbers<[2], [1], [1], [2], [0, 0, 0, 1, 1, 2], [0], [0]>} : vector<2x8x8xbf16>, vector<2x8x8xbf16>, vector<2x8x8xf32> -> vector<2x8x8xf32>
    "tpu.trace_stop"() : () -> ()
    %c0_74 = arith.constant 0 : index
    %c0_75 = arith.constant 0 : index
    %c16_76 = arith.constant 16 : index
    %91 = vector.load %arg36[%c0_74, %c0_75, %c16_76] : memref<2x8x32xf32, #tpu.memory_space<vmem>>, vector<2x8x8xf32>
    tpu.vector_store %arg36[%c0_74, %c0_75, %c16_76], %90 {strides = array<i32>} : memref<2x8x32xf32, #tpu.memory_space<vmem>>, vector<2x8x8xf32>,
    %c0_77 = arith.constant 0 : index
    %c0_78 = arith.constant 0 : index
    %c24 = arith.constant 24 : index
    %92 = vector.load %arg33[%c0_77, %c0_78, %c24] : memref<2x8x32xf32, #tpu.memory_space<vmem>>, vector<2x8x8xf32>
    %93 = arith.truncf %92 : vector<2x8x8xf32> to vector<2x8x8xbf16>
    %c0_79 = arith.constant 0 : index
    %c0_80 = arith.constant 0 : index
    %c24_81 = arith.constant 24 : index
    %94 = vector.load %arg34[%c0_79, %c0_80, %c24_81] : memref<2x8x32xf32, #tpu.memory_space<vmem>>, vector<2x8x8xf32>
    %95 = arith.truncf %94 : vector<2x8x8xf32> to vector<2x8x8xbf16>
    %c0_82 = arith.constant 0 : index
    %c0_83 = arith.constant 0 : index
    %c24_84 = arith.constant 24 : index
    %96 = vector.load %arg35[%c0_82, %c0_83, %c24_84] : memref<2x8x32xf32, #tpu.memory_space<vmem>>, vector<2x8x8xf32>
    %97 = arith.truncf %96 : vector<2x8x8xf32> to vector<2x8x8xbf16>
    "tpu.trace_start"() <{level = 10 : i32, message = "bqe,bke->bqk"}> : () -> ()
    %cst_85 = arith.constant dense<0.000000e+00> : vector<2x8x8xf32>
    %98 = tpu.matmul %93, %95, %cst_85 {dimension_numbers = #tpu.dot_dimension_numbers<[2], [2], [1], [1], [0, 0, 0, 1, 1, 1], [0], [0]>} : vector<2x8x8xbf16>, vector<2x8x8xbf16>, vector<2x8x8xf32> -> vector<2x8x8xf32>
    "tpu.trace_stop"() : () -> ()
    %cst_86 = arith.constant dense<0xFF800000> : vector<2x8xf32>
    %99 = vector.multi_reduction <maximumf>, %98, %cst_86 [2] : vector<2x8x8xf32> to vector<2x8xf32>
    %100 = vector.shape_cast %99 : vector<2x8xf32> to vector<2x8x1xf32>
    %101 = vector.broadcast %100 : vector<2x8x1xf32> to vector<2x8x8xf32>
    %102 = arith.subf %98, %101 : vector<2x8x8xf32>
    %103 = math.exp %102 : vector<2x8x8xf32>
    %cst_87 = arith.constant dense<0.000000e+00> : vector<2x8xf32>
    %104 = vector.multi_reduction <add>, %103, %cst_87 [2] : vector<2x8x8xf32> to vector<2x8xf32>
    %105 = vector.shape_cast %104 : vector<2x8xf32> to vector<2x8x1xf32>
    %106 = tpu.reciprocal %105 {approx = true} : vector<2x8x1xf32> -> vector<2x8x1xf32>
    %107 = vector.broadcast %106 : vector<2x8x1xf32> to vector<2x8x8xf32>
    %108 = arith.mulf %103, %107 : vector<2x8x8xf32>
    %109 = arith.truncf %108 : vector<2x8x8xf32> to vector<2x8x8xbf16>
    "tpu.trace_start"() <{level = 10 : i32, message = "bqk,bke->bqe"}> : () -> ()
    %cst_88 = arith.constant dense<0.000000e+00> : vector<2x8x8xf32>
    %110 = tpu.matmul %109, %97, %cst_88 {dimension_numbers = #tpu.dot_dimension_numbers<[2], [1], [1], [2], [0, 0, 0, 1, 1, 2], [0], [0]>} : vector<2x8x8xbf16>, vector<2x8x8xbf16>, vector<2x8x8xf32> -> vector<2x8x8xf32>
    "tpu.trace_stop"() : () -> ()
    %c0_89 = arith.constant 0 : index
    %c0_90 = arith.constant 0 : index
    %c24_91 = arith.constant 24 : index
    %111 = vector.load %arg36[%c0_89, %c0_90, %c24_91] : memref<2x8x32xf32, #tpu.memory_space<vmem>>, vector<2x8x8xf32>
    tpu.vector_store %arg36[%c0_89, %c0_90, %c24_91], %110 {strides = array<i32>} : memref<2x8x32xf32, #tpu.memory_space<vmem>>, vector<2x8x8xf32>,
    %c0_92 = arith.constant 0 : index
    %c0_93 = arith.constant 0 : index
    %c0_94 = arith.constant 0 : index
    %112 = vector.load %arg36[%c0_92, %c0_93, %c0_94] : memref<2x8x32xf32, #tpu.memory_space<vmem>>, vector<2x8x32xf32>
    %113 = vector.shape_cast %112 : vector<2x8x32xf32> to vector<16x32xf32>
    %114 = arith.truncf %113 : vector<16x32xf32> to vector<16x32xbf16>
    %c0_95 = arith.constant 0 : index
    %c0_96 = arith.constant 0 : index
    %c0_97 = arith.constant 0 : index
    %115 = vector.load %arg12[%c0_95, %c0_96, %c0_97] : memref<1x32x32xbf16, #tpu.memory_space<vmem>>, vector<1x32x32xbf16>
    %116 = vector.shape_cast %115 : vector<1x32x32xbf16> to vector<32x32xbf16>
    %cst_98 = arith.constant dense<0.000000e+00> : vector<16x32xf32>
    %117 = tpu.matmul %114, %116, %cst_98 {dimension_numbers = #tpu.dot_dimension_numbers<[1], [0], [0], [1], [0, 0, 1, 1], [], []>} : vector<16x32xbf16>, vector<32x32xbf16>, vector<16x32xf32> -> vector<16x32xf32>
    %c0_99 = arith.constant 0 : index
    %c0_100 = arith.constant 0 : index
    %c0_101 = arith.constant 0 : index
    %118 = vector.load %arg13[%c0_99, %c0_100, %c0_101] : memref<1x1x32xf32, #tpu.memory_space<vmem>>, vector<1x1x32xf32>
    %119 = vector.shape_cast %118 : vector<1x1x32xf32> to vector<1x32xf32>
    %120 = vector.broadcast %119 : vector<1x32xf32> to vector<16x32xf32>
    %121 = arith.addf %117, %120 : vector<16x32xf32>
    %122 = arith.addf %3, %121 : vector<16x32xf32>
    %c0_102 = arith.constant 0 : index
    %c0_103 = arith.constant 0 : index
    %c0_104 = arith.constant 0 : index
    %123 = vector.load %arg18[%c0_102, %c0_103, %c0_104] : memref<1x1x32xf32, #tpu.memory_space<vmem>>, vector<1x1x32xf32>
    %124 = vector.shape_cast %123 : vector<1x1x32xf32> to vector<1x32xf32>
    %c0_105 = arith.constant 0 : index
    %c0_106 = arith.constant 0 : index
    %c0_107 = arith.constant 0 : index
    %125 = vector.load %arg19[%c0_105, %c0_106, %c0_107] : memref<1x1x32xf32, #tpu.memory_space<vmem>>, vector<1x1x32xf32>
    %126 = vector.shape_cast %125 : vector<1x1x32xf32> to vector<1x32xf32>
    %cst_108 = arith.constant dense<0.000000e+00> : vector<16xf32>
    %127 = vector.multi_reduction <add>, %122, %cst_108 [1] : vector<16x32xf32> to vector<16xf32>
    %128 = vector.shape_cast %127 : vector<16xf32> to vector<16x1xf32>
    %cst_109 = arith.constant 3.200000e+01 : f32
    %129 = vector.broadcast %cst_109 : f32 to vector<16x1xf32>
    %130 = arith.divf %128, %129 : vector<16x1xf32>
    %131 = vector.broadcast %130 : vector<16x1xf32> to vector<16x32xf32>
    %132 = arith.subf %122, %131 : vector<16x32xf32>
    %133 = arith.mulf %132, %132 : vector<16x32xf32>
    %cst_110 = arith.constant dense<0.000000e+00> : vector<16xf32>
    %134 = vector.multi_reduction <add>, %133, %cst_110 [1] : vector<16x32xf32> to vector<16xf32>
    %135 = vector.shape_cast %134 : vector<16xf32> to vector<16x1xf32>
    %cst_111 = arith.constant 3.200000e+01 : f32
    %136 = vector.broadcast %cst_111 : f32 to vector<16x1xf32>
    %137 = arith.divf %135, %136 : vector<16x1xf32>
    %138 = vector.broadcast %130 : vector<16x1xf32> to vector<16x32xf32>
    %139 = arith.subf %122, %138 : vector<16x32xf32>
    %cst_112 = arith.constant 9.99999974E-6 : f32
    %140 = vector.broadcast %cst_112 : f32 to vector<16x1xf32>
    %141 = arith.addf %137, %140 : vector<16x1xf32>
    %142 = math.rsqrt %141 : vector<16x1xf32>
    %143 = vector.broadcast %142 : vector<16x1xf32> to vector<16x32xf32>
    %144 = arith.mulf %139, %143 : vector<16x32xf32>
    %145 = vector.broadcast %124 : vector<1x32xf32> to vector<16x32xf32>
    %146 = arith.mulf %144, %145 : vector<16x32xf32>
    %147 = vector.broadcast %126 : vector<1x32xf32> to vector<16x32xf32>
    %148 = arith.addf %146, %147 : vector<16x32xf32>
    %149 = arith.truncf %148 : vector<16x32xf32> to vector<16x32xbf16>
    %c0_113 = arith.constant 0 : index
    %c0_114 = arith.constant 0 : index
    %c0_115 = arith.constant 0 : index
    %150 = vector.load %arg14[%c0_113, %c0_114, %c0_115] : memref<1x32x128xbf16, #tpu.memory_space<vmem>>, vector<1x32x128xbf16>
    %151 = vector.shape_cast %150 : vector<1x32x128xbf16> to vector<32x128xbf16>
    %cst_116 = arith.constant dense<0.000000e+00> : vector<16x128xf32>
    %152 = tpu.matmul %149, %151, %cst_116 {dimension_numbers = #tpu.dot_dimension_numbers<[1], [0], [0], [1], [0, 0, 1, 1], [], []>} : vector<16x32xbf16>, vector<32x128xbf16>, vector<16x128xf32> -> vector<16x128xf32>
    %c0_117 = arith.constant 0 : index
    %c0_118 = arith.constant 0 : index
    %c0_119 = arith.constant 0 : index
    %153 = vector.load %arg15[%c0_117, %c0_118, %c0_119] : memref<1x1x128xf32, #tpu.memory_space<vmem>>, vector<1x1x128xf32>
    %154 = vector.shape_cast %153 : vector<1x1x128xf32> to vector<1x128xf32>
    %155 = vector.broadcast %154 : vector<1x128xf32> to vector<16x128xf32>
    %156 = arith.addf %152, %155 : vector<16x128xf32>
    %cst_120 = arith.constant 0.000000e+00 : f32
    %157 = vector.broadcast %cst_120 : f32 to vector<16x128xf32>
    %158 = arith.maximumf %156, %157 : vector<16x128xf32>
    %159 = arith.truncf %158 : vector<16x128xf32> to vector<16x128xbf16>
    %c0_121 = arith.constant 0 : index
    %c0_122 = arith.constant 0 : index
    %c0_123 = arith.constant 0 : index
    %160 = vector.load %arg16[%c0_121, %c0_122, %c0_123] : memref<1x128x32xbf16, #tpu.memory_space<vmem>>, vector<1x128x32xbf16>
    %161 = vector.shape_cast %160 : vector<1x128x32xbf16> to vector<128x32xbf16>
    %cst_124 = arith.constant dense<0.000000e+00> : vector<16x32xf32>
    %162 = tpu.matmul %159, %161, %cst_124 {dimension_numbers = #tpu.dot_dimension_numbers<[1], [0], [0], [1], [0, 0, 1, 1], [], []>} : vector<16x128xbf16>, vector<128x32xbf16>, vector<16x32xf32> -> vector<16x32xf32>
    %c0_125 = arith.constant 0 : index
    %c0_126 = arith.constant 0 : index
    %c0_127 = arith.constant 0 : index
    %163 = vector.load %arg17[%c0_125, %c0_126, %c0_127] : memref<1x1x32xf32, #tpu.memory_space<vmem>>, vector<1x1x32xf32>
    %164 = vector.shape_cast %163 : vector<1x1x32xf32> to vector<1x32xf32>
    %165 = vector.broadcast %164 : vector<1x32xf32> to vector<16x32xf32>
    %166 = arith.addf %162, %165 : vector<16x32xf32>
    %167 = arith.addf %148, %166 : vector<16x32xf32>
    %c0_128 = arith.constant 0 : index
    %c0_129 = arith.constant 0 : index
    %c0_130 = arith.constant 0 : index
    %168 = vector.load %arg20[%c0_128, %c0_129, %c0_130] : memref<1x1x32xf32, #tpu.memory_space<vmem>>, vector<1x1x32xf32>
    %169 = vector.shape_cast %168 : vector<1x1x32xf32> to vector<1x32xf32>
    %c0_131 = arith.constant 0 : index
    %c0_132 = arith.constant 0 : index
    %c0_133 = arith.constant 0 : index
    %170 = vector.load %arg21[%c0_131, %c0_132, %c0_133] : memref<1x1x32xf32, #tpu.memory_space<vmem>>, vector<1x1x32xf32>
    %171 = vector.shape_cast %170 : vector<1x1x32xf32> to vector<1x32xf32>
    %cst_134 = arith.constant dense<0.000000e+00> : vector<16xf32>
    %172 = vector.multi_reduction <add>, %167, %cst_134 [1] : vector<16x32xf32> to vector<16xf32>
    %173 = vector.shape_cast %172 : vector<16xf32> to vector<16x1xf32>
    %cst_135 = arith.constant 3.200000e+01 : f32
    %174 = vector.broadcast %cst_135 : f32 to vector<16x1xf32>
    %175 = arith.divf %173, %174 : vector<16x1xf32>
    %176 = vector.broadcast %175 : vector<16x1xf32> to vector<16x32xf32>
    %177 = arith.subf %167, %176 : vector<16x32xf32>
    %178 = arith.mulf %177, %177 : vector<16x32xf32>
    %cst_136 = arith.constant dense<0.000000e+00> : vector<16xf32>
    %179 = vector.multi_reduction <add>, %178, %cst_136 [1] : vector<16x32xf32> to vector<16xf32>
    %180 = vector.shape_cast %179 : vector<16xf32> to vector<16x1xf32>
    %cst_137 = arith.constant 3.200000e+01 : f32
    %181 = vector.broadcast %cst_137 : f32 to vector<16x1xf32>
    %182 = arith.divf %180, %181 : vector<16x1xf32>
    %183 = vector.broadcast %175 : vector<16x1xf32> to vector<16x32xf32>
    %184 = arith.subf %167, %183 : vector<16x32xf32>
    %cst_138 = arith.constant 9.99999974E-6 : f32
    %185 = vector.broadcast %cst_138 : f32 to vector<16x1xf32>
    %186 = arith.addf %182, %185 : vector<16x1xf32>
    %187 = math.rsqrt %186 : vector<16x1xf32>
    %188 = vector.broadcast %187 : vector<16x1xf32> to vector<16x32xf32>
    %189 = arith.mulf %184, %188 : vector<16x32xf32>
    %190 = vector.broadcast %169 : vector<1x32xf32> to vector<16x32xf32>
    %191 = arith.mulf %189, %190 : vector<16x32xf32>
    %192 = vector.broadcast %171 : vector<1x32xf32> to vector<16x32xf32>
    %193 = arith.addf %191, %192 : vector<16x32xf32>
    %c0_139 = arith.constant 0 : index
    %c0_140 = arith.constant 0 : index
    %194 = vector.load %arg32[%c0_139, %c0_140] : memref<16x32xf32, #tpu.memory_space<vmem>>, vector<16x32xf32>
    tpu.vector_store %arg32[%c0_139, %c0_140], %193 {strides = array<i32>} : memref<16x32xf32, #tpu.memory_space<vmem>>, vector<16x32xf32>,
    %c1_i32 = arith.constant 1 : i32
    %195 = arith.cmpi eq, %arg1, %c1_i32 : i32
    %196 = arith.extui %195 : i1 to i32
    %c0_i32_141 = arith.constant 0 : i32
    %197 = arith.cmpi ne, %196, %c0_i32_141 : i32
    scf.if %197 {
      %198 = vector.shape_cast %193 : vector<16x32xf32> to vector<2x8x32xf32>
      %cst_142 = arith.constant dense<0.000000e+00> : vector<2x32xf32>
      %199 = vector.multi_reduction <add>, %198, %cst_142 [1] : vector<2x8x32xf32> to vector<2x32xf32>
      %cst_143 = arith.constant 8.000000e+00 : f32
      %200 = vector.broadcast %cst_143 : f32 to vector<2x32xf32>
      %201 = arith.divf %199, %200 : vector<2x32xf32>
      %202 = arith.truncf %201 : vector<2x32xf32> to vector<2x32xbf16>
      %c0_144 = arith.constant 0 : index
      %c0_145 = arith.constant 0 : index
      %203 = vector.load %arg22[%c0_144, %c0_145] : memref<32x32xbf16, #tpu.memory_space<vmem>>, vector<32x32xbf16>
      %cst_146 = arith.constant dense<0.000000e+00> : vector<2x32xf32>
      %204 = tpu.matmul %202, %203, %cst_146 {dimension_numbers = #tpu.dot_dimension_numbers<[1], [0], [0], [1], [0, 0, 1, 1], [], []>} : vector<2x32xbf16>, vector<32x32xbf16>, vector<2x32xf32> -> vector<2x32xf32>
      %c0_147 = arith.constant 0 : index
      %c0_148 = arith.constant 0 : index
      %205 = vector.load %arg23[%c0_147, %c0_148] : memref<1x32xf32, #tpu.memory_space<vmem>>, vector<1x32xf32>
      %206 = vector.broadcast %205 : vector<1x32xf32> to vector<2x32xf32>
      %207 = arith.addf %204, %206 : vector<2x32xf32>
      %cst_149 = arith.constant 0.000000e+00 : f32
      %208 = vector.broadcast %cst_149 : f32 to vector<2x32xf32>
      %209 = arith.maximumf %207, %208 : vector<2x32xf32>
      %210 = arith.truncf %209 : vector<2x32xf32> to vector<2x32xbf16>
      %c0_150 = arith.constant 0 : index
      %c0_151 = arith.constant 0 : index
      %211 = vector.load %arg24[%c0_150, %c0_151] : memref<32x128xbf16, #tpu.memory_space<vmem>>, vector<32x128xbf16>
      %cst_152 = arith.constant dense<0.000000e+00> : vector<2x128xf32>
      %212 = tpu.matmul %210, %211, %cst_152 {dimension_numbers = #tpu.dot_dimension_numbers<[1], [0], [0], [1], [0, 0, 1, 1], [], []>} : vector<2x32xbf16>, vector<32x128xbf16>, vector<2x128xf32> -> vector<2x128xf32>
      %c0_153 = arith.constant 0 : index
      %c0_154 = arith.constant 0 : index
      %213 = vector.load %arg25[%c0_153, %c0_154] : memref<1x128xf32, #tpu.memory_space<vmem>>, vector<1x128xf32>
      %214 = vector.broadcast %213 : vector<1x128xf32> to vector<2x128xf32>
      %215 = arith.addf %212, %214 : vector<2x128xf32>
      %c0_155 = arith.constant 0 : index
      %c0_156 = arith.constant 0 : index
      %c0_157 = arith.constant 0 : index
      %216 = vector.load %arg30[%c0_155, %c0_156, %c0_157] : memref<2x1x128xf32, #tpu.memory_space<vmem>>, vector<2x1x128xf32>
      %217 = vector.shape_cast %216 : vector<2x1x128xf32> to vector<2x128xf32>
      %218 = vector.shape_cast %215 : vector<2x128xf32> to vector<2x1x128xf32>
      tpu.vector_store %arg30[%c0_155, %c0_156, %c0_157], %218 {strides = array<i32>} : memref<2x1x128xf32, #tpu.memory_space<vmem>>, vector<2x1x128xf32>,
      %219 = arith.truncf %193 : vector<16x32xf32> to vector<16x32xbf16>
      %c0_158 = arith.constant 0 : index
      %c0_159 = arith.constant 0 : index
      %220 = vector.load %arg26[%c0_158, %c0_159] : memref<32x32xbf16, #tpu.memory_space<vmem>>, vector<32x32xbf16>
      %cst_160 = arith.constant dense<0.000000e+00> : vector<16x32xf32>
      %221 = tpu.matmul %219, %220, %cst_160 {dimension_numbers = #tpu.dot_dimension_numbers<[1], [0], [0], [1], [0, 0, 1, 1], [], []>} : vector<16x32xbf16>, vector<32x32xbf16>, vector<16x32xf32> -> vector<16x32xf32>
      %c0_161 = arith.constant 0 : index
      %c0_162 = arith.constant 0 : index
      %222 = vector.load %arg27[%c0_161, %c0_162] : memref<1x32xf32, #tpu.memory_space<vmem>>, vector<1x32xf32>
      %223 = vector.broadcast %222 : vector<1x32xf32> to vector<16x32xf32>
      %224 = arith.addf %221, %223 : vector<16x32xf32>
      %cst_163 = arith.constant 0.000000e+00 : f32
      %225 = vector.broadcast %cst_163 : f32 to vector<16x32xf32>
      %226 = arith.maximumf %224, %225 : vector<16x32xf32>
      %227 = arith.truncf %226 : vector<16x32xf32> to vector<16x32xbf16>
      %c0_164 = arith.constant 0 : index
      %c0_165 = arith.constant 0 : index
      %228 = vector.load %arg28[%c0_164, %c0_165] : memref<32x128xbf16, #tpu.memory_space<vmem>>, vector<32x128xbf16>
      %cst_166 = arith.constant dense<0.000000e+00> : vector<16x128xf32>
      %229 = tpu.matmul %227, %228, %cst_166 {dimension_numbers = #tpu.dot_dimension_numbers<[1], [0], [0], [1], [0, 0, 1, 1], [], []>} : vector<16x32xbf16>, vector<32x128xbf16>, vector<16x128xf32> -> vector<16x128xf32>
      %c0_167 = arith.constant 0 : index
      %c0_168 = arith.constant 0 : index
      %230 = vector.load %arg29[%c0_167, %c0_168] : memref<1x128xf32, #tpu.memory_space<vmem>>, vector<1x128xf32>
      %231 = vector.broadcast %230 : vector<1x128xf32> to vector<16x128xf32>
      %232 = arith.addf %229, %231 : vector<16x128xf32>
      %233 = vector.shape_cast %232 : vector<16x128xf32> to vector<2x8x128xf32>
      %234 = arith.mulf %233, %233 : vector<2x8x128xf32>
      %cst_169 = arith.constant dense<0.000000e+00> : vector<2x128xf32>
      %235 = vector.multi_reduction <add>, %234, %cst_169 [1] : vector<2x8x128xf32> to vector<2x128xf32>
      %236 = vector.shape_cast %235 : vector<2x128xf32> to vector<2x1x128xf32>
      %cst_170 = arith.constant 1.000000e-24 : f32
      %237 = vector.broadcast %cst_170 : f32 to vector<2x1x128xf32>
      %238 = arith.maximumf %236, %237 : vector<2x1x128xf32>
      %239 = math.rsqrt %238 : vector<2x1x128xf32>
      %240 = vector.broadcast %239 : vector<2x1x128xf32> to vector<2x8x128xf32>
      %241 = arith.mulf %233, %240 : vector<2x8x128xf32>
      %c0_171 = arith.constant 0 : index
      %c0_172 = arith.constant 0 : index
      %c0_173 = arith.constant 0 : index
      %242 = vector.load %arg31[%c0_171, %c0_172, %c0_173] : memref<2x8x128xf32, #tpu.memory_space<vmem>>, vector<2x8x128xf32>
      tpu.vector_store %arg31[%c0_171, %c0_172, %c0_173], %241 {strides = array<i32>} : memref<2x8x128xf32, #tpu.memory_space<vmem>>, vector<2x8x128xf32>,
    } else {
    }
    return
  }
  func.func @transform_0(%arg0: i32, %arg1: i32) -> (i32, i32, i32) {
    %c0_i32 = arith.constant 0 : i32
    %c0_i32_0 = arith.constant 0 : i32
    %c0_i32_1 = arith.constant 0 : i32
    return %arg0, %c0_i32, %c0_i32_0 : i32, i32, i32
  }
  func.func @transform_1(%arg0: i32, %arg1: i32) -> (i32, i32) {
    %c0_i32 = arith.constant 0 : i32
    %c0_i32_0 = arith.constant 0 : i32
    %c0_i32_1 = arith.constant 0 : i32
    return %c0_i32, %c0_i32_0 : i32, i32
  }
  func.func @transform_2(%arg0: i32, %arg1: i32) -> (i32, i32) {
    %c0_i32 = arith.constant 0 : i32
    %c0_i32_0 = arith.constant 0 : i32
    %c0_i32_1 = arith.constant 0 : i32
    return %c0_i32, %c0_i32_0 : i32, i32
  }
  func.func @transform_3(%arg0: i32, %arg1: i32) -> (i32, i32) {
    %c0_i32 = arith.constant 0 : i32
    %c0_i32_0 = arith.constant 0 : i32
    %c0_i32_1 = arith.constant 0 : i32
    return %c0_i32, %c0_i32_0 : i32, i32
  }
  func.func @transform_4(%arg0: i32, %arg1: i32) -> (i32, i32, i32) {
    %c0_i32 = arith.constant 0 : i32
    %c0_i32_0 = arith.constant 0 : i32
    %c0_i32_1 = arith.constant 0 : i32
    return %arg1, %c0_i32, %c0_i32_0 : i32, i32, i32
  }
  func.func @transform_5(%arg0: i32, %arg1: i32) -> (i32, i32, i32) {
    %c0_i32 = arith.constant 0 : i32
    %c0_i32_0 = arith.constant 0 : i32
    %c0_i32_1 = arith.constant 0 : i32
    return %arg1, %c0_i32, %c0_i32_0 : i32, i32, i32
  }
  func.func @transform_6(%arg0: i32, %arg1: i32) -> (i32, i32, i32) {
    %c0_i32 = arith.constant 0 : i32
    %c0_i32_0 = arith.constant 0 : i32
    %c0_i32_1 = arith.constant 0 : i32
    return %arg1, %c0_i32, %c0_i32_0 : i32, i32, i32
  }
  func.func @transform_7(%arg0: i32, %arg1: i32) -> (i32, i32, i32) {
    %c0_i32 = arith.constant 0 : i32
    %c0_i32_0 = arith.constant 0 : i32
    %c0_i32_1 = arith.constant 0 : i32
    return %arg1, %c0_i32, %c0_i32_0 : i32, i32, i32
  }
  func.func @transform_8(%arg0: i32, %arg1: i32) -> (i32, i32, i32) {
    %c0_i32 = arith.constant 0 : i32
    %c0_i32_0 = arith.constant 0 : i32
    %c0_i32_1 = arith.constant 0 : i32
    return %arg1, %c0_i32, %c0_i32_0 : i32, i32, i32
  }
  func.func @transform_9(%arg0: i32, %arg1: i32) -> (i32, i32, i32) {
    %c0_i32 = arith.constant 0 : i32
    %c0_i32_0 = arith.constant 0 : i32
    %c0_i32_1 = arith.constant 0 : i32
    return %arg1, %c0_i32, %c0_i32_0 : i32, i32, i32
  }
  func.func @transform_10(%arg0: i32, %arg1: i32) -> (i32, i32, i32) {
    %c0_i32 = arith.constant 0 : i32
    %c0_i32_0 = arith.constant 0 : i32
    %c0_i32_1 = arith.constant 0 : i32
    return %arg1, %c0_i32, %c0_i32_0 : i32, i32, i32
  }
  func.func @transform_11(%arg0: i32, %arg1: i32) -> (i32, i32, i32) {
    %c0_i32 = arith.constant 0 : i32
    %c0_i32_0 = arith.constant 0 : i32
    %c0_i32_1 = arith.constant 0 : i32
    return %arg1, %c0_i32, %c0_i32_0 : i32, i32, i32
  }
  func.func @transform_12(%arg0: i32, %arg1: i32) -> (i32, i32, i32) {
    %c0_i32 = arith.constant 0 : i32
    %c0_i32_0 = arith.constant 0 : i32
    %c0_i32_1 = arith.constant 0 : i32
    return %arg1, %c0_i32, %c0_i32_0 : i32, i32, i32
  }
  func.func @transform_13(%arg0: i32, %arg1: i32) -> (i32, i32, i32) {
    %c0_i32 = arith.constant 0 : i32
    %c0_i32_0 = arith.constant 0 : i32
    %c0_i32_1 = arith.constant 0 : i32
    return %arg1, %c0_i32, %c0_i32_0 : i32, i32, i32
  }
  func.func @transform_14(%arg0: i32, %arg1: i32) -> (i32, i32, i32) {
    %c0_i32 = arith.constant 0 : i32
    %c0_i32_0 = arith.constant 0 : i32
    %c0_i32_1 = arith.constant 0 : i32
    return %arg1, %c0_i32, %c0_i32_0 : i32, i32, i32
  }
  func.func @transform_15(%arg0: i32, %arg1: i32) -> (i32, i32, i32) {
    %c0_i32 = arith.constant 0 : i32
    %c0_i32_0 = arith.constant 0 : i32
    %c0_i32_1 = arith.constant 0 : i32
    return %arg1, %c0_i32, %c0_i32_0 : i32, i32, i32
  }
  func.func @transform_16(%arg0: i32, %arg1: i32) -> (i32, i32, i32) {
    %c0_i32 = arith.constant 0 : i32
    %c0_i32_0 = arith.constant 0 : i32
    %c0_i32_1 = arith.constant 0 : i32
    return %arg1, %c0_i32, %c0_i32_0 : i32, i32, i32
  }
  func.func @transform_17(%arg0: i32, %arg1: i32) -> (i32, i32, i32) {
    %c0_i32 = arith.constant 0 : i32
    %c0_i32_0 = arith.constant 0 : i32
    %c0_i32_1 = arith.constant 0 : i32
    return %arg1, %c0_i32, %c0_i32_0 : i32, i32, i32
  }
  func.func @transform_18(%arg0: i32, %arg1: i32) -> (i32, i32, i32) {
    %c0_i32 = arith.constant 0 : i32
    %c0_i32_0 = arith.constant 0 : i32
    %c0_i32_1 = arith.constant 0 : i32
    return %arg1, %c0_i32, %c0_i32_0 : i32, i32, i32
  }
  func.func @transform_19(%arg0: i32, %arg1: i32) -> (i32, i32, i32) {
    %c0_i32 = arith.constant 0 : i32
    %c0_i32_0 = arith.constant 0 : i32
    %c0_i32_1 = arith.constant 0 : i32
    return %arg1, %c0_i32, %c0_i32_0 : i32, i32, i32
  }
  func.func @transform_20(%arg0: i32, %arg1: i32) -> (i32, i32) {
    %c0_i32 = arith.constant 0 : i32
    %c0_i32_0 = arith.constant 0 : i32
    %c0_i32_1 = arith.constant 0 : i32
    return %c0_i32, %c0_i32_0 : i32, i32
  }
  func.func @transform_21(%arg0: i32, %arg1: i32) -> (i32, i32) {
    %c0_i32 = arith.constant 0 : i32
    %c0_i32_0 = arith.constant 0 : i32
    %c0_i32_1 = arith.constant 0 : i32
    return %c0_i32, %c0_i32_0 : i32, i32
  }
  func.func @transform_22(%arg0: i32, %arg1: i32) -> (i32, i32) {
    %c0_i32 = arith.constant 0 : i32
    %c0_i32_0 = arith.constant 0 : i32
    %c0_i32_1 = arith.constant 0 : i32
    return %c0_i32, %c0_i32_0 : i32, i32
  }
  func.func @transform_23(%arg0: i32, %arg1: i32) -> (i32, i32) {
    %c0_i32 = arith.constant 0 : i32
    %c0_i32_0 = arith.constant 0 : i32
    %c0_i32_1 = arith.constant 0 : i32
    return %c0_i32, %c0_i32_0 : i32, i32
  }
  func.func @transform_24(%arg0: i32, %arg1: i32) -> (i32, i32) {
    %c0_i32 = arith.constant 0 : i32
    %c0_i32_0 = arith.constant 0 : i32
    %c0_i32_1 = arith.constant 0 : i32
    return %c0_i32, %c0_i32_0 : i32, i32
  }
  func.func @transform_25(%arg0: i32, %arg1: i32) -> (i32, i32) {
    %c0_i32 = arith.constant 0 : i32
    %c0_i32_0 = arith.constant 0 : i32
    %c0_i32_1 = arith.constant 0 : i32
    return %c0_i32, %c0_i32_0 : i32, i32
  }
  func.func @transform_26(%arg0: i32, %arg1: i32) -> (i32, i32) {
    %c0_i32 = arith.constant 0 : i32
    %c0_i32_0 = arith.constant 0 : i32
    %c0_i32_1 = arith.constant 0 : i32
    return %c0_i32, %c0_i32_0 : i32, i32
  }
  func.func @transform_27(%arg0: i32, %arg1: i32) -> (i32, i32) {
    %c0_i32 = arith.constant 0 : i32
    %c0_i32_0 = arith.constant 0 : i32
    %c0_i32_1 = arith.constant 0 : i32
    return %c0_i32, %c0_i32_0 : i32, i32
  }
  func.func @transform_28(%arg0: i32, %arg1: i32) -> (i32, i32, i32) {
    %c0_i32 = arith.constant 0 : i32
    %c0_i32_0 = arith.constant 0 : i32
    %c0_i32_1 = arith.constant 0 : i32
    return %arg0, %c0_i32, %c0_i32_0 : i32, i32, i32
  }
  func.func @transform_29(%arg0: i32, %arg1: i32) -> (i32, i32, i32) {
    %c0_i32 = arith.constant 0 : i32
    %c0_i32_0 = arith.constant 0 : i32
    %c0_i32_1 = arith.constant 0 : i32
    return %arg0, %c0_i32, %c0_i32_0 : i32, i32, i32
  }
}

</mosaic_0001>

<llo_original>
// kernel: transformer_operator_forward.1
$region0: #{transformer_operator_forward.1}
  #allocation0 [shape = 'u32[]', space=smem, size = 0x4, offset = 0x4, fixed_abs, tag = 'smem constant byte address 0x4 - core index']
  #allocation1 [shape = 'u32[144,128]{1,0:T(1,128)}', space=vmem, size = 0x12000, scoped, tag = 'internal scratch']
  #allocation2 [shape = 'f32[16,32]{1,0:T(8,128)}', space=vmem, size = 0x2000, scoped, tag = 'scratch operand']
  #allocation3 [shape = 'f32[2,8,32]{2,1,0:T(8,128)}', space=vmem, size = 0x2000, scoped, tag = 'scratch operand']
  #allocation4 [shape = 'f32[2,8,32]{2,1,0:T(8,128)}', space=vmem, size = 0x2000, scoped, tag = 'scratch operand']
  #allocation5 [shape = 'f32[2,8,32]{2,1,0:T(8,128)}', space=vmem, size = 0x2000, scoped, tag = 'scratch operand']
  #allocation6 [shape = 'f32[2,8,32]{2,1,0:T(8,128)}', space=vmem, size = 0x2000, scoped, tag = 'scratch operand']
  %s0 = inlined_call_operand.smem [shape: u32[30], index: -1, kind: input, shape index: {}]
  %s1 = sld [smem:[%s0]]
  %s2 = scalar_lea.smem %s0, 1
  %s3 = sld [smem:[%s2]]
  %s4 = scalar_lea.smem %s0, 2
  %s5 = sld [smem:[%s4]]
  %s6 = scalar_lea.smem %s0, 3
  %s7 = sld [smem:[%s6]]
  %s8 = scalar_lea.smem %s0, 4
  %s9 = sld [smem:[%s8]]
  %s10 = scalar_lea.smem %s0, 5
  %s11 = sld [smem:[%s10]]
  %s12 = scalar_lea.smem %s0, 6
  %s13 = sld [smem:[%s12]]
  %s14 = scalar_lea.smem %s0, 7
  %s15 = sld [smem:[%s14]]
  %s16 = scalar_lea.smem %s0, 8
  %s17 = sld [smem:[%s16]]
  %s18 = scalar_lea.smem %s0, 9
  %s19 = sld [smem:[%s18]]
  %s20 = scalar_lea.smem %s0, 10
  %s21 = sld [smem:[%s20]]
  %s22 = scalar_lea.smem %s0, 11
  %s23 = sld [smem:[%s22]]
  %s24 = scalar_lea.smem %s0, 12
  %s25 = sld [smem:[%s24]]
  %s26 = scalar_lea.smem %s0, 13
  %s27 = sld [smem:[%s26]]
  %s28 = scalar_lea.smem %s0, 14
  %s29 = sld [smem:[%s28]]
  %s30 = scalar_lea.smem %s0, 15
  %s31 = sld [smem:[%s30]]
  %s32 = scalar_lea.smem %s0, 16
  %s33 = sld [smem:[%s32]]
  %s34 = scalar_lea.smem %s0, 17
  %s35 = sld [smem:[%s34]]
  %s36 = scalar_lea.smem %s0, 18
  %s37 = sld [smem:[%s36]]
  %s38 = scalar_lea.smem %s0, 19
  %s39 = sld [smem:[%s38]]
  %s40 = scalar_lea.smem %s0, 20
  %s41 = sld [smem:[%s40]]
  %s42 = scalar_lea.smem %s0, 21
  %s43 = sld [smem:[%s42]]
  %s44 = scalar_lea.smem %s0, 22
  %s45 = sld [smem:[%s44]]
  %s46 = scalar_lea.smem %s0, 23
  %s47 = sld [smem:[%s46]]
  %s48 = scalar_lea.smem %s0, 24
  %s49 = sld [smem:[%s48]]
  %s50 = scalar_lea.smem %s0, 25
  %s51 = sld [smem:[%s50]]
  %s52 = scalar_lea.smem %s0, 26
  %s53 = sld [smem:[%s52]]
  %s54 = scalar_lea.smem %s0, 27
  %s55 = sld [smem:[%s54]]
  %s56 = scalar_lea.smem %s0, 28
  %s57 = sld [smem:[%s56]]
  %s58 = scalar_lea.smem %s0, 29
  %s59 = sld [smem:[%s58]]
  %60 = xla_tuple %s57, %s59
  %s61 = sld [smem:[#allocation0]]
  $region225: #{transformer_operator_forward.1} parent=0
    _
  %s63 = ssub.s32 1, %s61
  %s64 = scalar_select 0, %s63, %s61
  $region1: #{transformer_operator_forward.1} parent=0
    #allocation7 [shape = 'u8[512]{0}', space=vmem, size = 0x400, scoped, tag = 'input window, operand 2, single buffered']
    #allocation8 [shape = 's32[2]{0}', space=sflag, size = 0x8, scoped, tag = 'scoped memory for transformer_operator_forward.1']
    #allocation9 [shape = 's32[2]{0}', space=sflag, size = 0x8, scoped, tag = 'scoped memory for transformer_operator_forward.1']
    #allocation10 [shape = 'u8[4096]{0}', space=vmem, size = 0x1000, scoped, tag = 'input window, operand 3, single buffered']
    #allocation11 [shape = 's32[1]{0}', space=sflag, size = 0x4, scoped, tag = 'scoped memory for transformer_operator_forward.1']
    #allocation12 [shape = 'u8[1024]{0}', space=vmem, size = 0x400, scoped, tag = 'input window, operand 7']
    #allocation13 [shape = 'u8[1024]{0}', space=vmem, size = 0x400, scoped, tag = 'input window, operand 9']
    #allocation14 [shape = 'u8[1024]{0}', space=vmem, size = 0x400, scoped, tag = 'input window, operand 11']
    #allocation15 [shape = 'u8[1024]{0}', space=vmem, size = 0x400, scoped, tag = 'input window, operand 13']
    #allocation16 [shape = 'u8[1024]{0}', space=vmem, size = 0x400, scoped, tag = 'input window, operand 15']
    #allocation17 [shape = 'u8[1024]{0}', space=vmem, size = 0x400, scoped, tag = 'input window, operand 16']
    #allocation18 [shape = 'u8[1024]{0}', space=vmem, size = 0x400, scoped, tag = 'input window, operand 17']
    #allocation19 [shape = 'u8[1024]{0}', space=vmem, size = 0x400, scoped, tag = 'input window, operand 18']
    #allocation20 [shape = 'u8[1024]{0}', space=vmem, size = 0x400, scoped, tag = 'input window, operand 19']
    #allocation21 [shape = 'u8[512]{0}', space=vmem, size = 0x400, scoped, tag = 'input window, operand 21, single buffered']
    #allocation22 [shape = 'u8[8192]{0}', space=vmem, size = 0x2000, scoped, tag = 'input window, operand 22, single buffered']
    #allocation23 [shape = 's32[1]{0}', space=sflag, size = 0x4, scoped, tag = 'scoped memory for transformer_operator_forward.1']
    #allocation24 [shape = 'u8[512]{0}', space=vmem, size = 0x400, scoped, tag = 'input window, operand 23, single buffered']
    #allocation25 [shape = 'u8[512]{0}', space=vmem, size = 0x400, scoped, tag = 'input window, operand 25, single buffered']
    #allocation26 [shape = 's32[1]{0}', space=sflag, size = 0x4, scoped, tag = 'scoped memory for transformer_operator_forward.1']
    #allocation27 [shape = 'u8[512]{0}', space=vmem, size = 0x400, scoped, tag = 'input window, operand 27, single buffered']
    #allocation28 [shape = 'u8[1024]{0}', space=vmem, size = 0x400, scoped, tag = 'output window, operand 0, single buffered']
    %65 = vsyncpa [#allocation8], 0
    %66 = vsyncpa [#allocation11], 0
    %67 = vsyncpa [#allocation23], 0
    %68 = vsyncpa [#allocation26], 0
    %69 = vsyncpa [#allocation9], 0
    loop: start=0, step=1, limit=4
    $region2: #{transformer_operator_forward.1} parent=1 // loop_pre_header
      _
    $region3: #{transformer_operator_forward.1} parent=1 // loop_header
      %s71 = sphi 0, %s75
      %p72 = scmp.ge.s32.totalorder %s71, 4
      %s78 = sphi 0, %s90
      %s79 = sphi 0, %s86
      %s80 = sphi 0, %s78
      %s81 = sphi 0, %s79
      %s82 = sphi 0, %s80
      %s83 = sphi 0, %s81
      %s93 = sphi 0, %s95
      %s96 = sphi 0, %s93
      %s97 = sphi 0, %s96
      %s113 = sphi 0, %s97
      %s117 = sphi 0, %s117
      %s119 = sphi 0, %s117
      %s120 = sphi 0, %s119
      %s134 = sphi 0, %s120
      %s138 = sphi 0, %s138
      %s140 = sphi 0, %s138
      %s141 = sphi 0, %s140
      %s155 = sphi 0, %s141
      %s159 = sphi 0, %s159
      %s161 = sphi 0, %s159
      %s162 = sphi 0, %s161
      %s176 = sphi 0, %s162
      %s182 = sphi 0, %s184
      %s185 = sphi 0, %s182
      %s186 = sphi 0, %s185
      %s202 = sphi 0, %s186
      %s208 = sphi 0, %s210
      %s211 = sphi 0, %s208
      %s212 = sphi 0, %s211
      %s228 = sphi 0, %s212
      %s234 = sphi 0, %s236
      %s237 = sphi 0, %s234
      %s238 = sphi 0, %s237
      %s254 = sphi 0, %s238
      %s260 = sphi 0, %s262
      %s263 = sphi 0, %s260
      %s264 = sphi 0, %s263
      %s280 = sphi 0, %s264
      %s286 = sphi 0, %s288
      %s289 = sphi 0, %s286
      %s290 = sphi 0, %s289
      %s306 = sphi 0, %s290
      %s312 = sphi 0, %s314
      %s315 = sphi 0, %s312
      %s316 = sphi 0, %s315
      %s332 = sphi 0, %s316
      %s338 = sphi 0, %s340
      %s341 = sphi 0, %s338
      %s342 = sphi 0, %s341
      %s358 = sphi 0, %s342
      %s364 = sphi 0, %s366
      %s367 = sphi 0, %s364
      %s368 = sphi 0, %s367
      %s384 = sphi 0, %s368
      %s390 = sphi 0, %s392
      %s393 = sphi 0, %s390
      %s394 = sphi 0, %s393
      %s410 = sphi 0, %s394
      %s416 = sphi 0, %s418
      %s419 = sphi 0, %s416
      %s420 = sphi 0, %s419
      %s436 = sphi 0, %s420
      %s442 = sphi 0, %s444
      %s445 = sphi 0, %s442
      %s446 = sphi 0, %s445
      %s462 = sphi 0, %s446
      %s468 = sphi 0, %s470
      %s471 = sphi 0, %s468
      %s472 = sphi 0, %s471
      %s488 = sphi 0, %s472
      %s494 = sphi 0, %s496
      %s497 = sphi 0, %s494
      %s498 = sphi 0, %s497
      %s514 = sphi 0, %s498
      %s520 = sphi 0, %s522
      %s523 = sphi 0, %s520
      %s524 = sphi 0, %s523
      %s540 = sphi 0, %s524
      %s546 = sphi 0, %s548
      %s549 = sphi 0, %s546
      %s550 = sphi 0, %s549
      %s566 = sphi 0, %s550
      %s572 = sphi 0, %s574
      %s575 = sphi 0, %s572
      %s576 = sphi 0, %s575
      %s592 = sphi 0, %s576
      %s596 = sphi 0, %s596
      %s598 = sphi 0, %s596
      %s599 = sphi 0, %s598
      %s613 = sphi 0, %s599
      %s617 = sphi 0, %s617
      %s619 = sphi 0, %s617
      %s620 = sphi 0, %s619
      %s634 = sphi 0, %s620
      %s638 = sphi 0, %s638
      %s640 = sphi 0, %s638
      %s641 = sphi 0, %s640
      %s655 = sphi 0, %s641
      %s659 = sphi 0, %s659
      %s661 = sphi 0, %s659
      %s662 = sphi 0, %s661
      %s676 = sphi 0, %s662
      %s680 = sphi 0, %s680
      %s682 = sphi 0, %s680
      %s683 = sphi 0, %s682
      %s697 = sphi 0, %s683
      %s701 = sphi 0, %s701
      %s703 = sphi 0, %s701
      %s704 = sphi 0, %s703
      %s718 = sphi 0, %s704
      %s722 = sphi 0, %s722
      %s724 = sphi 0, %s722
      %s725 = sphi 0, %s724
      %s739 = sphi 0, %s725
      %s743 = sphi 0, %s743
      %s745 = sphi 0, %s743
      %s746 = sphi 0, %s745
      %s760 = sphi 0, %s746
      %s766 = sphi 0, %s768
      %s769 = sphi 0, %s766
      %s770 = sphi 0, %s769
      %s786 = sphi 0, %s770
      %s792 = sphi 0, %s794
      %s795 = sphi 0, %s792
      %s796 = sphi 0, %s795
      %s812 = sphi 0, %s796
    $region4: #{transformer_operator_forward.1} parent=1 // loop_header_branch
      %74 = sbr.rel (%p72) target = $region8
    $region5: #{transformer_operator_forward.1} parent=1 // loop_body
      %s76 = ssub.s32 %s71, 1
      %s77 = ssub.s32 %s71, 2
      %s84 = sadd.s32 1, %s79
      %p85 = scmp.ge.s32.totalorder %s84, 2
      %s86 = scalar_select %p85, 0, %s84
      %s87 = sadd.s32 1, %s78
      %s88 = scalar_select %p85, %s87, %s78
      %p89 = scmp.ge.s32.totalorder %s88, 1
      %s90 = scalar_select %p89, 0, %s88
      %s91 = ssub.s32 %s78, %s90
      %p92 = scmp.eq.s32.totalorder %s91, 0
      %s94 = sadd.s32 %s93, 1
      %s95 = scalar_select %p92, %s93, %s94
      %p98 = pneg %p92
      %p99 = scmp.eq.s32.totalorder %s71, 1
      %p100 = por %p98, %p99
      %p101 = scmp.ne.s32.totalorder %s93, %s96
      %p102 = scmp.eq.s32.totalorder %s71, 0
      %p103 = por %p101, %p102
      %p104 = scmp.ne.s32.totalorder %s93, %s96
      %p105 = scmp.eq.s32.totalorder %s76, 1
      %p106 = por %p104, %p105
      %p107 = scmp.ne.s32.totalorder %s96, %s97
      %p108 = scmp.eq.s32.totalorder %s76, 0
      %p109 = por %p107, %p108
      %p110 = scmp.ne.s32.totalorder %s96, %s97
      %p111 = scmp.eq.s32.totalorder %s77, 1
      %p112 = por %p110, %p111
      %p114 = scmp.ne.s32.totalorder %s97, %s113
      %p115 = scmp.eq.s32.totalorder %s77, 0
      %p116 = por %p114, %p115
      %s118 = sadd.s32 %s117, 1
      %p121 = scmp.eq.s32.totalorder %s71, 1
      %p122 = scmp.ne.s32.totalorder %s117, %s119
      %p123 = scmp.eq.s32.totalorder %s71, 0
      %p124 = por %p122, %p123
      %p125 = scmp.ne.s32.totalorder %s117, %s119
      %p126 = scmp.eq.s32.totalorder %s76, 1
      %p127 = por %p125, %p126
      %p128 = scmp.ne.s32.totalorder %s119, %s120
      %p129 = scmp.eq.s32.totalorder %s76, 0
      %p130 = por %p128, %p129
      %p131 = scmp.ne.s32.totalorder %s119, %s120
      %p132 = scmp.eq.s32.totalorder %s77, 1
      %p133 = por %p131, %p132
      %p135 = scmp.ne.s32.totalorder %s120, %s134
      %p136 = scmp.eq.s32.totalorder %s77, 0
      %p137 = por %p135, %p136
      %s139 = sadd.s32 %s138, 1
      %p142 = scmp.eq.s32.totalorder %s71, 1
      %p143 = scmp.ne.s32.totalorder %s138, %s140
      %p144 = scmp.eq.s32.totalorder %s71, 0
      %p145 = por %p143, %p144
      %p146 = scmp.ne.s32.totalorder %s138, %s140
      %p147 = scmp.eq.s32.totalorder %s76, 1
      %p148 = por %p146, %p147
      %p149 = scmp.ne.s32.totalorder %s140, %s141
      %p150 = scmp.eq.s32.totalorder %s76, 0
      %p151 = por %p149, %p150
      %p152 = scmp.ne.s32.totalorder %s140, %s141
      %p153 = scmp.eq.s32.totalorder %s77, 1
      %p154 = por %p152, %p153
      %p156 = scmp.ne.s32.totalorder %s141, %s155
      %p157 = scmp.eq.s32.totalorder %s77, 0
      %p158 = por %p156, %p157
      %s160 = sadd.s32 %s159, 1
      %p163 = scmp.eq.s32.totalorder %s71, 1
      %p164 = scmp.ne.s32.totalorder %s159, %s161
      %p165 = scmp.eq.s32.totalorder %s71, 0
      %p166 = por %p164, %p165
      %p167 = scmp.ne.s32.totalorder %s159, %s161
      %p168 = scmp.eq.s32.totalorder %s76, 1
      %p169 = por %p167, %p168
      %p170 = scmp.ne.s32.totalorder %s161, %s162
      %p171 = scmp.eq.s32.totalorder %s76, 0
      %p172 = por %p170, %p171
      %p173 = scmp.ne.s32.totalorder %s161, %s162
      %p174 = scmp.eq.s32.totalorder %s77, 1
      %p175 = por %p173, %p174
      %p177 = scmp.ne.s32.totalorder %s162, %s176
      %p178 = scmp.eq.s32.totalorder %s77, 0
      %p179 = por %p177, %p178
      %s180 = ssub.s32 %s79, %s86
      %p181 = scmp.eq.s32.totalorder %s180, 0
      %s183 = sadd.s32 %s182, 1
      %s184 = scalar_select %p181, %s182, %s183
      %p187 = pneg %p181
      %p188 = scmp.eq.s32.totalorder %s71, 1
      %p189 = por %p187, %p188
      %p190 = scmp.ne.s32.totalorder %s182, %s185
      %p191 = scmp.eq.s32.totalorder %s71, 0
      %p192 = por %p190, %p191
      %p193 = scmp.ne.s32.totalorder %s182, %s185
      %p194 = scmp.eq.s32.totalorder %s76, 1
      %p195 = por %p193, %p194
      %p196 = scmp.ne.s32.totalorder %s185, %s186
      %p197 = scmp.eq.s32.totalorder %s76, 0
      %p198 = por %p196, %p197
      %p199 = scmp.ne.s32.totalorder %s185, %s186
      %p200 = scmp.eq.s32.totalorder %s77, 1
      %p201 = por %p199, %p200
      %p203 = scmp.ne.s32.totalorder %s186, %s202
      %p204 = scmp.eq.s32.totalorder %s77, 0
      %p205 = por %p203, %p204
      %s206 = ssub.s32 %s79, %s86
      %p207 = scmp.eq.s32.totalorder %s206, 0
      %s209 = sadd.s32 %s208, 1
      %s210 = scalar_select %p207, %s208, %s209
      %p213 = pneg %p207
      %p214 = scmp.eq.s32.totalorder %s71, 1
      %p215 = por %p213, %p214
      %p216 = scmp.ne.s32.totalorder %s208, %s211
      %p217 = scmp.eq.s32.totalorder %s71, 0
      %p218 = por %p216, %p217
      %p219 = scmp.ne.s32.totalorder %s208, %s211
      %p220 = scmp.eq.s32.totalorder %s76, 1
      %p221 = por %p219, %p220
      %p222 = scmp.ne.s32.totalorder %s211, %s212
      %p223 = scmp.eq.s32.totalorder %s76, 0
      %p224 = por %p222, %p223
      %p225 = scmp.ne.s32.totalorder %s211, %s212
      %p226 = scmp.eq.s32.totalorder %s77, 1
      %p227 = por %p225, %p226
      %p229 = scmp.ne.s32.totalorder %s212, %s228
      %p230 = scmp.eq.s32.totalorder %s77, 0
      %p231 = por %p229, %p230
      %s232 = ssub.s32 %s79, %s86
      %p233 = scmp.eq.s32.totalorder %s232, 0
      %s235 = sadd.s32 %s234, 1
      %s236 = scalar_select %p233, %s234, %s235
      %p239 = pneg %p233
      %p240 = scmp.eq.s32.totalorder %s71, 1
      %p241 = por %p239, %p240
      %p242 = scmp.ne.s32.totalorder %s234, %s237
      %p243 = scmp.eq.s32.totalorder %s71, 0
      %p244 = por %p242, %p243
      %p245 = scmp.ne.s32.totalorder %s234, %s237
      %p246 = scmp.eq.s32.totalorder %s76, 1
      %p247 = por %p245, %p246
      %p248 = scmp.ne.s32.totalorder %s237, %s238
      %p249 = scmp.eq.s32.totalorder %s76, 0
      %p250 = por %p248, %p249
      %p251 = scmp.ne.s32.totalorder %s237, %s238
      %p252 = scmp.eq.s32.totalorder %s77, 1
      %p253 = por %p251, %p252
      %p255 = scmp.ne.s32.totalorder %s238, %s254
      %p256 = scmp.eq.s32.totalorder %s77, 0
      %p257 = por %p255, %p256
      %s258 = ssub.s32 %s79, %s86
      %p259 = scmp.eq.s32.totalorder %s258, 0
      %s261 = sadd.s32 %s260, 1
      %s262 = scalar_select %p259, %s260, %s261
      %p265 = pneg %p259
      %p266 = scmp.eq.s32.totalorder %s71, 1
      %p267 = por %p265, %p266
      %p268 = scmp.ne.s32.totalorder %s260, %s263
      %p269 = scmp.eq.s32.totalorder %s71, 0
      %p270 = por %p268, %p269
      %p271 = scmp.ne.s32.totalorder %s260, %s263
      %p272 = scmp.eq.s32.totalorder %s76, 1
      %p273 = por %p271, %p272
      %p274 = scmp.ne.s32.totalorder %s263, %s264
      %p275 = scmp.eq.s32.totalorder %s76, 0
      %p276 = por %p274, %p275
      %p277 = scmp.ne.s32.totalorder %s263, %s264
      %p278 = scmp.eq.s32.totalorder %s77, 1
      %p279 = por %p277, %p278
      %p281 = scmp.ne.s32.totalorder %s264, %s280
      %p282 = scmp.eq.s32.totalorder %s77, 0
      %p283 = por %p281, %p282
      %s284 = ssub.s32 %s79, %s86
      %p285 = scmp.eq.s32.totalorder %s284, 0
      %s287 = sadd.s32 %s286, 1
      %s288 = scalar_select %p285, %s286, %s287
      %p291 = pneg %p285
      %p292 = scmp.eq.s32.totalorder %s71, 1
      %p293 = por %p291, %p292
      %p294 = scmp.ne.s32.totalorder %s286, %s289
      %p295 = scmp.eq.s32.totalorder %s71, 0
      %p296 = por %p294, %p295
      %p297 = scmp.ne.s32.totalorder %s286, %s289
      %p298 = scmp.eq.s32.totalorder %s76, 1
      %p299 = por %p297, %p298
      %p300 = scmp.ne.s32.totalorder %s289, %s290
      %p301 = scmp.eq.s32.totalorder %s76, 0
      %p302 = por %p300, %p301
      %p303 = scmp.ne.s32.totalorder %s289, %s290
      %p304 = scmp.eq.s32.totalorder %s77, 1
      %p305 = por %p303, %p304
      %p307 = scmp.ne.s32.totalorder %s290, %s306
      %p308 = scmp.eq.s32.totalorder %s77, 0
      %p309 = por %p307, %p308
      %s310 = ssub.s32 %s79, %s86
      %p311 = scmp.eq.s32.totalorder %s310, 0
      %s313 = sadd.s32 %s312, 1
      %s314 = scalar_select %p311, %s312, %s313
      %p317 = pneg %p311
      %p318 = scmp.eq.s32.totalorder %s71, 1
      %p319 = por %p317, %p318
      %p320 = scmp.ne.s32.totalorder %s312, %s315
      %p321 = scmp.eq.s32.totalorder %s71, 0
      %p322 = por %p320, %p321
      %p323 = scmp.ne.s32.totalorder %s312, %s315
      %p324 = scmp.eq.s32.totalorder %s76, 1
      %p325 = por %p323, %p324
      %p326 = scmp.ne.s32.totalorder %s315, %s316
      %p327 = scmp.eq.s32.totalorder %s76, 0
      %p328 = por %p326, %p327
      %p329 = scmp.ne.s32.totalorder %s315, %s316
      %p330 = scmp.eq.s32.totalorder %s77, 1
      %p331 = por %p329, %p330
      %p333 = scmp.ne.s32.totalorder %s316, %s332
      %p334 = scmp.eq.s32.totalorder %s77, 0
      %p335 = por %p333, %p334
      %s336 = ssub.s32 %s79, %s86
      %p337 = scmp.eq.s32.totalorder %s336, 0
      %s339 = sadd.s32 %s338, 1
      %s340 = scalar_select %p337, %s338, %s339
      %p343 = pneg %p337
      %p344 = scmp.eq.s32.totalorder %s71, 1
      %p345 = por %p343, %p344
      %p346 = scmp.ne.s32.totalorder %s338, %s341
      %p347 = scmp.eq.s32.totalorder %s71, 0
      %p348 = por %p346, %p347
      %p349 = scmp.ne.s32.totalorder %s338, %s341
      %p350 = scmp.eq.s32.totalorder %s76, 1
      %p351 = por %p349, %p350
      %p352 = scmp.ne.s32.totalorder %s341, %s342
      %p353 = scmp.eq.s32.totalorder %s76, 0
      %p354 = por %p352, %p353
      %p355 = scmp.ne.s32.totalorder %s341, %s342
      %p356 = scmp.eq.s32.totalorder %s77, 1
      %p357 = por %p355, %p356
      %p359 = scmp.ne.s32.totalorder %s342, %s358
      %p360 = scmp.eq.s32.totalorder %s77, 0
      %p361 = por %p359, %p360
      %s362 = ssub.s32 %s79, %s86
      %p363 = scmp.eq.s32.totalorder %s362, 0
      %s365 = sadd.s32 %s364, 1
      %s366 = scalar_select %p363, %s364, %s365
      %p369 = pneg %p363
      %p370 = scmp.eq.s32.totalorder %s71, 1
      %p371 = por %p369, %p370
      %p372 = scmp.ne.s32.totalorder %s364, %s367
      %p373 = scmp.eq.s32.totalorder %s71, 0
      %p374 = por %p372, %p373
      %p375 = scmp.ne.s32.totalorder %s364, %s367
      %p376 = scmp.eq.s32.totalorder %s76, 1
      %p377 = por %p375, %p376
      %p378 = scmp.ne.s32.totalorder %s367, %s368
      %p379 = scmp.eq.s32.totalorder %s76, 0
      %p380 = por %p378, %p379
      %p381 = scmp.ne.s32.totalorder %s367, %s368
      %p382 = scmp.eq.s32.totalorder %s77, 1
      %p383 = por %p381, %p382
      %p385 = scmp.ne.s32.totalorder %s368, %s384
      %p386 = scmp.eq.s32.totalorder %s77, 0
      %p387 = por %p385, %p386
      %s388 = ssub.s32 %s79, %s86
      %p389 = scmp.eq.s32.totalorder %s388, 0
      %s391 = sadd.s32 %s390, 1
      %s392 = scalar_select %p389, %s390, %s391
      %p395 = pneg %p389
      %p396 = scmp.eq.s32.totalorder %s71, 1
      %p397 = por %p395, %p396
      %p398 = scmp.ne.s32.totalorder %s390, %s393
      %p399 = scmp.eq.s32.totalorder %s71, 0
      %p400 = por %p398, %p399
      %p401 = scmp.ne.s32.totalorder %s390, %s393
      %p402 = scmp.eq.s32.totalorder %s76, 1
      %p403 = por %p401, %p402
      %p404 = scmp.ne.s32.totalorder %s393, %s394
      %p405 = scmp.eq.s32.totalorder %s76, 0
      %p406 = por %p404, %p405
      %p407 = scmp.ne.s32.totalorder %s393, %s394
      %p408 = scmp.eq.s32.totalorder %s77, 1
      %p409 = por %p407, %p408
      %p411 = scmp.ne.s32.totalorder %s394, %s410
      %p412 = scmp.eq.s32.totalorder %s77, 0
      %p413 = por %p411, %p412
      %s414 = ssub.s32 %s79, %s86
      %p415 = scmp.eq.s32.totalorder %s414, 0
      %s417 = sadd.s32 %s416, 1
      %s418 = scalar_select %p415, %s416, %s417
      %p421 = pneg %p415
      %p422 = scmp.eq.s32.totalorder %s71, 1
      %p423 = por %p421, %p422
      %p424 = scmp.ne.s32.totalorder %s416, %s419
      %p425 = scmp.eq.s32.totalorder %s71, 0
      %p426 = por %p424, %p425
      %p427 = scmp.ne.s32.totalorder %s416, %s419
      %p428 = scmp.eq.s32.totalorder %s76, 1
      %p429 = por %p427, %p428
      %p430 = scmp.ne.s32.totalorder %s419, %s420
      %p431 = scmp.eq.s32.totalorder %s76, 0
      %p432 = por %p430, %p431
      %p433 = scmp.ne.s32.totalorder %s419, %s420
      %p434 = scmp.eq.s32.totalorder %s77, 1
      %p435 = por %p433, %p434
      %p437 = scmp.ne.s32.totalorder %s420, %s436
      %p438 = scmp.eq.s32.totalorder %s77, 0
      %p439 = por %p437, %p438
      %s440 = ssub.s32 %s79, %s86
      %p441 = scmp.eq.s32.totalorder %s440, 0
      %s443 = sadd.s32 %s442, 1
      %s444 = scalar_select %p441, %s442, %s443
      %p447 = pneg %p441
      %p448 = scmp.eq.s32.totalorder %s71, 1
      %p449 = por %p447, %p448
      %p450 = scmp.ne.s32.totalorder %s442, %s445
      %p451 = scmp.eq.s32.totalorder %s71, 0
      %p452 = por %p450, %p451
      %p453 = scmp.ne.s32.totalorder %s442, %s445
      %p454 = scmp.eq.s32.totalorder %s76, 1
      %p455 = por %p453, %p454
      %p456 = scmp.ne.s32.totalorder %s445, %s446
      %p457 = scmp.eq.s32.totalorder %s76, 0
      %p458 = por %p456, %p457
      %p459 = scmp.ne.s32.totalorder %s445, %s446
      %p460 = scmp.eq.s32.totalorder %s77, 1
      %p461 = por %p459, %p460
      %p463 = scmp.ne.s32.totalorder %s446, %s462
      %p464 = scmp.eq.s32.totalorder %s77, 0
      %p465 = por %p463, %p464
      %s466 = ssub.s32 %s79, %s86
      %p467 = scmp.eq.s32.totalorder %s466, 0
      %s469 = sadd.s32 %s468, 1
      %s470 = scalar_select %p467, %s468, %s469
      %p473 = pneg %p467
      %p474 = scmp.eq.s32.totalorder %s71, 1
      %p475 = por %p473, %p474
      %p476 = scmp.ne.s32.totalorder %s468, %s471
      %p477 = scmp.eq.s32.totalorder %s71, 0
      %p478 = por %p476, %p477
      %p479 = scmp.ne.s32.totalorder %s468, %s471
      %p480 = scmp.eq.s32.totalorder %s76, 1
      %p481 = por %p479, %p480
      %p482 = scmp.ne.s32.totalorder %s471, %s472
      %p483 = scmp.eq.s32.totalorder %s76, 0
      %p484 = por %p482, %p483
      %p485 = scmp.ne.s32.totalorder %s471, %s472
      %p486 = scmp.eq.s32.totalorder %s77, 1
      %p487 = por %p485, %p486
      %p489 = scmp.ne.s32.totalorder %s472, %s488
      %p490 = scmp.eq.s32.totalorder %s77, 0
      %p491 = por %p489, %p490
      %s492 = ssub.s32 %s79, %s86
      %p493 = scmp.eq.s32.totalorder %s492, 0
      %s495 = sadd.s32 %s494, 1
      %s496 = scalar_select %p493, %s494, %s495
      %p499 = pneg %p493
      %p500 = scmp.eq.s32.totalorder %s71, 1
      %p501 = por %p499, %p500
      %p502 = scmp.ne.s32.totalorder %s494, %s497
      %p503 = scmp.eq.s32.totalorder %s71, 0
      %p504 = por %p502, %p503
      %p505 = scmp.ne.s32.totalorder %s494, %s497
      %p506 = scmp.eq.s32.totalorder %s76, 1
      %p507 = por %p505, %p506
      %p508 = scmp.ne.s32.totalorder %s497, %s498
      %p509 = scmp.eq.s32.totalorder %s76, 0
      %p510 = por %p508, %p509
      %p511 = scmp.ne.s32.totalorder %s497, %s498
      %p512 = scmp.eq.s32.totalorder %s77, 1
      %p513 = por %p511, %p512
      %p515 = scmp.ne.s32.totalorder %s498, %s514
      %p516 = scmp.eq.s32.totalorder %s77, 0
      %p517 = por %p515, %p516
      %s518 = ssub.s32 %s79, %s86
      %p519 = scmp.eq.s32.totalorder %s518, 0
      %s521 = sadd.s32 %s520, 1
      %s522 = scalar_select %p519, %s520, %s521
      %p525 = pneg %p519
      %p526 = scmp.eq.s32.totalorder %s71, 1
      %p527 = por %p525, %p526
      %p528 = scmp.ne.s32.totalorder %s520, %s523
      %p529 = scmp.eq.s32.totalorder %s71, 0
      %p530 = por %p528, %p529
      %p531 = scmp.ne.s32.totalorder %s520, %s523
      %p532 = scmp.eq.s32.totalorder %s76, 1
      %p533 = por %p531, %p532
      %p534 = scmp.ne.s32.totalorder %s523, %s524
      %p535 = scmp.eq.s32.totalorder %s76, 0
      %p536 = por %p534, %p535
      %p537 = scmp.ne.s32.totalorder %s523, %s524
      %p538 = scmp.eq.s32.totalorder %s77, 1
      %p539 = por %p537, %p538
      %p541 = scmp.ne.s32.totalorder %s524, %s540
      %p542 = scmp.eq.s32.totalorder %s77, 0
      %p543 = por %p541, %p542
      %s544 = ssub.s32 %s79, %s86
      %p545 = scmp.eq.s32.totalorder %s544, 0
      %s547 = sadd.s32 %s546, 1
      %s548 = scalar_select %p545, %s546, %s547
      %p551 = pneg %p545
      %p552 = scmp.eq.s32.totalorder %s71, 1
      %p553 = por %p551, %p552
      %p554 = scmp.ne.s32.totalorder %s546, %s549
      %p555 = scmp.eq.s32.totalorder %s71, 0
      %p556 = por %p554, %p555
      %p557 = scmp.ne.s32.totalorder %s546, %s549
      %p558 = scmp.eq.s32.totalorder %s76, 1
      %p559 = por %p557, %p558
      %p560 = scmp.ne.s32.totalorder %s549, %s550
      %p561 = scmp.eq.s32.totalorder %s76, 0
      %p562 = por %p560, %p561
      %p563 = scmp.ne.s32.totalorder %s549, %s550
      %p564 = scmp.eq.s32.totalorder %s77, 1
      %p565 = por %p563, %p564
      %p567 = scmp.ne.s32.totalorder %s550, %s566
      %p568 = scmp.eq.s32.totalorder %s77, 0
      %p569 = por %p567, %p568
      %s570 = ssub.s32 %s79, %s86
      %p571 = scmp.eq.s32.totalorder %s570, 0
      %s573 = sadd.s32 %s572, 1
      %s574 = scalar_select %p571, %s572, %s573
      %p577 = pneg %p571
      %p578 = scmp.eq.s32.totalorder %s71, 1
      %p579 = por %p577, %p578
      %p580 = scmp.ne.s32.totalorder %s572, %s575
      %p581 = scmp.eq.s32.totalorder %s71, 0
      %p582 = por %p580, %p581
      %p583 = scmp.ne.s32.totalorder %s572, %s575
      %p584 = scmp.eq.s32.totalorder %s76, 1
      %p585 = por %p583, %p584
      %p586 = scmp.ne.s32.totalorder %s575, %s576
      %p587 = scmp.eq.s32.totalorder %s76, 0
      %p588 = por %p586, %p587
      %p589 = scmp.ne.s32.totalorder %s575, %s576
      %p590 = scmp.eq.s32.totalorder %s77, 1
      %p591 = por %p589, %p590
      %p593 = scmp.ne.s32.totalorder %s576, %s592
      %p594 = scmp.eq.s32.totalorder %s77, 0
      %p595 = por %p593, %p594
      %s597 = sadd.s32 %s596, 1
      %p600 = scmp.eq.s32.totalorder %s71, 1
      %p601 = scmp.ne.s32.totalorder %s596, %s598
      %p602 = scmp.eq.s32.totalorder %s71, 0
      %p603 = por %p601, %p602
      %p604 = scmp.ne.s32.totalorder %s596, %s598
      %p605 = scmp.eq.s32.totalorder %s76, 1
      %p606 = por %p604, %p605
      %p607 = scmp.ne.s32.totalorder %s598, %s599
      %p608 = scmp.eq.s32.totalorder %s76, 0
      %p609 = por %p607, %p608
      %p610 = scmp.ne.s32.totalorder %s598, %s599
      %p611 = scmp.eq.s32.totalorder %s77, 1
      %p612 = por %p610, %p611
      %p614 = scmp.ne.s32.totalorder %s599, %s613
      %p615 = scmp.eq.s32.totalorder %s77, 0
      %p616 = por %p614, %p615
      %s618 = sadd.s32 %s617, 1
      %p621 = scmp.eq.s32.totalorder %s71, 1
      %p622 = scmp.ne.s32.totalorder %s617, %s619
      %p623 = scmp.eq.s32.totalorder %s71, 0
      %p624 = por %p622, %p623
      %p625 = scmp.ne.s32.totalorder %s617, %s619
      %p626 = scmp.eq.s32.totalorder %s76, 1
      %p627 = por %p625, %p626
      %p628 = scmp.ne.s32.totalorder %s619, %s620
      %p629 = scmp.eq.s32.totalorder %s76, 0
      %p630 = por %p628, %p629
      %p631 = scmp.ne.s32.totalorder %s619, %s620
      %p632 = scmp.eq.s32.totalorder %s77, 1
      %p633 = por %p631, %p632
      %p635 = scmp.ne.s32.totalorder %s620, %s634
      %p636 = scmp.eq.s32.totalorder %s77, 0
      %p637 = por %p635, %p636
      %s639 = sadd.s32 %s638, 1
      %p642 = scmp.eq.s32.totalorder %s71, 1
      %p643 = scmp.ne.s32.totalorder %s638, %s640
      %p644 = scmp.eq.s32.totalorder %s71, 0
      %p645 = por %p643, %p644
      %p646 = scmp.ne.s32.totalorder %s638, %s640
      %p647 = scmp.eq.s32.totalorder %s76, 1
      %p648 = por %p646, %p647
      %p649 = scmp.ne.s32.totalorder %s640, %s641
      %p650 = scmp.eq.s32.totalorder %s76, 0
      %p651 = por %p649, %p650
      %p652 = scmp.ne.s32.totalorder %s640, %s641
      %p653 = scmp.eq.s32.totalorder %s77, 1
      %p654 = por %p652, %p653
      %p656 = scmp.ne.s32.totalorder %s641, %s655
      %p657 = scmp.eq.s32.totalorder %s77, 0
      %p658 = por %p656, %p657
      %s660 = sadd.s32 %s659, 1
      %p663 = scmp.eq.s32.totalorder %s71, 1
      %p664 = scmp.ne.s32.totalorder %s659, %s661
      %p665 = scmp.eq.s32.totalorder %s71, 0
      %p666 = por %p664, %p665
      %p667 = scmp.ne.s32.totalorder %s659, %s661
      %p668 = scmp.eq.s32.totalorder %s76, 1
      %p669 = por %p667, %p668
      %p670 = scmp.ne.s32.totalorder %s661, %s662
      %p671 = scmp.eq.s32.totalorder %s76, 0
      %p672 = por %p670, %p671
      %p673 = scmp.ne.s32.totalorder %s661, %s662
      %p674 = scmp.eq.s32.totalorder %s77, 1
      %p675 = por %p673, %p674
      %p677 = scmp.ne.s32.totalorder %s662, %s676
      %p678 = scmp.eq.s32.totalorder %s77, 0
      %p679 = por %p677, %p678
      %s681 = sadd.s32 %s680, 1
      %p684 = scmp.eq.s32.totalorder %s71, 1
      %p685 = scmp.ne.s32.totalorder %s680, %s682
      %p686 = scmp.eq.s32.totalorder %s71, 0
      %p687 = por %p685, %p686
      %p688 = scmp.ne.s32.totalorder %s680, %s682
      %p689 = scmp.eq.s32.totalorder %s76, 1
      %p690 = por %p688, %p689
      %p691 = scmp.ne.s32.totalorder %s682, %s683
      %p692 = scmp.eq.s32.totalorder %s76, 0
      %p693 = por %p691, %p692
      %p694 = scmp.ne.s32.totalorder %s682, %s683
      %p695 = scmp.eq.s32.totalorder %s77, 1
      %p696 = por %p694, %p695
      %p698 = scmp.ne.s32.totalorder %s683, %s697
      %p699 = scmp.eq.s32.totalorder %s77, 0
      %p700 = por %p698, %p699
      %s702 = sadd.s32 %s701, 1
      %p705 = scmp.eq.s32.totalorder %s71, 1
      %p706 = scmp.ne.s32.totalorder %s701, %s703
      %p707 = scmp.eq.s32.totalorder %s71, 0
      %p708 = por %p706, %p707
      %p709 = scmp.ne.s32.totalorder %s701, %s703
      %p710 = scmp.eq.s32.totalorder %s76, 1
      %p711 = por %p709, %p710
      %p712 = scmp.ne.s32.totalorder %s703, %s704
      %p713 = scmp.eq.s32.totalorder %s76, 0
      %p714 = por %p712, %p713
      %p715 = scmp.ne.s32.totalorder %s703, %s704
      %p716 = scmp.eq.s32.totalorder %s77, 1
      %p717 = por %p715, %p716
      %p719 = scmp.ne.s32.totalorder %s704, %s718
      %p720 = scmp.eq.s32.totalorder %s77, 0
      %p721 = por %p719, %p720
      %s723 = sadd.s32 %s722, 1
      %p726 = scmp.eq.s32.totalorder %s71, 1
      %p727 = scmp.ne.s32.totalorder %s722, %s724
      %p728 = scmp.eq.s32.totalorder %s71, 0
      %p729 = por %p727, %p728
      %p730 = scmp.ne.s32.totalorder %s722, %s724
      %p731 = scmp.eq.s32.totalorder %s76, 1
      %p732 = por %p730, %p731
      %p733 = scmp.ne.s32.totalorder %s724, %s725
      %p734 = scmp.eq.s32.totalorder %s76, 0
      %p735 = por %p733, %p734
      %p736 = scmp.ne.s32.totalorder %s724, %s725
      %p737 = scmp.eq.s32.totalorder %s77, 1
      %p738 = por %p736, %p737
      %p740 = scmp.ne.s32.totalorder %s725, %s739
      %p741 = scmp.eq.s32.totalorder %s77, 0
      %p742 = por %p740, %p741
      %s744 = sadd.s32 %s743, 1
      %p747 = scmp.eq.s32.totalorder %s71, 1
      %p748 = scmp.ne.s32.totalorder %s743, %s745
      %p749 = scmp.eq.s32.totalorder %s71, 0
      %p750 = por %p748, %p749
      %p751 = scmp.ne.s32.totalorder %s743, %s745
      %p752 = scmp.eq.s32.totalorder %s76, 1
      %p753 = por %p751, %p752
      %p754 = scmp.ne.s32.totalorder %s745, %s746
      %p755 = scmp.eq.s32.totalorder %s76, 0
      %p756 = por %p754, %p755
      %p757 = scmp.ne.s32.totalorder %s745, %s746
      %p758 = scmp.eq.s32.totalorder %s77, 1
      %p759 = por %p757, %p758
      %p761 = scmp.ne.s32.totalorder %s746, %s760
      %p762 = scmp.eq.s32.totalorder %s77, 0
      %p763 = por %p761, %p762
      %s764 = ssub.s32 %s78, %s90
      %p765 = scmp.eq.s32.totalorder %s764, 0
      %s767 = sadd.s32 %s766, 1
      %s768 = scalar_select %p765, %s766, %s767
      %p771 = pneg %p765
      %p772 = scmp.eq.s32.totalorder %s71, 1
      %p773 = por %p771, %p772
      %p774 = scmp.ne.s32.totalorder %s766, %s769
      %p775 = scmp.eq.s32.totalorder %s71, 0
      %p776 = por %p774, %p775
      %p777 = scmp.ne.s32.totalorder %s766, %s769
      %p778 = scmp.eq.s32.totalorder %s76, 1
      %p779 = por %p777, %p778
      %p780 = scmp.ne.s32.totalorder %s769, %s770
      %p781 = scmp.eq.s32.totalorder %s76, 0
      %p782 = por %p780, %p781
      %p783 = scmp.ne.s32.totalorder %s769, %s770
      %p784 = scmp.eq.s32.totalorder %s77, 1
      %p785 = por %p783, %p784
      %p787 = scmp.ne.s32.totalorder %s770, %s786
      %p788 = scmp.eq.s32.totalorder %s77, 0
      %p789 = por %p787, %p788
      %s790 = ssub.s32 %s78, %s90
      %p791 = scmp.eq.s32.totalorder %s790, 0
      %s793 = sadd.s32 %s792, 1
      %s794 = scalar_select %p791, %s792, %s793
      %p797 = pneg %p791
      %p798 = scmp.eq.s32.totalorder %s71, 1
      %p799 = por %p797, %p798
      %p800 = scmp.ne.s32.totalorder %s792, %s795
      %p801 = scmp.eq.s32.totalorder %s71, 0
      %p802 = por %p800, %p801
      %p803 = scmp.ne.s32.totalorder %s792, %s795
      %p804 = scmp.eq.s32.totalorder %s76, 1
      %p805 = por %p803, %p804
      %p806 = scmp.ne.s32.totalorder %s795, %s796
      %p807 = scmp.eq.s32.totalorder %s76, 0
      %p808 = por %p806, %p807
      %p809 = scmp.ne.s32.totalorder %s795, %s796
      %p810 = scmp.eq.s32.totalorder %s77, 1
      %p811 = por %p809, %p810
      %p813 = scmp.ne.s32.totalorder %s796, %s812
      %p814 = scmp.eq.s32.totalorder %s77, 0
      %p815 = por %p813, %p814
      %p816 = scmp.le.s32.totalorder 1, %s71
      %p817 = scmp.lt.s32.totalorder %s71, 3
      %p818 = pnand %p816, %p817
      %p819 = pneg %p818
      // Predicated region
      $region9: #{transformer_operator_forward.1} parent=5 // pred_check
        _
      $region10: #{transformer_operator_forward.1} parent=5 // pred_check_branch
        %821 = sbr.rel (%p818) target = $region12
      $region11: #{transformer_operator_forward.1} parent=5 // pred_region
        %s822 = ssub.s32 %s71, 1
        // Predicated region
        $region13: #{transformer_operator_forward.1} parent=11 // pred_check
          %p823 = pneg %p109
        $region14: #{transformer_operator_forward.1} parent=11 // pred_check_branch
          %825 = sbr.rel (%p823) target = $region16
        $region15: #{transformer_operator_forward.1} parent=11 // pred_region
          %s826 = smul.u32 2, %s80
          %p827 = scmp.lt.s32.totalorder %s826, 1
          %s828 = scalar_select %p827, %s826, 1
          %s829 = smul.addr %s828, 8
          %s830 = scalar_lea.vmem %s1, %s829
          %s831 = smul.u32 2, %s80
        $region16: #{transformer_operator_forward.1} parent=11 // pred_fallthru
          _
        // Predicated region
        $region17: #{transformer_operator_forward.1} parent=11 // pred_check
          %p832 = pneg %p130
        $region18: #{transformer_operator_forward.1} parent=11 // pred_check_branch
          %834 = sbr.rel (%p832) target = $region20
        $region19: #{transformer_operator_forward.1} parent=11 // pred_region
          _
        $region20: #{transformer_operator_forward.1} parent=11 // pred_fallthru
          _
        // Predicated region
        $region21: #{transformer_operator_forward.1} parent=11 // pred_check
          %p835 = pneg %p151
        $region22: #{transformer_operator_forward.1} parent=11 // pred_check_branch
          %837 = sbr.rel (%p835) target = $region24
        $region23: #{transformer_operator_forward.1} parent=11 // pred_region
          %s839 = ssub.s32 16, 16
          %840 = vsyncadd [#allocation8], %s839
          %s842 = sshll.u32 [#allocation7], 4
          %s843 = int_to_ptr.vmem [resolvable:$true] %s842
          %845 = dma.hbm_to_vmem [thread:$0]  %s5, 16, %s843, [#allocation8]
        $region24: #{transformer_operator_forward.1} parent=11 // pred_fallthru
          _
        // Predicated region
        $region25: #{transformer_operator_forward.1} parent=11 // pred_check
          %p846 = pneg %p172
        $region26: #{transformer_operator_forward.1} parent=11 // pred_check_branch
          %848 = sbr.rel (%p846) target = $region28
        $region27: #{transformer_operator_forward.1} parent=11 // pred_region
          %s850 = ssub.s32 128, 128
          %851 = vsyncadd [#allocation11], %s850
          %s853 = sshll.u32 [#allocation10], 4
          %s854 = int_to_ptr.vmem [resolvable:$true] %s853
          %856 = dma.hbm_to_vmem [thread:$0]  %s7, 128, %s854, [#allocation11]
        $region28: #{transformer_operator_forward.1} parent=11 // pred_fallthru
          _
        // Predicated region
        $region29: #{transformer_operator_forward.1} parent=11 // pred_check
          %p857 = pneg %p609
        $region30: #{transformer_operator_forward.1} parent=11 // pred_check_branch
          %859 = sbr.rel (%p857) target = $region32
        $region31: #{transformer_operator_forward.1} parent=11 // pred_region
          _
        $region32: #{transformer_operator_forward.1} parent=11 // pred_fallthru
          _
        // Predicated region
        $region33: #{transformer_operator_forward.1} parent=11 // pred_check
          %p860 = pneg %p630
        $region34: #{transformer_operator_forward.1} parent=11 // pred_check_branch
          %862 = sbr.rel (%p860) target = $region36
        $region35: #{transformer_operator_forward.1} parent=11 // pred_region
          %s864 = ssub.s32 16, 16
          %865 = vsyncadd [#allocation11], %s864
          %s867 = sshll.u32 [#allocation21], 4
          %s868 = int_to_ptr.vmem [resolvable:$true] %s867
          %870 = dma.hbm_to_vmem [thread:$0]  %s43, 16, %s868, [#allocation11]
        $region36: #{transformer_operator_forward.1} parent=11 // pred_fallthru
          _
        // Predicated region
        $region37: #{transformer_operator_forward.1} parent=11 // pred_check
          %p871 = pneg %p651
        $region38: #{transformer_operator_forward.1} parent=11 // pred_check_branch
          %873 = sbr.rel (%p871) target = $region40
        $region39: #{transformer_operator_forward.1} parent=11 // pred_region
          %s875 = ssub.s32 256, 256
          %876 = vsyncadd [#allocation23], %s875
          %s877 = sshll.u32 [#allocation22], 4
          %s878 = int_to_ptr.vmem [resolvable:$true] %s877
          %883 = dma.hbm_to_vmem [thread:$0]  %s45, 256, %s878, [#allocation23], 64, 64, 4
        $region40: #{transformer_operator_forward.1} parent=11 // pred_fallthru
          _
        // Predicated region
        $region41: #{transformer_operator_forward.1} parent=11 // pred_check
          %p884 = pneg %p672
        $region42: #{transformer_operator_forward.1} parent=11 // pred_check_branch
          %886 = sbr.rel (%p884) target = $region44
        $region43: #{transformer_operator_forward.1} parent=11 // pred_region
          %s888 = ssub.s32 16, 16
          %889 = vsyncadd [#allocation23], %s888
          %s891 = sshll.u32 [#allocation24], 4
          %s892 = int_to_ptr.vmem [resolvable:$true] %s891
          %894 = dma.hbm_to_vmem [thread:$0]  %s47, 16, %s892, [#allocation23]
        $region44: #{transformer_operator_forward.1} parent=11 // pred_fallthru
          _
        // Predicated region
        $region45: #{transformer_operator_forward.1} parent=11 // pred_check
          %p895 = pneg %p693
        $region46: #{transformer_operator_forward.1} parent=11 // pred_check_branch
          %897 = sbr.rel (%p895) target = $region48
        $region47: #{transformer_operator_forward.1} parent=11 // pred_region
          _
        $region48: #{transformer_operator_forward.1} parent=11 // pred_fallthru
          _
        // Predicated region
        $region49: #{transformer_operator_forward.1} parent=11 // pred_check
          %p898 = pneg %p714
        $region50: #{transformer_operator_forward.1} parent=11 // pred_check_branch
          %900 = sbr.rel (%p898) target = $region52
        $region51: #{transformer_operator_forward.1} parent=11 // pred_region
          %s902 = ssub.s32 16, 16
          %903 = vsyncadd [#allocation26], %s902
          %s905 = sshll.u32 [#allocation25], 4
          %s906 = int_to_ptr.vmem [resolvable:$true] %s905
          %908 = dma.hbm_to_vmem [thread:$0]  %s51, 16, %s906, [#allocation26]
        $region52: #{transformer_operator_forward.1} parent=11 // pred_fallthru
          _
        // Predicated region
        $region53: #{transformer_operator_forward.1} parent=11 // pred_check
          %p909 = pneg %p735
        $region54: #{transformer_operator_forward.1} parent=11 // pred_check_branch
          %911 = sbr.rel (%p909) target = $region56
        $region55: #{transformer_operator_forward.1} parent=11 // pred_region
          _
        $region56: #{transformer_operator_forward.1} parent=11 // pred_fallthru
          _
        // Predicated region
        $region57: #{transformer_operator_forward.1} parent=11 // pred_check
          %p912 = pneg %p756
        $region58: #{transformer_operator_forward.1} parent=11 // pred_check_branch
          %914 = sbr.rel (%p912) target = $region60
        $region59: #{transformer_operator_forward.1} parent=11 // pred_region
          %s916 = ssub.s32 16, 16
          %917 = vsyncadd [#allocation26], %s916
          %s919 = sshll.u32 [#allocation27], 4
          %s920 = int_to_ptr.vmem [resolvable:$true] %s919
          %922 = dma.hbm_to_vmem [thread:$0]  %s55, 16, %s920, [#allocation26]
        $region60: #{transformer_operator_forward.1} parent=11 // pred_fallthru
          _
      $region12: #{transformer_operator_forward.1} parent=5 // pred_fallthru
        _
      %p923 = scmp.lt.s32.totalorder %s71, 2
      // Predicated region
      $region61: #{transformer_operator_forward.1} parent=5 // pred_check
        %p924 = pneg %p923
      $region62: #{transformer_operator_forward.1} parent=5 // pred_check_branch
        %926 = sbr.rel (%p924) target = $region64
      $region63: #{transformer_operator_forward.1} parent=5 // pred_region
        // Predicated region
        $region65: #{transformer_operator_forward.1} parent=63 // pred_check
          %p927 = pneg %p192
        $region66: #{transformer_operator_forward.1} parent=63 // pred_check_branch
          %929 = sbr.rel (%p927) target = $region68
        $region67: #{transformer_operator_forward.1} parent=63 // pred_region
          %p930 = scmp.lt.s32.totalorder %s79, 1
          %s931 = scalar_select %p930, %s79, 1
          %s932 = smul.addr %s931, 4
          %s933 = smul.addr %s932, 4
          %s934 = scalar_lea.vmem %s9, %s933
        $region68: #{transformer_operator_forward.1} parent=63 // pred_fallthru
          _
        // Predicated region
        $region69: #{transformer_operator_forward.1} parent=63 // pred_check
          %p935 = pneg %p218
        $region70: #{transformer_operator_forward.1} parent=63 // pred_check_branch
          %937 = sbr.rel (%p935) target = $region72
        $region71: #{transformer_operator_forward.1} parent=63 // pred_region
          %p938 = scmp.lt.s32.totalorder %s79, 1
          %s939 = scalar_select %p938, %s79, 1
          %s940 = scalar_lea.vmem %s11, %s939
        $region72: #{transformer_operator_forward.1} parent=63 // pred_fallthru
          _
        // Predicated region
        $region73: #{transformer_operator_forward.1} parent=63 // pred_check
          %p941 = pneg %p244
        $region74: #{transformer_operator_forward.1} parent=63 // pred_check_branch
          %943 = sbr.rel (%p941) target = $region76
        $region75: #{transformer_operator_forward.1} parent=63 // pred_region
          %p944 = scmp.lt.s32.totalorder %s79, 1
          %s945 = scalar_select %p944, %s79, 1
          %s946 = smul.addr %s945, 4
          %s947 = smul.addr %s946, 4
          %s948 = scalar_lea.vmem %s13, %s947
        $region76: #{transformer_operator_forward.1} parent=63 // pred_fallthru
          _
        // Predicated region
        $region77: #{transformer_operator_forward.1} parent=63 // pred_check
          %p949 = pneg %p270
        $region78: #{transformer_operator_forward.1} parent=63 // pred_check_branch
          %951 = sbr.rel (%p949) target = $region80
        $region79: #{transformer_operator_forward.1} parent=63 // pred_region
          %s952 = sand.u32 %s71, 1
          %s953 = scalar_lea.sflag [#allocation8], %s952
          %s954 = sand.u32 %s260, 1
          %s955 = scalar_lea.vmem [#allocation12], %s954
          %s957 = ssub.s32 16, 16
          %958 = vsyncadd %s953, %s957
          %s959 = smul.addr %s79, 16
          %s960 = scalar_lea.hbm %s15, %s959
          %s962 = sshll.u32 %s955, 4
          %s963 = int_to_ptr.vmem [resolvable:$true] %s962
          %965 = dma.hbm_to_vmem [thread:$0]  %s960, 16, %s963, %s953
        $region80: #{transformer_operator_forward.1} parent=63 // pred_fallthru
          _
        // Predicated region
        $region81: #{transformer_operator_forward.1} parent=63 // pred_check
          %p966 = pneg %p296
        $region82: #{transformer_operator_forward.1} parent=63 // pred_check_branch
          %968 = sbr.rel (%p966) target = $region84
        $region83: #{transformer_operator_forward.1} parent=63 // pred_region
          %p969 = scmp.lt.s32.totalorder %s79, 1
          %s970 = scalar_select %p969, %s79, 1
          %s971 = smul.addr %s970, 4
          %s972 = smul.addr %s971, 4
          %s973 = scalar_lea.vmem %s17, %s972
        $region84: #{transformer_operator_forward.1} parent=63 // pred_fallthru
          _
        // Predicated region
        $region85: #{transformer_operator_forward.1} parent=63 // pred_check
          %p974 = pneg %p322
        $region86: #{transformer_operator_forward.1} parent=63 // pred_check_branch
          %976 = sbr.rel (%p974) target = $region88
        $region87: #{transformer_operator_forward.1} parent=63 // pred_region
          %s977 = sand.u32 %s71, 1
          %s978 = scalar_lea.sflag [#allocation8], %s977
          %s979 = sand.u32 %s312, 1
          %s980 = scalar_lea.vmem [#allocation13], %s979
          %s982 = ssub.s32 16, 16
          %983 = vsyncadd %s978, %s982
          %s984 = smul.addr %s79, 16
          %s985 = scalar_lea.hbm %s19, %s984
          %s987 = sshll.u32 %s980, 4
          %s988 = int_to_ptr.vmem [resolvable:$true] %s987
          %990 = dma.hbm_to_vmem [thread:$0]  %s985, 16, %s988, %s978
        $region88: #{transformer_operator_forward.1} parent=63 // pred_fallthru
          _
        // Predicated region
        $region89: #{transformer_operator_forward.1} parent=63 // pred_check
          %p991 = pneg %p348
        $region90: #{transformer_operator_forward.1} parent=63 // pred_check_branch
          %993 = sbr.rel (%p991) target = $region92
        $region91: #{transformer_operator_forward.1} parent=63 // pred_region
          %p994 = scmp.lt.s32.totalorder %s79, 1
          %s995 = scalar_select %p994, %s79, 1
          %s996 = smul.addr %s995, 4
          %s997 = smul.addr %s996, 4
          %s998 = scalar_lea.vmem %s21, %s997
        $region92: #{transformer_operator_forward.1} parent=63 // pred_fallthru
          _
        // Predicated region
        $region93: #{transformer_operator_forward.1} parent=63 // pred_check
          %p999 = pneg %p374
        $region94: #{transformer_operator_forward.1} parent=63 // pred_check_branch
          %1001 = sbr.rel (%p999) target = $region96
        $region95: #{transformer_operator_forward.1} parent=63 // pred_region
          %s1002 = sand.u32 %s71, 1
          %s1003 = scalar_lea.sflag [#allocation8], %s1002
          %s1004 = sand.u32 %s364, 1
          %s1005 = scalar_lea.vmem [#allocation14], %s1004
          %s1007 = ssub.s32 16, 16
          %1008 = vsyncadd %s1003, %s1007
          %s1009 = smul.addr %s79, 16
          %s1010 = scalar_lea.hbm %s23, %s1009
          %s1012 = sshll.u32 %s1005, 4
          %s1013 = int_to_ptr.vmem [resolvable:$true] %s1012
          %1015 = dma.hbm_to_vmem [thread:$0]  %s1010, 16, %s1013, %s1003
        $region96: #{transformer_operator_forward.1} parent=63 // pred_fallthru
          _
        // Predicated region
        $region97: #{transformer_operator_forward.1} parent=63 // pred_check
          %p1016 = pneg %p400
        $region98: #{transformer_operator_forward.1} parent=63 // pred_check_branch
          %1018 = sbr.rel (%p1016) target = $region100
        $region99: #{transformer_operator_forward.1} parent=63 // pred_region
          %p1019 = scmp.lt.s32.totalorder %s79, 1
          %s1020 = scalar_select %p1019, %s79, 1
          %s1021 = smul.addr %s1020, 4
          %s1022 = smul.addr %s1021, 4
          %s1023 = scalar_lea.vmem %s25, %s1022
        $region100: #{transformer_operator_forward.1} parent=63 // pred_fallthru
          _
        // Predicated region
        $region101: #{transformer_operator_forward.1} parent=63 // pred_check
          %p1024 = pneg %p426
        $region102: #{transformer_operator_forward.1} parent=63 // pred_check_branch
          %1026 = sbr.rel (%p1024) target = $region104
        $region103: #{transformer_operator_forward.1} parent=63 // pred_region
          %s1027 = sand.u32 %s71, 1
          %s1028 = scalar_lea.sflag [#allocation8], %s1027
          %s1029 = sand.u32 %s416, 1
          %s1030 = scalar_lea.vmem [#allocation15], %s1029
          %s1032 = ssub.s32 16, 16
          %1033 = vsyncadd %s1028, %s1032
          %s1034 = smul.addr %s79, 16
          %s1035 = scalar_lea.hbm %s27, %s1034
          %s1037 = sshll.u32 %s1030, 4
          %s1038 = int_to_ptr.vmem [resolvable:$true] %s1037
          %1040 = dma.hbm_to_vmem [thread:$0]  %s1035, 16, %s1038, %s1028
        $region104: #{transformer_operator_forward.1} parent=63 // pred_fallthru
          _
        // Predicated region
        $region105: #{transformer_operator_forward.1} parent=63 // pred_check
          %p1041 = pneg %p452
        $region106: #{transformer_operator_forward.1} parent=63 // pred_check_branch
          %1043 = sbr.rel (%p1041) target = $region108
        $region107: #{transformer_operator_forward.1} parent=63 // pred_region
          %p1044 = scmp.lt.s32.totalorder %s79, 1
          %s1045 = scalar_select %p1044, %s79, 1
          %s1046 = smul.addr %s1045, 16
          %s1047 = smul.addr %s1046, 4
          %s1048 = scalar_lea.vmem %s29, %s1047
        $region108: #{transformer_operator_forward.1} parent=63 // pred_fallthru
          _
        // Predicated region
        $region109: #{transformer_operator_forward.1} parent=63 // pred_check
          %p1049 = pneg %p478
        $region110: #{transformer_operator_forward.1} parent=63 // pred_check_branch
          %1051 = sbr.rel (%p1049) target = $region112
        $region111: #{transformer_operator_forward.1} parent=63 // pred_region
          %s1052 = sand.u32 %s71, 1
          %s1053 = scalar_lea.sflag [#allocation8], %s1052
          %s1054 = sand.u32 %s468, 1
          %s1055 = scalar_lea.vmem [#allocation16], %s1054
          %s1057 = ssub.s32 16, 16
          %1058 = vsyncadd %s1053, %s1057
          %s1059 = smul.addr %s79, 16
          %s1060 = scalar_lea.hbm %s31, %s1059
          %s1062 = sshll.u32 %s1055, 4
          %s1063 = int_to_ptr.vmem [resolvable:$true] %s1062
          %1065 = dma.hbm_to_vmem [thread:$0]  %s1060, 16, %s1063, %s1053
        $region112: #{transformer_operator_forward.1} parent=63 // pred_fallthru
          _
        // Predicated region
        $region113: #{transformer_operator_forward.1} parent=63 // pred_check
          %p1066 = pneg %p504
        $region114: #{transformer_operator_forward.1} parent=63 // pred_check_branch
          %1068 = sbr.rel (%p1066) target = $region116
        $region115: #{transformer_operator_forward.1} parent=63 // pred_region
          %s1069 = sand.u32 %s71, 1
          %s1070 = scalar_lea.sflag [#allocation8], %s1069
          %s1071 = sand.u32 %s494, 1
          %s1072 = scalar_lea.vmem [#allocation17], %s1071
          %s1074 = ssub.s32 16, 16
          %1075 = vsyncadd %s1070, %s1074
          %s1076 = smul.addr %s79, 16
          %s1077 = scalar_lea.hbm %s33, %s1076
          %s1079 = sshll.u32 %s1072, 4
          %s1080 = int_to_ptr.vmem [resolvable:$true] %s1079
          %1082 = dma.hbm_to_vmem [thread:$0]  %s1077, 16, %s1080, %s1070
        $region116: #{transformer_operator_forward.1} parent=63 // pred_fallthru
          _
        // Predicated region
        $region117: #{transformer_operator_forward.1} parent=63 // pred_check
          %p1083 = pneg %p530
        $region118: #{transformer_operator_forward.1} parent=63 // pred_check_branch
          %1085 = sbr.rel (%p1083) target = $region120
        $region119: #{transformer_operator_forward.1} parent=63 // pred_region
          %s1086 = sand.u32 %s71, 1
          %s1087 = scalar_lea.sflag [#allocation8], %s1086
          %s1088 = sand.u32 %s520, 1
          %s1089 = scalar_lea.vmem [#allocation18], %s1088
          %s1091 = ssub.s32 16, 16
          %1092 = vsyncadd %s1087, %s1091
          %s1093 = smul.addr %s79, 16
          %s1094 = scalar_lea.hbm %s35, %s1093
          %s1096 = sshll.u32 %s1089, 4
          %s1097 = int_to_ptr.vmem [resolvable:$true] %s1096
          %1099 = dma.hbm_to_vmem [thread:$0]  %s1094, 16, %s1097, %s1087
        $region120: #{transformer_operator_forward.1} parent=63 // pred_fallthru
          _
        // Predicated region
        $region121: #{transformer_operator_forward.1} parent=63 // pred_check
          %p1100 = pneg %p556
        $region122: #{transformer_operator_forward.1} parent=63 // pred_check_branch
          %1102 = sbr.rel (%p1100) target = $region124
        $region123: #{transformer_operator_forward.1} parent=63 // pred_region
          %s1103 = sand.u32 %s71, 1
          %s1104 = scalar_lea.sflag [#allocation8], %s1103
          %s1105 = sand.u32 %s546, 1
          %s1106 = scalar_lea.vmem [#allocation19], %s1105
          %s1108 = ssub.s32 16, 16
          %1109 = vsyncadd %s1104, %s1108
          %s1110 = smul.addr %s79, 16
          %s1111 = scalar_lea.hbm %s37, %s1110
          %s1113 = sshll.u32 %s1106, 4
          %s1114 = int_to_ptr.vmem [resolvable:$true] %s1113
          %1116 = dma.hbm_to_vmem [thread:$0]  %s1111, 16, %s1114, %s1104
        $region124: #{transformer_operator_forward.1} parent=63 // pred_fallthru
          _
        // Predicated region
        $region125: #{transformer_operator_forward.1} parent=63 // pred_check
          %p1117 = pneg %p582
        $region126: #{transformer_operator_forward.1} parent=63 // pred_check_branch
          %1119 = sbr.rel (%p1117) target = $region128
        $region127: #{transformer_operator_forward.1} parent=63 // pred_region
          %s1120 = sand.u32 %s71, 1
          %s1121 = scalar_lea.sflag [#allocation8], %s1120
          %s1122 = sand.u32 %s572, 1
          %s1123 = scalar_lea.vmem [#allocation20], %s1122
          %s1125 = ssub.s32 16, 16
          %1126 = vsyncadd %s1121, %s1125
          %s1127 = smul.addr %s79, 16
          %s1128 = scalar_lea.hbm %s39, %s1127
          %s1130 = sshll.u32 %s1123, 4
          %s1131 = int_to_ptr.vmem [resolvable:$true] %s1130
          %1133 = dma.hbm_to_vmem [thread:$0]  %s1128, 16, %s1131, %s1121
        $region128: #{transformer_operator_forward.1} parent=63 // pred_fallthru
          _
      $region64: #{transformer_operator_forward.1} parent=5 // pred_fallthru
        _
      %p1134 = scmp.le.s32.totalorder 1, %s71
      %p1135 = scmp.lt.s32.totalorder %s71, 3
      %p1136 = pnand %p1134, %p1135
      %p1137 = pneg %p1136
      // Predicated region
      $region129: #{transformer_operator_forward.1} parent=5 // pred_check
        _
      $region130: #{transformer_operator_forward.1} parent=5 // pred_check_branch
        %1139 = sbr.rel (%p1136) target = $region132
      $region131: #{transformer_operator_forward.1} parent=5 // pred_region
        %s1140 = ssub.s32 %s71, 1
        // Predicated region
        $region133: #{transformer_operator_forward.1} parent=131 // pred_check
          %p1141 = pneg %p151
        $region134: #{transformer_operator_forward.1} parent=131 // pred_check_branch
          %1143 = sbr.rel (%p1141) target = $region136
        $region135: #{transformer_operator_forward.1} parent=131 // pred_region
          %1144 = dma.done [#allocation8], 16
        $region136: #{transformer_operator_forward.1} parent=131 // pred_fallthru
          _
        // Predicated region
        $region137: #{transformer_operator_forward.1} parent=131 // pred_check
          %p1145 = pneg %p172
        $region138: #{transformer_operator_forward.1} parent=131 // pred_check_branch
          %1147 = sbr.rel (%p1145) target = $region140
        $region139: #{transformer_operator_forward.1} parent=131 // pred_region
          %1148 = dma.done [#allocation11], 128
        $region140: #{transformer_operator_forward.1} parent=131 // pred_fallthru
          _
        %s1149 = sand.u32 %s76, 1
        %s1150 = scalar_lea.sflag [#allocation8], %s1149
        %s1151 = sand.u32 %s263, 1
        %s1152 = scalar_lea.vmem [#allocation12], %s1151
        // Predicated region
        $region141: #{transformer_operator_forward.1} parent=131 // pred_check
          %p1153 = pneg %p276
        $region142: #{transformer_operator_forward.1} parent=131 // pred_check_branch
          %1155 = sbr.rel (%p1153) target = $region144
        $region143: #{transformer_operator_forward.1} parent=131 // pred_region
          %1156 = dma.done %s1150, 16
        $region144: #{transformer_operator_forward.1} parent=131 // pred_fallthru
          _
        %s1157 = sand.u32 %s76, 1
        %s1158 = scalar_lea.sflag [#allocation8], %s1157
        %s1159 = sand.u32 %s315, 1
        %s1160 = scalar_lea.vmem [#allocation13], %s1159
        // Predicated region
        $region145: #{transformer_operator_forward.1} parent=131 // pred_check
          %p1161 = pneg %p328
        $region146: #{transformer_operator_forward.1} parent=131 // pred_check_branch
          %1163 = sbr.rel (%p1161) target = $region148
        $region147: #{transformer_operator_forward.1} parent=131 // pred_region
          %1164 = dma.done %s1158, 16
        $region148: #{transformer_operator_forward.1} parent=131 // pred_fallthru
          _
        %s1165 = sand.u32 %s76, 1
        %s1166 = scalar_lea.sflag [#allocation8], %s1165
        %s1167 = sand.u32 %s367, 1
        %s1168 = scalar_lea.vmem [#allocation14], %s1167
        // Predicated region
        $region149: #{transformer_operator_forward.1} parent=131 // pred_check
          %p1169 = pneg %p380
        $region150: #{transformer_operator_forward.1} parent=131 // pred_check_branch
          %1171 = sbr.rel (%p1169) target = $region152
        $region151: #{transformer_operator_forward.1} parent=131 // pred_region
          %1172 = dma.done %s1166, 16
        $region152: #{transformer_operator_forward.1} parent=131 // pred_fallthru
          _
        %s1173 = sand.u32 %s76, 1
        %s1174 = scalar_lea.sflag [#allocation8], %s1173
        %s1175 = sand.u32 %s419, 1
        %s1176 = scalar_lea.vmem [#allocation15], %s1175
        // Predicated region
        $region153: #{transformer_operator_forward.1} parent=131 // pred_check
          %p1177 = pneg %p432
        $region154: #{transformer_operator_forward.1} parent=131 // pred_check_branch
          %1179 = sbr.rel (%p1177) target = $region156
        $region155: #{transformer_operator_forward.1} parent=131 // pred_region
          %1180 = dma.done %s1174, 16
        $region156: #{transformer_operator_forward.1} parent=131 // pred_fallthru
          _
        %s1181 = sand.u32 %s76, 1
        %s1182 = scalar_lea.sflag [#allocation8], %s1181
        %s1183 = sand.u32 %s471, 1
        %s1184 = scalar_lea.vmem [#allocation16], %s1183
        // Predicated region
        $region157: #{transformer_operator_forward.1} parent=131 // pred_check
          %p1185 = pneg %p484
        $region158: #{transformer_operator_forward.1} parent=131 // pred_check_branch
          %1187 = sbr.rel (%p1185) target = $region160
        $region159: #{transformer_operator_forward.1} parent=131 // pred_region
          %1188 = dma.done %s1182, 16
        $region160: #{transformer_operator_forward.1} parent=131 // pred_fallthru
          _
        %s1189 = sand.u32 %s76, 1
        %s1190 = scalar_lea.sflag [#allocation8], %s1189
        %s1191 = sand.u32 %s497, 1
        %s1192 = scalar_lea.vmem [#allocation17], %s1191
        // Predicated region
        $region161: #{transformer_operator_forward.1} parent=131 // pred_check
          %p1193 = pneg %p510
        $region162: #{transformer_operator_forward.1} parent=131 // pred_check_branch
          %1195 = sbr.rel (%p1193) target = $region164
        $region163: #{transformer_operator_forward.1} parent=131 // pred_region
          %1196 = dma.done %s1190, 16
        $region164: #{transformer_operator_forward.1} parent=131 // pred_fallthru
          _
        %s1197 = sand.u32 %s76, 1
        %s1198 = scalar_lea.sflag [#allocation8], %s1197
        %s1199 = sand.u32 %s523, 1
        %s1200 = scalar_lea.vmem [#allocation18], %s1199
        // Predicated region
        $region165: #{transformer_operator_forward.1} parent=131 // pred_check
          %p1201 = pneg %p536
        $region166: #{transformer_operator_forward.1} parent=131 // pred_check_branch
          %1203 = sbr.rel (%p1201) target = $region168
        $region167: #{transformer_operator_forward.1} parent=131 // pred_region
          %1204 = dma.done %s1198, 16
        $region168: #{transformer_operator_forward.1} parent=131 // pred_fallthru
          _
        %s1205 = sand.u32 %s76, 1
        %s1206 = scalar_lea.sflag [#allocation8], %s1205
        %s1207 = sand.u32 %s549, 1
        %s1208 = scalar_lea.vmem [#allocation19], %s1207
        // Predicated region
        $region169: #{transformer_operator_forward.1} parent=131 // pred_check
          %p1209 = pneg %p562
        $region170: #{transformer_operator_forward.1} parent=131 // pred_check_branch
          %1211 = sbr.rel (%p1209) target = $region172
        $region171: #{transformer_operator_forward.1} parent=131 // pred_region
          %1212 = dma.done %s1206, 16
        $region172: #{transformer_operator_forward.1} parent=131 // pred_fallthru
          _
        %s1213 = sand.u32 %s76, 1
        %s1214 = scalar_lea.sflag [#allocation8], %s1213
        %s1215 = sand.u32 %s575, 1
        %s1216 = scalar_lea.vmem [#allocation20], %s1215
        // Predicated region
        $region173: #{transformer_operator_forward.1} parent=131 // pred_check
          %p1217 = pneg %p588
        $region174: #{transformer_operator_forward.1} parent=131 // pred_check_branch
          %1219 = sbr.rel (%p1217) target = $region176
        $region175: #{transformer_operator_forward.1} parent=131 // pred_region
          %1220 = dma.done %s1214, 16
        $region176: #{transformer_operator_forward.1} parent=131 // pred_fallthru
          _
        // Predicated region
        $region177: #{transformer_operator_forward.1} parent=131 // pred_check
          %p1221 = pneg %p630
        $region178: #{transformer_operator_forward.1} parent=131 // pred_check_branch
          %1223 = sbr.rel (%p1221) target = $region180
        $region179: #{transformer_operator_forward.1} parent=131 // pred_region
          %1224 = dma.done [#allocation11], 16
        $region180: #{transformer_operator_forward.1} parent=131 // pred_fallthru
          _
        // Predicated region
        $region181: #{transformer_operator_forward.1} parent=131 // pred_check
          %p1225 = pneg %p651
        $region182: #{transformer_operator_forward.1} parent=131 // pred_check_branch
          %1227 = sbr.rel (%p1225) target = $region184
        $region183: #{transformer_operator_forward.1} parent=131 // pred_region
          %1228 = dma.done [#allocation23], 256
        $region184: #{transformer_operator_forward.1} parent=131 // pred_fallthru
          _
        // Predicated region
        $region185: #{transformer_operator_forward.1} parent=131 // pred_check
          %p1229 = pneg %p672
        $region186: #{transformer_operator_forward.1} parent=131 // pred_check_branch
          %1231 = sbr.rel (%p1229) target = $region188
        $region187: #{transformer_operator_forward.1} parent=131 // pred_region
          %1232 = dma.done [#allocation23], 16
        $region188: #{transformer_operator_forward.1} parent=131 // pred_fallthru
          _
        // Predicated region
        $region189: #{transformer_operator_forward.1} parent=131 // pred_check
          %p1233 = pneg %p714
        $region190: #{transformer_operator_forward.1} parent=131 // pred_check_branch
          %1235 = sbr.rel (%p1233) target = $region192
        $region191: #{transformer_operator_forward.1} parent=131 // pred_region
          %1236 = dma.done [#allocation26], 16
        $region192: #{transformer_operator_forward.1} parent=131 // pred_fallthru
          _
        // Predicated region
        $region193: #{transformer_operator_forward.1} parent=131 // pred_check
          %p1237 = pneg %p756
        $region194: #{transformer_operator_forward.1} parent=131 // pred_check_branch
          %1239 = sbr.rel (%p1237) target = $region196
        $region195: #{transformer_operator_forward.1} parent=131 // pred_region
          %1240 = dma.done [#allocation26], 16
        $region196: #{transformer_operator_forward.1} parent=131 // pred_fallthru
          _
        %s1241 = smul.u32 2, %s80
        %p1242 = scmp.lt.s32.totalorder %s1241, 1
        %s1243 = scalar_select %p1242, %s1241, 1
        %s1244 = smul.addr %s1243, 8
        %s1245 = scalar_lea.vmem %s1, %s1244
        %p1246 = pneg %p109
        %p1247 = pneg %p106
        %p1248 = pneg %p130
        %p1249 = pneg %p127
        %p1250 = pneg %p151
        %p1251 = pneg %p148
        %p1252 = pneg %p172
        %p1253 = pneg %p169
        %p1254 = scmp.lt.s32.totalorder %s81, 1
        %s1255 = scalar_select %p1254, %s81, 1
        %s1256 = smul.addr %s1255, 4
        %s1257 = smul.addr %s1256, 4
        %s1258 = scalar_lea.vmem %s9, %s1257
        %p1259 = pneg %p198
        %p1260 = pneg %p195
        %p1261 = scmp.lt.s32.totalorder %s81, 1
        %s1262 = scalar_select %p1261, %s81, 1
        %s1263 = scalar_lea.vmem %s11, %s1262
        %p1264 = pneg %p224
        %p1265 = pneg %p221
        %p1266 = scmp.lt.s32.totalorder %s81, 1
        %s1267 = scalar_select %p1266, %s81, 1
        %s1268 = smul.addr %s1267, 4
        %s1269 = smul.addr %s1268, 4
        %s1270 = scalar_lea.vmem %s13, %s1269
        %p1271 = pneg %p250
        %p1272 = pneg %p247
        %s1273 = sand.u32 %s76, 1
        %s1274 = scalar_lea.sflag [#allocation8], %s1273
        %s1275 = sand.u32 %s263, 1
        %s1276 = scalar_lea.vmem [#allocation12], %s1275
        %p1277 = pneg %p276
        %p1278 = pneg %p273
        %p1279 = scmp.lt.s32.totalorder %s81, 1
        %s1280 = scalar_select %p1279, %s81, 1
        %s1281 = smul.addr %s1280, 4
        %s1282 = smul.addr %s1281, 4
        %s1283 = scalar_lea.vmem %s17, %s1282
        %p1284 = pneg %p302
        %p1285 = pneg %p299
        %s1286 = sand.u32 %s76, 1
        %s1287 = scalar_lea.sflag [#allocation8], %s1286
        %s1288 = sand.u32 %s315, 1
        %s1289 = scalar_lea.vmem [#allocation13], %s1288
        %p1290 = pneg %p328
        %p1291 = pneg %p325
        %p1292 = scmp.lt.s32.totalorder %s81, 1
        %s1293 = scalar_select %p1292, %s81, 1
        %s1294 = smul.addr %s1293, 4
        %s1295 = smul.addr %s1294, 4
        %s1296 = scalar_lea.vmem %s21, %s1295
        %p1297 = pneg %p354
        %p1298 = pneg %p351
        %s1299 = sand.u32 %s76, 1
        %s1300 = scalar_lea.sflag [#allocation8], %s1299
        %s1301 = sand.u32 %s367, 1
        %s1302 = scalar_lea.vmem [#allocation14], %s1301
        %p1303 = pneg %p380
        %p1304 = pneg %p377
        %p1305 = scmp.lt.s32.totalorder %s81, 1
        %s1306 = scalar_select %p1305, %s81, 1
        %s1307 = smul.addr %s1306, 4
        %s1308 = smul.addr %s1307, 4
        %s1309 = scalar_lea.vmem %s25, %s1308
        %p1310 = pneg %p406
        %p1311 = pneg %p403
        %s1312 = sand.u32 %s76, 1
        %s1313 = scalar_lea.sflag [#allocation8], %s1312
        %s1314 = sand.u32 %s419, 1
        %s1315 = scalar_lea.vmem [#allocation15], %s1314
        %p1316 = pneg %p432
        %p1317 = pneg %p429
        %p1318 = scmp.lt.s32.totalorder %s81, 1
        %s1319 = scalar_select %p1318, %s81, 1
        %s1320 = smul.addr %s1319, 16
        %s1321 = smul.addr %s1320, 4
        %s1322 = scalar_lea.vmem %s29, %s1321
        %p1323 = pneg %p458
        %p1324 = pneg %p455
        %s1325 = sand.u32 %s76, 1
        %s1326 = scalar_lea.sflag [#allocation8], %s1325
        %s1327 = sand.u32 %s471, 1
        %s1328 = scalar_lea.vmem [#allocation16], %s1327
        %p1329 = pneg %p484
        %p1330 = pneg %p481
        %s1331 = sand.u32 %s76, 1
        %s1332 = scalar_lea.sflag [#allocation8], %s1331
        %s1333 = sand.u32 %s497, 1
        %s1334 = scalar_lea.vmem [#allocation17], %s1333
        %p1335 = pneg %p510
        %p1336 = pneg %p507
        %s1337 = sand.u32 %s76, 1
        %s1338 = scalar_lea.sflag [#allocation8], %s1337
        %s1339 = sand.u32 %s523, 1
        %s1340 = scalar_lea.vmem [#allocation18], %s1339
        %p1341 = pneg %p536
        %p1342 = pneg %p533
        %s1343 = sand.u32 %s76, 1
        %s1344 = scalar_lea.sflag [#allocation8], %s1343
        %s1345 = sand.u32 %s549, 1
        %s1346 = scalar_lea.vmem [#allocation19], %s1345
        %p1347 = pneg %p562
        %p1348 = pneg %p559
        %s1349 = sand.u32 %s76, 1
        %s1350 = scalar_lea.sflag [#allocation8], %s1349
        %s1351 = sand.u32 %s575, 1
        %s1352 = scalar_lea.vmem [#allocation20], %s1351
        %p1353 = pneg %p588
        %p1354 = pneg %p585
        %p1355 = pneg %p609
        %p1356 = pneg %p606
        %p1357 = pneg %p630
        %p1358 = pneg %p627
        %p1359 = pneg %p651
        %p1360 = pneg %p648
        %p1361 = pneg %p672
        %p1362 = pneg %p669
        %p1363 = pneg %p693
        %p1364 = pneg %p690
        %p1365 = pneg %p714
        %p1366 = pneg %p711
        %p1367 = pneg %p735
        %p1368 = pneg %p732
        %p1369 = pneg %p756
        %p1370 = pneg %p753
        %p1371 = pneg %p782
        %p1372 = pneg %p779
        %p1373 = pneg %p808
        %p1374 = pneg %p805
        %s1375 = smul.u32 2, %s80
        %p1376 = scmp.lt.s32.totalorder %s1375, 1
        %s1377 = scalar_select %p1376, %s1375, 1
        %s1378 = smul.addr %s1377, 8
        %s1379 = scalar_lea.vmem %s59, %s1378
        %s1380 = smul.u32 2, %s80
        %p1381 = scmp.lt.s32.totalorder %s1380, 1
        %s1382 = scalar_select %p1381, %s1380, 1
        %s1383 = smul.addr %s1382, 8
        %s1384 = scalar_lea.vmem %s1, %s1383
        %s1385 = smul.u32 2, %s80
        %p1386 = scmp.lt.s32.totalorder %s81, 1
        %s1387 = scalar_select %p1386, %s81, 1
        %s1388 = smul.addr %s1387, 4
        %s1389 = smul.addr %s1388, 4
        %s1390 = scalar_lea.vmem %s9, %s1389
        %p1391 = scmp.lt.s32.totalorder %s81, 1
        %s1392 = scalar_select %p1391, %s81, 1
        %s1393 = scalar_lea.vmem %s11, %s1392
        %p1394 = scmp.lt.s32.totalorder %s81, 1
        %s1395 = scalar_select %p1394, %s81, 1
        %s1396 = smul.addr %s1395, 4
        %s1397 = smul.addr %s1396, 4
        %s1398 = scalar_lea.vmem %s13, %s1397
        %p1399 = scmp.lt.s32.totalorder %s81, 1
        %s1400 = scalar_select %p1399, %s81, 1
        %s1401 = smul.addr %s1400, 4
        %s1402 = smul.addr %s1401, 4
        %s1403 = scalar_lea.vmem %s17, %s1402
        %p1404 = scmp.lt.s32.totalorder %s81, 1
        %s1405 = scalar_select %p1404, %s81, 1
        %s1406 = smul.addr %s1405, 4
        %s1407 = smul.addr %s1406, 4
        %s1408 = scalar_lea.vmem %s21, %s1407
        %p1409 = scmp.lt.s32.totalorder %s81, 1
        %s1410 = scalar_select %p1409, %s81, 1
        %s1411 = smul.addr %s1410, 4
        %s1412 = smul.addr %s1411, 4
        %s1413 = scalar_lea.vmem %s25, %s1412
        %p1414 = scmp.lt.s32.totalorder %s81, 1
        %s1415 = scalar_select %p1414, %s81, 1
        %s1416 = smul.addr %s1415, 16
        %s1417 = smul.addr %s1416, 4
        %s1418 = scalar_lea.vmem %s29, %s1417
        %s1419 = smul.u32 2, %s80
        %s1420 = smul.u32 2, %s80
        %p1421 = scmp.lt.s32.totalorder %s1420, 1
        %s1422 = scalar_select %p1421, %s1420, 1
        %s1423 = smul.addr %s1422, 8
        %s1424 = scalar_lea.vmem %s59, %s1423
        %s1425 = smul.u32 2, %s80
        %p1427 = scmp.eq.s32.totalorder %s81, 0
        // Predicated region
        $region197: #{transformer_operator_forward.1} parent=131 // pred_check
          %p1428 = pneg %p1427
        $region198: #{transformer_operator_forward.1} parent=131 // pred_check_branch
          %1430 = sbr.rel (%p1428) target = $region200
        $region199: #{transformer_operator_forward.1} parent=131 // pred_region
          %v1431 = vld [vmem:[%s1384] sm:$0xff]
          %v1432 = vld [vmem:[%s1384 + $0x8] sm:$0xff]
          %v1433 = vld [vmem:[%s3] sm:$0x1]
          %1435 = vset.pattern.permute.xlu0 0
          %1436 = vperm.xlu0 %1435, %v1431
          %v1437 = vpop.permute.xlu0 %1436
          %1440 = vset.pattern.permute.xlu0 0
          %1441 = vperm.xlu0 %1440, %v1432
          %v1442 = vpop.permute.xlu0 %1441
          %v1445 = vlaneseq
          %v1446 = vshrl.u32 %v1445, 7
          %v1447 = vsub.s32 0, %v1446
          %v1448 = vrot.slane %v1433, %v1447
          %v1450 = vmul.f32 %v1437, %v1448
          %v1451 = vmul.f32 %v1442, %v1448
          %v1452 = vld [vmem:[#allocation7] sm:$0x1]
          %v1454 = vlaneseq
          %v1455 = vshrl.u32 %v1454, 7
          %v1456 = vsub.s32 0, %v1455
          %v1457 = vrot.slane %v1452, %v1456
          %v1459 = vadd.f32 %v1450, %v1457
          %v1460 = vadd.f32 %v1451, %v1457
          %v1461 = vld [vmem:[#allocation10] sm:$0xff]
          %v1462 = vadd.f32 %v1459, %v1461
          %v1463 = vadd.f32 %v1460, %v1461
          %vm1464 = vcmask 261120
          %1465 = vst.msk [vmem:[#allocation2] sm:$0xff] %vm1464, %v1462
          %1466 = vst.msk [vmem:[#allocation2 + $0x8] sm:$0xff] %vm1464, %v1463
        $region200: #{transformer_operator_forward.1} parent=131 // pred_fallthru
          _
        %v1467 = vld [vmem:[#allocation2] sm:$0xff]
        %v1468 = vld [vmem:[#allocation2 + $0x8] sm:$0xff]
        %v1469 = vpack.c.bf16 %v1468, %v1467
        %v1470 = vld [vmem:[%s1390] sm:$0xf]
        %v1471 = vld [vmem:[%s1390 + $0x4] sm:$0xf]
        %v1472 = vld [vmem:[%s1390 + $0x8] sm:$0xf]
        %v1473 = vld [vmem:[%s1390 + $0xc] sm:$0xf]
        %v1474 = vld [vmem:[%s1393] sm:$0x1]
        %v1476 = vlaneseq
        %v1477 = vshrl.u32 %v1476, 7
        %v1478 = vsub.s32 0, %v1477
        %v1479 = vrot.slane %v1474, %v1478
        %v1485 = vunpack.c.l.b16 %v1470
        %v1486 = vunpack.c.l.b16 %v1471
        %v1487 = vunpack.c.l.b16 %v1472
        %v1488 = vunpack.c.l.b16 %v1473
        %v1489 = vpack.c.b16 %v1486, %v1485
        %v1490 = vpack.c.b16 %v1488, %v1487
        %vm1493 = vcmask 261120
        %v1495 = vsel %vm1493, %v1469, 0
        %1497 = vmatprep.subr.bf16.mxu0 0
        %1498 = vmatpush1.bf16.msra.mxu0 %v1489
        %1499 = vmatprep.subr.bf16.mxu0 0
        %1500 = vmatpush1.bf16.msra.mxu0 %v1490
        %1501 = vmatprep.subr.bf16.mxu0 0
        %1502 = vmatpush1.bf16.msra.mxu0 0
        %1503 = vmatprep.subr.bf16.mxu0 0
        %1504 = vmatpush1.bf16.msra.mxu0 0
        %1505 = vmatprep.subr.bf16.mxu0 0
        %1506 = vmatpush1.bf16.msra.mxu0 0
        %1507 = vmatprep.subr.bf16.mxu0 0
        %1508 = vmatpush1.bf16.msra.mxu0 0
        %1509 = vmatprep.subr.bf16.mxu0 0
        %1510 = vmatpush1.bf16.msra.mxu0 0
        %1511 = vmatprep.subr.bf16.mxu0 0
        %1512 = vmatpush1.bf16.msra.mxu0 0
        %1513 = vmatprep.subr.bf16.mxu0 0
        %1514 = vmatpush1.bf16.msra.mxu0 0
        %1515 = vmatprep.subr.bf16.mxu0 0
        %1516 = vmatpush1.bf16.msra.mxu0 0
        %1517 = vmatprep.subr.bf16.mxu0 0
        %1518 = vmatpush1.bf16.msra.mxu0 0
        %1519 = vmatprep.subr.bf16.mxu0 0
        %1520 = vmatpush1.bf16.msra.mxu0 0
        %1521 = vmatprep.subr.bf16.mxu0 0
        %1522 = vmatpush1.bf16.msra.mxu0 0
        %1523 = vmatprep.subr.bf16.mxu0 0
        %1524 = vmatpush1.bf16.msra.mxu0 0
        %1525 = vmatprep.subr.bf16.mxu0 0
        %1526 = vmatpush1.bf16.msra.mxu0 0
        %1527 = vmatprep.subr.bf16.mxu0 0
        %1528 = vmatpush1.bf16.msra.mxu0 0
        %1529 = vmatprep.mubr.bf16.mxu0 0
        %1530 = vmatmul.mubr.bf16.gmra.mrb[0].mxu0 %v1495
        %v1531 = vpop.f32.mrb[0].mxu0
        %v1532 = vadd.f32 %v1479, %v1531
        %v1533 = vpop.f32.mrb[0].mxu0
        %v1534 = vpop.f32.mrb[0].mxu0
        %v1535 = vadd.f32 %v1479, %v1534
        %v1536 = vpop.f32.mrb[0].mxu0
        %1537 = vdwg.mxu0
        %v1538 = vld [vmem:[%s1398] sm:$0xf]
        %v1539 = vld [vmem:[%s1398 + $0x4] sm:$0xf]
        %v1540 = vld [vmem:[%s1398 + $0x8] sm:$0xf]
        %v1541 = vld [vmem:[%s1398 + $0xc] sm:$0xf]
        %v1542 = vld [vmem:[%s1152] sm:$0x1]
        %v1544 = vlaneseq
        %v1545 = vshrl.u32 %v1544, 7
        %v1546 = vsub.s32 0, %v1545
        %v1547 = vrot.slane %v1542, %v1546
        %v1553 = vunpack.c.l.b16 %v1538
        %v1554 = vunpack.c.l.b16 %v1539
        %v1555 = vunpack.c.l.b16 %v1540
        %v1556 = vunpack.c.l.b16 %v1541
        %v1557 = vpack.c.b16 %v1554, %v1553
        %v1558 = vpack.c.b16 %v1556, %v1555
        %1561 = vmatprep.subr.bf16.mxu0 0
        %1562 = vmatpush1.bf16.msra.mxu0 %v1557
        %1563 = vmatprep.subr.bf16.mxu0 0
        %1564 = vmatpush1.bf16.msra.mxu0 %v1558
        %1565 = vmatprep.subr.bf16.mxu0 0
        %1566 = vmatpush1.bf16.msra.mxu0 0
        %1567 = vmatprep.subr.bf16.mxu0 0
        %1568 = vmatpush1.bf16.msra.mxu0 0
        %1569 = vmatprep.subr.bf16.mxu0 0
        %1570 = vmatpush1.bf16.msra.mxu0 0
        %1571 = vmatprep.subr.bf16.mxu0 0
        %1572 = vmatpush1.bf16.msra.mxu0 0
        %1573 = vmatprep.subr.bf16.mxu0 0
        %1574 = vmatpush1.bf16.msra.mxu0 0
        %1575 = vmatprep.subr.bf16.mxu0 0
        %1576 = vmatpush1.bf16.msra.mxu0 0
        %1577 = vmatprep.subr.bf16.mxu0 0
        %1578 = vmatpush1.bf16.msra.mxu0 0
        %1579 = vmatprep.subr.bf16.mxu0 0
        %1580 = vmatpush1.bf16.msra.mxu0 0
        %1581 = vmatprep.subr.bf16.mxu0 0
        %1582 = vmatpush1.bf16.msra.mxu0 0
        %1583 = vmatprep.subr.bf16.mxu0 0
        %1584 = vmatpush1.bf16.msra.mxu0 0
        %1585 = vmatprep.subr.bf16.mxu0 0
        %1586 = vmatpush1.bf16.msra.mxu0 0
        %1587 = vmatprep.subr.bf16.mxu0 0
        %1588 = vmatpush1.bf16.msra.mxu0 0
        %1589 = vmatprep.subr.bf16.mxu0 0
        %1590 = vmatpush1.bf16.msra.mxu0 0
        %1591 = vmatprep.subr.bf16.mxu0 0
        %1592 = vmatpush1.bf16.msra.mxu0 0
        %1593 = vmatprep.mubr.bf16.mxu0 0
        %1594 = vmatmul.mubr.bf16.gmra.mrb[0].mxu0 %v1495
        %v1595 = vpop.f32.mrb[0].mxu0
        %v1596 = vadd.f32 %v1547, %v1595
        %v1597 = vpop.f32.mrb[0].mxu0
        %v1598 = vpop.f32.mrb[0].mxu0
        %v1599 = vadd.f32 %v1547, %v1598
        %v1600 = vpop.f32.mrb[0].mxu0
        %1601 = vdwg.mxu0
        %v1602 = vld [vmem:[%s1403] sm:$0xf]
        %v1603 = vld [vmem:[%s1403 + $0x4] sm:$0xf]
        %v1604 = vld [vmem:[%s1403 + $0x8] sm:$0xf]
        %v1605 = vld [vmem:[%s1403 + $0xc] sm:$0xf]
        %v1606 = vld [vmem:[%s1160] sm:$0x1]
        %v1608 = vlaneseq
        %v1609 = vshrl.u32 %v1608, 7
        %v1610 = vsub.s32 0, %v1609
        %v1611 = vrot.slane %v1606, %v1610
        %v1617 = vunpack.c.l.b16 %v1602
        %v1618 = vunpack.c.l.b16 %v1603
        %v1619 = vunpack.c.l.b16 %v1604
        %v1620 = vunpack.c.l.b16 %v1605
        %v1621 = vpack.c.b16 %v1618, %v1617
        %v1622 = vpack.c.b16 %v1620, %v1619
        %1625 = vmatprep.subr.bf16.mxu0 0
        %1626 = vmatpush1.bf16.msra.mxu0 %v1621
        %1627 = vmatprep.subr.bf16.mxu0 0
        %1628 = vmatpush1.bf16.msra.mxu0 %v1622
        %1629 = vmatprep.subr.bf16.mxu0 0
        %1630 = vmatpush1.bf16.msra.mxu0 0
        %1631 = vmatprep.subr.bf16.mxu0 0
        %1632 = vmatpush1.bf16.msra.mxu0 0
        %1633 = vmatprep.subr.bf16.mxu0 0
        %1634 = vmatpush1.bf16.msra.mxu0 0
        %1635 = vmatprep.subr.bf16.mxu0 0
        %1636 = vmatpush1.bf16.msra.mxu0 0
        %1637 = vmatprep.subr.bf16.mxu0 0
        %1638 = vmatpush1.bf16.msra.mxu0 0
        %1639 = vmatprep.subr.bf16.mxu0 0
        %1640 = vmatpush1.bf16.msra.mxu0 0
        %1641 = vmatprep.subr.bf16.mxu0 0
        %1642 = vmatpush1.bf16.msra.mxu0 0
        %1643 = vmatprep.subr.bf16.mxu0 0
        %1644 = vmatpush1.bf16.msra.mxu0 0
        %1645 = vmatprep.subr.bf16.mxu0 0
        %1646 = vmatpush1.bf16.msra.mxu0 0
        %1647 = vmatprep.subr.bf16.mxu0 0
        %1648 = vmatpush1.bf16.msra.mxu0 0
        %1649 = vmatprep.subr.bf16.mxu0 0
        %1650 = vmatpush1.bf16.msra.mxu0 0
        %1651 = vmatprep.subr.bf16.mxu0 0
        %1652 = vmatpush1.bf16.msra.mxu0 0
        %1653 = vmatprep.subr.bf16.mxu0 0
        %1654 = vmatpush1.bf16.msra.mxu0 0
        %1655 = vmatprep.subr.bf16.mxu0 0
        %1656 = vmatpush1.bf16.msra.mxu0 0
        %1657 = vmatprep.mubr.bf16.mxu0 0
        %1658 = vmatmul.mubr.bf16.gmra.mrb[0].mxu0 %v1495
        %v1659 = vpop.f32.mrb[0].mxu0
        %v1660 = vadd.f32 %v1611, %v1659
        %v1661 = vpop.f32.mrb[0].mxu0
        %v1662 = vpop.f32.mrb[0].mxu0
        %v1663 = vadd.f32 %v1611, %v1662
        %v1664 = vpop.f32.mrb[0].mxu0
        %1665 = vdwg.mxu0
        %1666 = vst.msk [vmem:[#allocation3] sm:$0xff] %vm1493, %v1532
        %1667 = vst.msk [vmem:[#allocation3 + $0x8] sm:$0xff] %vm1493, %v1535
        %1668 = vst.msk [vmem:[#allocation4] sm:$0xff] %vm1493, %v1596
        %1669 = vst.msk [vmem:[#allocation4 + $0x8] sm:$0xff] %vm1493, %v1599
        %1670 = vst.msk [vmem:[#allocation5] sm:$0xff] %vm1493, %v1660
        %1671 = vst.msk [vmem:[#allocation5 + $0x8] sm:$0xff] %vm1493, %v1663
        %v1672 = vld [vmem:[#allocation3] sm:$0xff]
        %v1673 = vld [vmem:[#allocation3 + $0x8] sm:$0xff]
        %v1674 = vpack.c.bf16 %v1672, %v1672
        %v1675 = vpack.c.bf16 %v1673, %v1673
        %v1676 = vld [vmem:[#allocation4] sm:$0xff]
        %v1677 = vld [vmem:[#allocation4 + $0x8] sm:$0xff]
        %v1678 = vpack.c.bf16 %v1676, %v1676
        %v1679 = vpack.c.bf16 %v1677, %v1677
        %v1680 = vld [vmem:[#allocation5] sm:$0xff]
        %v1681 = vld [vmem:[#allocation5 + $0x8] sm:$0xff]
        %v1682 = vpack.c.bf16 %v1680, %v1680
        %v1683 = vpack.c.bf16 %v1681, %v1681
        %vm1684 = vcmask 64512
        %v1686 = vsel %vm1684, %v1674, 0
        %v1689 = vsel %vm1684, %v1678, 0
        %1691 = vmatprep.subr.bf16.mxu0 0
        %1692 = vmatpush1.bf16.xpose.msra.mxu0 %v1689
        %1693 = vmatprep.subr.bf16.mxu0 0
        %1694 = vmatpush1.bf16.xpose.msra.mxu0 0
        %1695 = vmatprep.subr.bf16.mxu0 0
        %1696 = vmatpush1.bf16.xpose.msra.mxu0 0
        %1697 = vmatprep.subr.bf16.mxu0 0
        %1698 = vmatpush1.bf16.xpose.msra.mxu0 0
        %1699 = vmatprep.subr.bf16.mxu0 0
        %1700 = vmatpush1.bf16.xpose.msra.mxu0 0
        %1701 = vmatprep.subr.bf16.mxu0 0
        %1702 = vmatpush1.bf16.xpose.msra.mxu0 0
        %1703 = vmatprep.subr.bf16.mxu0 0
        %1704 = vmatpush1.bf16.xpose.msra.mxu0 0
        %1705 = vmatprep.subr.bf16.mxu0 0
        %1706 = vmatpush1.bf16.xpose.msra.mxu0 0
        %1707 = vmatprep.subr.bf16.mxu0 0
        %1708 = vmatpush1.bf16.xpose.msra.mxu0 0
        %1709 = vmatprep.subr.bf16.mxu0 0
        %1710 = vmatpush1.bf16.xpose.msra.mxu0 0
        %1711 = vmatprep.subr.bf16.mxu0 0
        %1712 = vmatpush1.bf16.xpose.msra.mxu0 0
        %1713 = vmatprep.subr.bf16.mxu0 0
        %1714 = vmatpush1.bf16.xpose.msra.mxu0 0
        %1715 = vmatprep.subr.bf16.mxu0 0
        %1716 = vmatpush1.bf16.xpose.msra.mxu0 0
        %1717 = vmatprep.subr.bf16.mxu0 0
        %1718 = vmatpush1.bf16.xpose.msra.mxu0 0
        %1719 = vmatprep.subr.bf16.mxu0 0
        %1720 = vmatpush1.bf16.xpose.msra.mxu0 0
        %1721 = vmatprep.subr.bf16.mxu0 0
        %1722 = vmatpush1.bf16.xpose.msra.mxu0 0
        %1723 = vmatprep.mubr.bf16.mxu0 0
        %1724 = vmatmul.mubr.bf16.gmra.mrb[0].mxu0 %v1686
        %v1725 = vpop.f32.mrb[0].mxu0
        %v1726 = vadd.f32 0.0, %v1725
        %v1727 = vpop.f32.mrb[0].mxu0
        %v1728 = vpop.f32.mrb[0].mxu0
        %v1729 = vpop.f32.mrb[0].mxu0
        %1730 = vdwg.mxu0
        %v1732 = vsel %vm1684, %v1675, 0
        %v1735 = vsel %vm1684, %v1679, 0
        %1737 = vmatprep.subr.bf16.mxu0 0
        %1738 = vmatpush1.bf16.xpose.msra.mxu0 %v1735
        %1739 = vmatprep.subr.bf16.mxu0 0
        %1740 = vmatpush1.bf16.xpose.msra.mxu0 0
        %1741 = vmatprep.subr.bf16.mxu0 0
        %1742 = vmatpush1.bf16.xpose.msra.mxu0 0
        %1743 = vmatprep.subr.bf16.mxu0 0
        %1744 = vmatpush1.bf16.xpose.msra.mxu0 0
        %1745 = vmatprep.subr.bf16.mxu0 0
        %1746 = vmatpush1.bf16.xpose.msra.mxu0 0
        %1747 = vmatprep.subr.bf16.mxu0 0
        %1748 = vmatpush1.bf16.xpose.msra.mxu0 0
        %1749 = vmatprep.subr.bf16.mxu0 0
        %1750 = vmatpush1.bf16.xpose.msra.mxu0 0
        %1751 = vmatprep.subr.bf16.mxu0 0
        %1752 = vmatpush1.bf16.xpose.msra.mxu0 0
        %1753 = vmatprep.subr.bf16.mxu0 0
        %1754 = vmatpush1.bf16.xpose.msra.mxu0 0
        %1755 = vmatprep.subr.bf16.mxu0 0
        %1756 = vmatpush1.bf16.xpose.msra.mxu0 0
        %1757 = vmatprep.subr.bf16.mxu0 0
        %1758 = vmatpush1.bf16.xpose.msra.mxu0 0
        %1759 = vmatprep.subr.bf16.mxu0 0
        %1760 = vmatpush1.bf16.xpose.msra.mxu0 0
        %1761 = vmatprep.subr.bf16.mxu0 0
        %1762 = vmatpush1.bf16.xpose.msra.mxu0 0
        %1763 = vmatprep.subr.bf16.mxu0 0
        %1764 = vmatpush1.bf16.xpose.msra.mxu0 0
        %1765 = vmatprep.subr.bf16.mxu0 0
        %1766 = vmatpush1.bf16.xpose.msra.mxu0 0
        %1767 = vmatprep.subr.bf16.mxu0 0
        %1768 = vmatpush1.bf16.xpose.msra.mxu0 0
        %1769 = vmatprep.mubr.bf16.mxu0 0
        %1770 = vmatmul.mubr.bf16.gmra.mrb[0].mxu0 %v1732
        %v1771 = vpop.f32.mrb[0].mxu0
        %v1772 = vadd.f32 0.0, %v1771
        %v1773 = vpop.f32.mrb[0].mxu0
        %v1774 = vpop.f32.mrb[0].mxu0
        %v1775 = vpop.f32.mrb[0].mxu0
        %1776 = vdwg.mxu0
        %v1777 = vsel %vm1684, %v1726, -inf
        %1778 = vmax.xlane.f32.xlu0 %v1777
        %v1779 = vpop.xlane.xlu0 %1778
        %v1780 = vsel %vm1684, %v1772, -inf
        %1781 = vmax.xlane.f32.xlu0 %v1780
        %v1782 = vpop.xlane.xlu0 %1781
        %v1783 = vsub.f32 %v1726, %v1779
        %v1784 = vsub.f32 %v1772, %v1782
        %v1785 = vmul.f32 %v1783, 1.442695
        %v1786 = vpow.pop %v1785
        %v1787 = vmul.f32 %v1784, 1.442695
        %v1788 = vpow.pop %v1787
        %v1789 = vsel %vm1684, %v1786, 0.0
        %1790 = vadd.xlane.f32.xlu0 %v1789
        %v1791 = vpop.xlane.xlu0 %1790
        %v1792 = vsel %vm1684, %v1788, 0.0
        %1793 = vadd.xlane.f32.xlu0 %v1792
        %v1794 = vpop.xlane.xlu0 %1793
        %v1795 = vrcp.pop %v1791
        %v1796 = vrcp.pop %v1794
        %v1797 = vmul.f32 %v1786, %v1795
        %v1798 = vmul.f32 %v1788, %v1796
        %v1799 = vpack.c.bf16 %v1797, %v1797
        %v1800 = vpack.c.bf16 %v1798, %v1798
        %v1802 = vsel %vm1684, %v1799, 0
        %vm1804 = vcmask 1043456
        %v1806 = vsel %vm1804, %v1682, 0
        %1808 = vmatprep.subr.bf16.mxu0 0
        %1809 = vmatpush1.bf16.msra.mxu0 %v1806
        %1810 = vmatprep.subr.bf16.mxu0 0
        %1811 = vmatpush1.bf16.msra.mxu0 0
        %1812 = vmatprep.subr.bf16.mxu0 0
        %1813 = vmatpush1.bf16.msra.mxu0 0
        %1814 = vmatprep.subr.bf16.mxu0 0
        %1815 = vmatpush1.bf16.msra.mxu0 0
        %1816 = vmatprep.subr.bf16.mxu0 0
        %1817 = vmatpush1.bf16.msra.mxu0 0
        %1818 = vmatprep.subr.bf16.mxu0 0
        %1819 = vmatpush1.bf16.msra.mxu0 0
        %1820 = vmatprep.subr.bf16.mxu0 0
        %1821 = vmatpush1.bf16.msra.mxu0 0
        %1822 = vmatprep.subr.bf16.mxu0 0
        %1823 = vmatpush1.bf16.msra.mxu0 0
        %1824 = vmatprep.subr.bf16.mxu0 0
        %1825 = vmatpush1.bf16.msra.mxu0 0
        %1826 = vmatprep.subr.bf16.mxu0 0
        %1827 = vmatpush1.bf16.msra.mxu0 0
        %1828 = vmatprep.subr.bf16.mxu0 0
        %1829 = vmatpush1.bf16.msra.mxu0 0
        %1830 = vmatprep.subr.bf16.mxu0 0
        %1831 = vmatpush1.bf16.msra.mxu0 0
        %1832 = vmatprep.subr.bf16.mxu0 0
        %1833 = vmatpush1.bf16.msra.mxu0 0
        %1834 = vmatprep.subr.bf16.mxu0 0
        %1835 = vmatpush1.bf16.msra.mxu0 0
        %1836 = vmatprep.subr.bf16.mxu0 0
        %1837 = vmatpush1.bf16.msra.mxu0 0
        %1838 = vmatprep.subr.bf16.mxu0 0
        %1839 = vmatpush1.bf16.msra.mxu0 0
        %1840 = vmatprep.mubr.bf16.mxu0 0
        %1841 = vmatmul.mubr.bf16.gmra.mrb[0].mxu0 %v1802
        %v1842 = vpop.f32.mrb[0].mxu0
        %v1843 = vadd.f32 0.0, %v1842
        %v1844 = vpop.f32.mrb[0].mxu0
        %v1845 = vpop.f32.mrb[0].mxu0
        %v1846 = vpop.f32.mrb[0].mxu0
        %1847 = vdwg.mxu0
        %v1849 = vsel %vm1684, %v1800, 0
        %v1852 = vsel %vm1804, %v1683, 0
        %1854 = vmatprep.subr.bf16.mxu0 0
        %1855 = vmatpush1.bf16.msra.mxu0 %v1852
        %1856 = vmatprep.subr.bf16.mxu0 0
        %1857 = vmatpush1.bf16.msra.mxu0 0
        %1858 = vmatprep.subr.bf16.mxu0 0
        %1859 = vmatpush1.bf16.msra.mxu0 0
        %1860 = vmatprep.subr.bf16.mxu0 0
        %1861 = vmatpush1.bf16.msra.mxu0 0
        %1862 = vmatprep.subr.bf16.mxu0 0
        %1863 = vmatpush1.bf16.msra.mxu0 0
        %1864 = vmatprep.subr.bf16.mxu0 0
        %1865 = vmatpush1.bf16.msra.mxu0 0
        %1866 = vmatprep.subr.bf16.mxu0 0
        %1867 = vmatpush1.bf16.msra.mxu0 0
        %1868 = vmatprep.subr.bf16.mxu0 0
        %1869 = vmatpush1.bf16.msra.mxu0 0
        %1870 = vmatprep.subr.bf16.mxu0 0
        %1871 = vmatpush1.bf16.msra.mxu0 0
        %1872 = vmatprep.subr.bf16.mxu0 0
        %1873 = vmatpush1.bf16.msra.mxu0 0
        %1874 = vmatprep.subr.bf16.mxu0 0
        %1875 = vmatpush1.bf16.msra.mxu0 0
        %1876 = vmatprep.subr.bf16.mxu0 0
        %1877 = vmatpush1.bf16.msra.mxu0 0
        %1878 = vmatprep.subr.bf16.mxu0 0
        %1879 = vmatpush1.bf16.msra.mxu0 0
        %1880 = vmatprep.subr.bf16.mxu0 0
        %1881 = vmatpush1.bf16.msra.mxu0 0
        %1882 = vmatprep.subr.bf16.mxu0 0
        %1883 = vmatpush1.bf16.msra.mxu0 0
        %1884 = vmatprep.subr.bf16.mxu0 0
        %1885 = vmatpush1.bf16.msra.mxu0 0
        %1886 = vmatprep.mubr.bf16.mxu0 0
        %1887 = vmatmul.mubr.bf16.gmra.mrb[0].mxu0 %v1849
        %v1888 = vpop.f32.mrb[0].mxu0
        %v1889 = vadd.f32 0.0, %v1888
        %v1890 = vpop.f32.mrb[0].mxu0
        %v1891 = vpop.f32.mrb[0].mxu0
        %v1892 = vpop.f32.mrb[0].mxu0
        %1893 = vdwg.mxu0
        %1894 = vst.msk [vmem:[#allocation6] sm:$0xff] %vm1684, %v1843
        %1895 = vst.msk [vmem:[#allocation6 + $0x8] sm:$0xff] %vm1684, %v1889
        %v1896 = vld [vmem:[#allocation3] sm:$0xff]
        %v1897 = vld [vmem:[#allocation3 + $0x8] sm:$0xff]
        %v1898 = vpack.c.bf16 %v1896, %v1896
        %v1899 = vpack.c.bf16 %v1897, %v1897
        %v1900 = vld [vmem:[#allocation4] sm:$0xff]
        %v1901 = vld [vmem:[#allocation4 + $0x8] sm:$0xff]
        %v1902 = vpack.c.bf16 %v1900, %v1900
        %v1903 = vpack.c.bf16 %v1901, %v1901
        %v1904 = vld [vmem:[#allocation5] sm:$0xff]
        %v1905 = vld [vmem:[#allocation5 + $0x8] sm:$0xff]
        %v1906 = vpack.c.bf16 %v1904, %v1904
        %v1907 = vpack.c.bf16 %v1905, %v1905
        %1909 = vrot.lane.b32.xlu0 %v1898, 120
        %v1910 = vpop.permute.xlu0 %1909
        %1912 = vrot.lane.b32.xlu0 %v1902, 120
        %v1913 = vpop.permute.xlu0 %1912
        %v1915 = vsel %vm1684, %v1910, 0
        %v1918 = vsel %vm1684, %v1913, 0
        %1920 = vmatprep.subr.bf16.mxu0 0
        %1921 = vmatpush1.bf16.xpose.msra.mxu0 %v1918
        %1922 = vmatprep.subr.bf16.mxu0 0
        %1923 = vmatpush1.bf16.xpose.msra.mxu0 0
        %1924 = vmatprep.subr.bf16.mxu0 0
        %1925 = vmatpush1.bf16.xpose.msra.mxu0 0
        %1926 = vmatprep.subr.bf16.mxu0 0
        %1927 = vmatpush1.bf16.xpose.msra.mxu0 0
        %1928 = vmatprep.subr.bf16.mxu0 0
        %1929 = vmatpush1.bf16.xpose.msra.mxu0 0
        %1930 = vmatprep.subr.bf16.mxu0 0
        %1931 = vmatpush1.bf16.xpose.msra.mxu0 0
        %1932 = vmatprep.subr.bf16.mxu0 0
        %1933 = vmatpush1.bf16.xpose.msra.mxu0 0
        %1934 = vmatprep.subr.bf16.mxu0 0
        %1935 = vmatpush1.bf16.xpose.msra.mxu0 0
        %1936 = vmatprep.subr.bf16.mxu0 0
        %1937 = vmatpush1.bf16.xpose.msra.mxu0 0
        %1938 = vmatprep.subr.bf16.mxu0 0
        %1939 = vmatpush1.bf16.xpose.msra.mxu0 0
        %1940 = vmatprep.subr.bf16.mxu0 0
        %1941 = vmatpush1.bf16.xpose.msra.mxu0 0
        %1942 = vmatprep.subr.bf16.mxu0 0
        %1943 = vmatpush1.bf16.xpose.msra.mxu0 0
        %1944 = vmatprep.subr.bf16.mxu0 0
        %1945 = vmatpush1.bf16.xpose.msra.mxu0 0
        %1946 = vmatprep.subr.bf16.mxu0 0
        %1947 = vmatpush1.bf16.xpose.msra.mxu0 0
        %1948 = vmatprep.subr.bf16.mxu0 0
        %1949 = vmatpush1.bf16.xpose.msra.mxu0 0
        %1950 = vmatprep.subr.bf16.mxu0 0
        %1951 = vmatpush1.bf16.xpose.msra.mxu0 0
        %1952 = vmatprep.mubr.bf16.mxu0 0
        %1953 = vmatmul.mubr.bf16.gmra.mrb[0].mxu0 %v1915
        %v1954 = vpop.f32.mrb[0].mxu0
        %v1955 = vadd.f32 0.0, %v1954
        %v1956 = vpop.f32.mrb[0].mxu0
        %v1957 = vpop.f32.mrb[0].mxu0
        %v1958 = vpop.f32.mrb[0].mxu0
        %1959 = vdwg.mxu0
        %1961 = vrot.lane.b32.xlu0 %v1899, 120
        %v1962 = vpop.permute.xlu0 %1961
        %1964 = vrot.lane.b32.xlu0 %v1903, 120
        %v1965 = vpop.permute.xlu0 %1964
        %v1967 = vsel %vm1684, %v1962, 0
        %v1970 = vsel %vm1684, %v1965, 0
        %1972 = vmatprep.subr.bf16.mxu0 0
        %1973 = vmatpush1.bf16.xpose.msra.mxu0 %v1970
        %1974 = vmatprep.subr.bf16.mxu0 0
        %1975 = vmatpush1.bf16.xpose.msra.mxu0 0
        %1976 = vmatprep.subr.bf16.mxu0 0
        %1977 = vmatpush1.bf16.xpose.msra.mxu0 0
        %1978 = vmatprep.subr.bf16.mxu0 0
        %1979 = vmatpush1.bf16.xpose.msra.mxu0 0
        %1980 = vmatprep.subr.bf16.mxu0 0
        %1981 = vmatpush1.bf16.xpose.msra.mxu0 0
        %1982 = vmatprep.subr.bf16.mxu0 0
        %1983 = vmatpush1.bf16.xpose.msra.mxu0 0
        %1984 = vmatprep.subr.bf16.mxu0 0
        %1985 = vmatpush1.bf16.xpose.msra.mxu0 0
        %1986 = vmatprep.subr.bf16.mxu0 0
        %1987 = vmatpush1.bf16.xpose.msra.mxu0 0
        %1988 = vmatprep.subr.bf16.mxu0 0
        %1989 = vmatpush1.bf16.xpose.msra.mxu0 0
        %1990 = vmatprep.subr.bf16.mxu0 0
        %1991 = vmatpush1.bf16.xpose.msra.mxu0 0
        %1992 = vmatprep.subr.bf16.mxu0 0
        %1993 = vmatpush1.bf16.xpose.msra.mxu0 0
        %1994 = vmatprep.subr.bf16.mxu0 0
        %1995 = vmatpush1.bf16.xpose.msra.mxu0 0
        %1996 = vmatprep.subr.bf16.mxu0 0
        %1997 = vmatpush1.bf16.xpose.msra.mxu0 0
        %1998 = vmatprep.subr.bf16.mxu0 0
        %1999 = vmatpush1.bf16.xpose.msra.mxu0 0
        %2000 = vmatprep.subr.bf16.mxu0 0
        %2001 = vmatpush1.bf16.xpose.msra.mxu0 0
        %2002 = vmatprep.subr.bf16.mxu0 0
        %2003 = vmatpush1.bf16.xpose.msra.mxu0 0
        %2004 = vmatprep.mubr.bf16.mxu0 0
        %2005 = vmatmul.mubr.bf16.gmra.mrb[0].mxu0 %v1967
        %v2006 = vpop.f32.mrb[0].mxu0
        %v2007 = vadd.f32 0.0, %v2006
        %v2008 = vpop.f32.mrb[0].mxu0
        %v2009 = vpop.f32.mrb[0].mxu0
        %v2010 = vpop.f32.mrb[0].mxu0
        %2011 = vdwg.mxu0
        %v2012 = vsel %vm1684, %v1955, -inf
        %2013 = vmax.xlane.f32.xlu0 %v2012
        %v2014 = vpop.xlane.xlu0 %2013
        %v2015 = vsel %vm1684, %v2007, -inf
        %2016 = vmax.xlane.f32.xlu0 %v2015
        %v2017 = vpop.xlane.xlu0 %2016
        %v2018 = vsub.f32 %v1955, %v2014
        %v2019 = vsub.f32 %v2007, %v2017
        %v2020 = vmul.f32 %v2018, 1.442695
        %v2021 = vpow.pop %v2020
        %v2022 = vmul.f32 %v2019, 1.442695
        %v2023 = vpow.pop %v2022
        %v2024 = vsel %vm1684, %v2021, 0.0
        %2025 = vadd.xlane.f32.xlu0 %v2024
        %v2026 = vpop.xlane.xlu0 %2025
        %v2027 = vsel %vm1684, %v2023, 0.0
        %2028 = vadd.xlane.f32.xlu0 %v2027
        %v2029 = vpop.xlane.xlu0 %2028
        %v2030 = vrcp.pop %v2026
        %v2031 = vrcp.pop %v2029
        %v2032 = vmul.f32 %v2021, %v2030
        %v2033 = vmul.f32 %v2023, %v2031
        %v2034 = vpack.c.bf16 %v2032, %v2032
        %v2035 = vpack.c.bf16 %v2033, %v2033
        %2037 = vrot.lane.b32.xlu0 %v1906, 120
        %v2038 = vpop.permute.xlu0 %2037
        %v2040 = vsel %vm1684, %v2034, 0
        %v2043 = vsel %vm1804, %v2038, 0
        %2045 = vmatprep.subr.bf16.mxu0 0
        %2046 = vmatpush1.bf16.msra.mxu0 %v2043
        %2047 = vmatprep.subr.bf16.mxu0 0
        %2048 = vmatpush1.bf16.msra.mxu0 0
        %2049 = vmatprep.subr.bf16.mxu0 0
        %2050 = vmatpush1.bf16.msra.mxu0 0
        %2051 = vmatprep.subr.bf16.mxu0 0
        %2052 = vmatpush1.bf16.msra.mxu0 0
        %2053 = vmatprep.subr.bf16.mxu0 0
        %2054 = vmatpush1.bf16.msra.mxu0 0
        %2055 = vmatprep.subr.bf16.mxu0 0
        %2056 = vmatpush1.bf16.msra.mxu0 0
        %2057 = vmatprep.subr.bf16.mxu0 0
        %2058 = vmatpush1.bf16.msra.mxu0 0
        %2059 = vmatprep.subr.bf16.mxu0 0
        %2060 = vmatpush1.bf16.msra.mxu0 0
        %2061 = vmatprep.subr.bf16.mxu0 0
        %2062 = vmatpush1.bf16.msra.mxu0 0
        %2063 = vmatprep.subr.bf16.mxu0 0
        %2064 = vmatpush1.bf16.msra.mxu0 0
        %2065 = vmatprep.subr.bf16.mxu0 0
        %2066 = vmatpush1.bf16.msra.mxu0 0
        %2067 = vmatprep.subr.bf16.mxu0 0
        %2068 = vmatpush1.bf16.msra.mxu0 0
        %2069 = vmatprep.subr.bf16.mxu0 0
        %2070 = vmatpush1.bf16.msra.mxu0 0
        %2071 = vmatprep.subr.bf16.mxu0 0
        %2072 = vmatpush1.bf16.msra.mxu0 0
        %2073 = vmatprep.subr.bf16.mxu0 0
        %2074 = vmatpush1.bf16.msra.mxu0 0
        %2075 = vmatprep.subr.bf16.mxu0 0
        %2076 = vmatpush1.bf16.msra.mxu0 0
        %2077 = vmatprep.mubr.bf16.mxu0 0
        %2078 = vmatmul.mubr.bf16.gmra.mrb[0].mxu0 %v2040
        %v2079 = vpop.f32.mrb[0].mxu0
        %v2080 = vadd.f32 0.0, %v2079
        %v2081 = vpop.f32.mrb[0].mxu0
        %v2082 = vpop.f32.mrb[0].mxu0
        %v2083 = vpop.f32.mrb[0].mxu0
        %2084 = vdwg.mxu0
        %2086 = vrot.lane.b32.xlu0 %v1907, 120
        %v2087 = vpop.permute.xlu0 %2086
        %v2089 = vsel %vm1684, %v2035, 0
        %v2092 = vsel %vm1804, %v2087, 0
        %2094 = vmatprep.subr.bf16.mxu0 0
        %2095 = vmatpush1.bf16.msra.mxu0 %v2092
        %2096 = vmatprep.subr.bf16.mxu0 0
        %2097 = vmatpush1.bf16.msra.mxu0 0
        %2098 = vmatprep.subr.bf16.mxu0 0
        %2099 = vmatpush1.bf16.msra.mxu0 0
        %2100 = vmatprep.subr.bf16.mxu0 0
        %2101 = vmatpush1.bf16.msra.mxu0 0
        %2102 = vmatprep.subr.bf16.mxu0 0
        %2103 = vmatpush1.bf16.msra.mxu0 0
        %2104 = vmatprep.subr.bf16.mxu0 0
        %2105 = vmatpush1.bf16.msra.mxu0 0
        %2106 = vmatprep.subr.bf16.mxu0 0
        %2107 = vmatpush1.bf16.msra.mxu0 0
        %2108 = vmatprep.subr.bf16.mxu0 0
        %2109 = vmatpush1.bf16.msra.mxu0 0
        %2110 = vmatprep.subr.bf16.mxu0 0
        %2111 = vmatpush1.bf16.msra.mxu0 0
        %2112 = vmatprep.subr.bf16.mxu0 0
        %2113 = vmatpush1.bf16.msra.mxu0 0
        %2114 = vmatprep.subr.bf16.mxu0 0
        %2115 = vmatpush1.bf16.msra.mxu0 0
        %2116 = vmatprep.subr.bf16.mxu0 0
        %2117 = vmatpush1.bf16.msra.mxu0 0
        %2118 = vmatprep.subr.bf16.mxu0 0
        %2119 = vmatpush1.bf16.msra.mxu0 0
        %2120 = vmatprep.subr.bf16.mxu0 0
        %2121 = vmatpush1.bf16.msra.mxu0 0
        %2122 = vmatprep.subr.bf16.mxu0 0
        %2123 = vmatpush1.bf16.msra.mxu0 0
        %2124 = vmatprep.subr.bf16.mxu0 0
        %2125 = vmatpush1.bf16.msra.mxu0 0
        %2126 = vmatprep.mubr.bf16.mxu0 0
        %2127 = vmatmul.mubr.bf16.gmra.mrb[0].mxu0 %v2089
        %v2128 = vpop.f32.mrb[0].mxu0
        %v2129 = vadd.f32 0.0, %v2128
        %v2130 = vpop.f32.mrb[0].mxu0
        %v2131 = vpop.f32.mrb[0].mxu0
        %v2132 = vpop.f32.mrb[0].mxu0
        %2133 = vdwg.mxu0
        %2136 = vrot.lane.b32.xlu0 %v2080, 8
        %v2137 = vpop.permute.xlu0 %2136
        %2138 = vrot.lane.b32.xlu0 %v2129, 8
        %v2139 = vpop.permute.xlu0 %2138
        %vm2142 = vcmask 130112
        %2143 = vst.msk [vmem:[#allocation6] sm:$0xff] %vm2142, %v2137
        %2144 = vst.msk [vmem:[#allocation6 + $0x8] sm:$0xff] %vm2142, %v2139
        %v2145 = vld [vmem:[#allocation3] sm:$0xff]
        %v2146 = vld [vmem:[#allocation3 + $0x8] sm:$0xff]
        %v2147 = vpack.c.bf16 %v2145, %v2145
        %v2148 = vpack.c.bf16 %v2146, %v2146
        %v2149 = vld [vmem:[#allocation4] sm:$0xff]
        %v2150 = vld [vmem:[#allocation4 + $0x8] sm:$0xff]
        %v2151 = vpack.c.bf16 %v2149, %v2149
        %v2152 = vpack.c.bf16 %v2150, %v2150
        %v2153 = vld [vmem:[#allocation5] sm:$0xff]
        %v2154 = vld [vmem:[#allocation5 + $0x8] sm:$0xff]
        %v2155 = vpack.c.bf16 %v2153, %v2153
        %v2156 = vpack.c.bf16 %v2154, %v2154
        %2158 = vrot.lane.b32.xlu0 %v2147, 112
        %v2159 = vpop.permute.xlu0 %2158
        %2161 = vrot.lane.b32.xlu0 %v2151, 112
        %v2162 = vpop.permute.xlu0 %2161
        %v2164 = vsel %vm1684, %v2159, 0
        %v2167 = vsel %vm1684, %v2162, 0
        %2169 = vmatprep.subr.bf16.mxu0 0
        %2170 = vmatpush1.bf16.xpose.msra.mxu0 %v2167
        %2171 = vmatprep.subr.bf16.mxu0 0
        %2172 = vmatpush1.bf16.xpose.msra.mxu0 0
        %2173 = vmatprep.subr.bf16.mxu0 0
        %2174 = vmatpush1.bf16.xpose.msra.mxu0 0
        %2175 = vmatprep.subr.bf16.mxu0 0
        %2176 = vmatpush1.bf16.xpose.msra.mxu0 0
        %2177 = vmatprep.subr.bf16.mxu0 0
        %2178 = vmatpush1.bf16.xpose.msra.mxu0 0
        %2179 = vmatprep.subr.bf16.mxu0 0
        %2180 = vmatpush1.bf16.xpose.msra.mxu0 0
        %2181 = vmatprep.subr.bf16.mxu0 0
        %2182 = vmatpush1.bf16.xpose.msra.mxu0 0
        %2183 = vmatprep.subr.bf16.mxu0 0
        %2184 = vmatpush1.bf16.xpose.msra.mxu0 0
        %2185 = vmatprep.subr.bf16.mxu0 0
        %2186 = vmatpush1.bf16.xpose.msra.mxu0 0
        %2187 = vmatprep.subr.bf16.mxu0 0
        %2188 = vmatpush1.bf16.xpose.msra.mxu0 0
        %2189 = vmatprep.subr.bf16.mxu0 0
        %2190 = vmatpush1.bf16.xpose.msra.mxu0 0
        %2191 = vmatprep.subr.bf16.mxu0 0
        %2192 = vmatpush1.bf16.xpose.msra.mxu0 0
        %2193 = vmatprep.subr.bf16.mxu0 0
        %2194 = vmatpush1.bf16.xpose.msra.mxu0 0
        %2195 = vmatprep.subr.bf16.mxu0 0
        %2196 = vmatpush1.bf16.xpose.msra.mxu0 0
        %2197 = vmatprep.subr.bf16.mxu0 0
        %2198 = vmatpush1.bf16.xpose.msra.mxu0 0
        %2199 = vmatprep.subr.bf16.mxu0 0
        %2200 = vmatpush1.bf16.xpose.msra.mxu0 0
        %2201 = vmatprep.mubr.bf16.mxu0 0
        %2202 = vmatmul.mubr.bf16.gmra.mrb[0].mxu0 %v2164
        %v2203 = vpop.f32.mrb[0].mxu0
        %v2204 = vadd.f32 0.0, %v2203
        %v2205 = vpop.f32.mrb[0].mxu0
        %v2206 = vpop.f32.mrb[0].mxu0
        %v2207 = vpop.f32.mrb[0].mxu0
        %2208 = vdwg.mxu0
        %2210 = vrot.lane.b32.xlu0 %v2148, 112
        %v2211 = vpop.permute.xlu0 %2210
        %2213 = vrot.lane.b32.xlu0 %v2152, 112
        %v2214 = vpop.permute.xlu0 %2213
        %v2216 = vsel %vm1684, %v2211, 0
        %v2219 = vsel %vm1684, %v2214, 0
        %2221 = vmatprep.subr.bf16.mxu0 0
        %2222 = vmatpush1.bf16.xpose.msra.mxu0 %v2219
        %2223 = vmatprep.subr.bf16.mxu0 0
        %2224 = vmatpush1.bf16.xpose.msra.mxu0 0
        %2225 = vmatprep.subr.bf16.mxu0 0
        %2226 = vmatpush1.bf16.xpose.msra.mxu0 0
        %2227 = vmatprep.subr.bf16.mxu0 0
        %2228 = vmatpush1.bf16.xpose.msra.mxu0 0
        %2229 = vmatprep.subr.bf16.mxu0 0
        %2230 = vmatpush1.bf16.xpose.msra.mxu0 0
        %2231 = vmatprep.subr.bf16.mxu0 0
        %2232 = vmatpush1.bf16.xpose.msra.mxu0 0
        %2233 = vmatprep.subr.bf16.mxu0 0
        %2234 = vmatpush1.bf16.xpose.msra.mxu0 0
        %2235 = vmatprep.subr.bf16.mxu0 0
        %2236 = vmatpush1.bf16.xpose.msra.mxu0 0
        %2237 = vmatprep.subr.bf16.mxu0 0
        %2238 = vmatpush1.bf16.xpose.msra.mxu0 0
        %2239 = vmatprep.subr.bf16.mxu0 0
        %2240 = vmatpush1.bf16.xpose.msra.mxu0 0
        %2241 = vmatprep.subr.bf16.mxu0 0
        %2242 = vmatpush1.bf16.xpose.msra.mxu0 0
        %2243 = vmatprep.subr.bf16.mxu0 0
        %2244 = vmatpush1.bf16.xpose.msra.mxu0 0
        %2245 = vmatprep.subr.bf16.mxu0 0
        %2246 = vmatpush1.bf16.xpose.msra.mxu0 0
        %2247 = vmatprep.subr.bf16.mxu0 0
        %2248 = vmatpush1.bf16.xpose.msra.mxu0 0
        %2249 = vmatprep.subr.bf16.mxu0 0
        %2250 = vmatpush1.bf16.xpose.msra.mxu0 0
        %2251 = vmatprep.subr.bf16.mxu0 0
        %2252 = vmatpush1.bf16.xpose.msra.mxu0 0
        %2253 = vmatprep.mubr.bf16.mxu0 0
        %2254 = vmatmul.mubr.bf16.gmra.mrb[0].mxu0 %v2216
        %v2255 = vpop.f32.mrb[0].mxu0
        %v2256 = vadd.f32 0.0, %v2255
        %v2257 = vpop.f32.mrb[0].mxu0
        %v2258 = vpop.f32.mrb[0].mxu0
        %v2259 = vpop.f32.mrb[0].mxu0
        %2260 = vdwg.mxu0
        %v2261 = vsel %vm1684, %v2204, -inf
        %2262 = vmax.xlane.f32.xlu0 %v2261
        %v2263 = vpop.xlane.xlu0 %2262
        %v2264 = vsel %vm1684, %v2256, -inf
        %2265 = vmax.xlane.f32.xlu0 %v2264
        %v2266 = vpop.xlane.xlu0 %2265
        %v2267 = vsub.f32 %v2204, %v2263
        %v2268 = vsub.f32 %v2256, %v2266
        %v2269 = vmul.f32 %v2267, 1.442695
        %v2270 = vpow.pop %v2269
        %v2271 = vmul.f32 %v2268, 1.442695
        %v2272 = vpow.pop %v2271
        %v2273 = vsel %vm1684, %v2270, 0.0
        %2274 = vadd.xlane.f32.xlu0 %v2273
        %v2275 = vpop.xlane.xlu0 %2274
        %v2276 = vsel %vm1684, %v2272, 0.0
        %2277 = vadd.xlane.f32.xlu0 %v2276
        %v2278 = vpop.xlane.xlu0 %2277
        %v2279 = vrcp.pop %v2275
        %v2280 = vrcp.pop %v2278
        %v2281 = vmul.f32 %v2270, %v2279
        %v2282 = vmul.f32 %v2272, %v2280
        %v2283 = vpack.c.bf16 %v2281, %v2281
        %v2284 = vpack.c.bf16 %v2282, %v2282
        %2286 = vrot.lane.b32.xlu0 %v2155, 112
        %v2287 = vpop.permute.xlu0 %2286
        %v2289 = vsel %vm1684, %v2283, 0
        %v2292 = vsel %vm1804, %v2287, 0
        %2294 = vmatprep.subr.bf16.mxu0 0
        %2295 = vmatpush1.bf16.msra.mxu0 %v2292
        %2296 = vmatprep.subr.bf16.mxu0 0
        %2297 = vmatpush1.bf16.msra.mxu0 0
        %2298 = vmatprep.subr.bf16.mxu0 0
        %2299 = vmatpush1.bf16.msra.mxu0 0
        %2300 = vmatprep.subr.bf16.mxu0 0
        %2301 = vmatpush1.bf16.msra.mxu0 0
        %2302 = vmatprep.subr.bf16.mxu0 0
        %2303 = vmatpush1.bf16.msra.mxu0 0
        %2304 = vmatprep.subr.bf16.mxu0 0
        %2305 = vmatpush1.bf16.msra.mxu0 0
        %2306 = vmatprep.subr.bf16.mxu0 0
        %2307 = vmatpush1.bf16.msra.mxu0 0
        %2308 = vmatprep.subr.bf16.mxu0 0
        %2309 = vmatpush1.bf16.msra.mxu0 0
        %2310 = vmatprep.subr.bf16.mxu0 0
        %2311 = vmatpush1.bf16.msra.mxu0 0
        %2312 = vmatprep.subr.bf16.mxu0 0
        %2313 = vmatpush1.bf16.msra.mxu0 0
        %2314 = vmatprep.subr.bf16.mxu0 0
        %2315 = vmatpush1.bf16.msra.mxu0 0
        %2316 = vmatprep.subr.bf16.mxu0 0
        %2317 = vmatpush1.bf16.msra.mxu0 0
        %2318 = vmatprep.subr.bf16.mxu0 0
        %2319 = vmatpush1.bf16.msra.mxu0 0
        %2320 = vmatprep.subr.bf16.mxu0 0
        %2321 = vmatpush1.bf16.msra.mxu0 0
        %2322 = vmatprep.subr.bf16.mxu0 0
        %2323 = vmatpush1.bf16.msra.mxu0 0
        %2324 = vmatprep.subr.bf16.mxu0 0
        %2325 = vmatpush1.bf16.msra.mxu0 0
        %2326 = vmatprep.mubr.bf16.mxu0 0
        %2327 = vmatmul.mubr.bf16.gmra.mrb[0].mxu0 %v2289
        %v2328 = vpop.f32.mrb[0].mxu0
        %v2329 = vadd.f32 0.0, %v2328
        %v2330 = vpop.f32.mrb[0].mxu0
        %v2331 = vpop.f32.mrb[0].mxu0
        %v2332 = vpop.f32.mrb[0].mxu0
        %2333 = vdwg.mxu0
        %2335 = vrot.lane.b32.xlu0 %v2156, 112
        %v2336 = vpop.permute.xlu0 %2335
        %v2338 = vsel %vm1684, %v2284, 0
        %v2341 = vsel %vm1804, %v2336, 0
        %2343 = vmatprep.subr.bf16.mxu0 0
        %2344 = vmatpush1.bf16.msra.mxu0 %v2341
        %2345 = vmatprep.subr.bf16.mxu0 0
        %2346 = vmatpush1.bf16.msra.mxu0 0
        %2347 = vmatprep.subr.bf16.mxu0 0
        %2348 = vmatpush1.bf16.msra.mxu0 0
        %2349 = vmatprep.subr.bf16.mxu0 0
        %2350 = vmatpush1.bf16.msra.mxu0 0
        %2351 = vmatprep.subr.bf16.mxu0 0
        %2352 = vmatpush1.bf16.msra.mxu0 0
        %2353 = vmatprep.subr.bf16.mxu0 0
        %2354 = vmatpush1.bf16.msra.mxu0 0
        %2355 = vmatprep.subr.bf16.mxu0 0
        %2356 = vmatpush1.bf16.msra.mxu0 0
        %2357 = vmatprep.subr.bf16.mxu0 0
        %2358 = vmatpush1.bf16.msra.mxu0 0
        %2359 = vmatprep.subr.bf16.mxu0 0
        %2360 = vmatpush1.bf16.msra.mxu0 0
        %2361 = vmatprep.subr.bf16.mxu0 0
        %2362 = vmatpush1.bf16.msra.mxu0 0
        %2363 = vmatprep.subr.bf16.mxu0 0
        %2364 = vmatpush1.bf16.msra.mxu0 0
        %2365 = vmatprep.subr.bf16.mxu0 0
        %2366 = vmatpush1.bf16.msra.mxu0 0
        %2367 = vmatprep.subr.bf16.mxu0 0
        %2368 = vmatpush1.bf16.msra.mxu0 0
        %2369 = vmatprep.subr.bf16.mxu0 0
        %2370 = vmatpush1.bf16.msra.mxu0 0
        %2371 = vmatprep.subr.bf16.mxu0 0
        %2372 = vmatpush1.bf16.msra.mxu0 0
        %2373 = vmatprep.subr.bf16.mxu0 0
        %2374 = vmatpush1.bf16.msra.mxu0 0
        %2375 = vmatprep.mubr.bf16.mxu0 0
        %2376 = vmatmul.mubr.bf16.gmra.mrb[0].mxu0 %v2338
        %v2377 = vpop.f32.mrb[0].mxu0
        %v2378 = vadd.f32 0.0, %v2377
        %v2379 = vpop.f32.mrb[0].mxu0
        %v2380 = vpop.f32.mrb[0].mxu0
        %v2381 = vpop.f32.mrb[0].mxu0
        %2382 = vdwg.mxu0
        %2385 = vrot.lane.b32.xlu0 %v2329, 16
        %v2386 = vpop.permute.xlu0 %2385
        %2387 = vrot.lane.b32.xlu0 %v2378, 16
        %v2388 = vpop.permute.xlu0 %2387
        %vm2391 = vcmask 195712
        %2392 = vst.msk [vmem:[#allocation6] sm:$0xff] %vm2391, %v2386
        %2393 = vst.msk [vmem:[#allocation6 + $0x8] sm:$0xff] %vm2391, %v2388
        %v2394 = vld [vmem:[#allocation3] sm:$0xff]
        %v2395 = vld [vmem:[#allocation3 + $0x8] sm:$0xff]
        %v2396 = vpack.c.bf16 %v2394, %v2394
        %v2397 = vpack.c.bf16 %v2395, %v2395
        %v2398 = vld [vmem:[#allocation4] sm:$0xff]
        %v2399 = vld [vmem:[#allocation4 + $0x8] sm:$0xff]
        %v2400 = vpack.c.bf16 %v2398, %v2398
        %v2401 = vpack.c.bf16 %v2399, %v2399
        %v2402 = vld [vmem:[#allocation5] sm:$0xff]
        %v2403 = vld [vmem:[#allocation5 + $0x8] sm:$0xff]
        %v2404 = vpack.c.bf16 %v2402, %v2402
        %v2405 = vpack.c.bf16 %v2403, %v2403
        %2407 = vrot.lane.b32.xlu0 %v2396, 104
        %v2408 = vpop.permute.xlu0 %2407
        %2410 = vrot.lane.b32.xlu0 %v2400, 104
        %v2411 = vpop.permute.xlu0 %2410
        %v2413 = vsel %vm1684, %v2408, 0
        %v2416 = vsel %vm1684, %v2411, 0
        %2418 = vmatprep.subr.bf16.mxu0 0
        %2419 = vmatpush1.bf16.xpose.msra.mxu0 %v2416
        %2420 = vmatprep.subr.bf16.mxu0 0
        %2421 = vmatpush1.bf16.xpose.msra.mxu0 0
        %2422 = vmatprep.subr.bf16.mxu0 0
        %2423 = vmatpush1.bf16.xpose.msra.mxu0 0
        %2424 = vmatprep.subr.bf16.mxu0 0
        %2425 = vmatpush1.bf16.xpose.msra.mxu0 0
        %2426 = vmatprep.subr.bf16.mxu0 0
        %2427 = vmatpush1.bf16.xpose.msra.mxu0 0
        %2428 = vmatprep.subr.bf16.mxu0 0
        %2429 = vmatpush1.bf16.xpose.msra.mxu0 0
        %2430 = vmatprep.subr.bf16.mxu0 0
        %2431 = vmatpush1.bf16.xpose.msra.mxu0 0
        %2432 = vmatprep.subr.bf16.mxu0 0
        %2433 = vmatpush1.bf16.xpose.msra.mxu0 0
        %2434 = vmatprep.subr.bf16.mxu0 0
        %2435 = vmatpush1.bf16.xpose.msra.mxu0 0
        %2436 = vmatprep.subr.bf16.mxu0 0
        %2437 = vmatpush1.bf16.xpose.msra.mxu0 0
        %2438 = vmatprep.subr.bf16.mxu0 0
        %2439 = vmatpush1.bf16.xpose.msra.mxu0 0
        %2440 = vmatprep.subr.bf16.mxu0 0
        %2441 = vmatpush1.bf16.xpose.msra.mxu0 0
        %2442 = vmatprep.subr.bf16.mxu0 0
        %2443 = vmatpush1.bf16.xpose.msra.mxu0 0
        %2444 = vmatprep.subr.bf16.mxu0 0
        %2445 = vmatpush1.bf16.xpose.msra.mxu0 0
        %2446 = vmatprep.subr.bf16.mxu0 0
        %2447 = vmatpush1.bf16.xpose.msra.mxu0 0
        %2448 = vmatprep.subr.bf16.mxu0 0
        %2449 = vmatpush1.bf16.xpose.msra.mxu0 0
        %2450 = vmatprep.mubr.bf16.mxu0 0
        %2451 = vmatmul.mubr.bf16.gmra.mrb[0].mxu0 %v2413
        %v2452 = vpop.f32.mrb[0].mxu0
        %v2453 = vadd.f32 0.0, %v2452
        %v2454 = vpop.f32.mrb[0].mxu0
        %v2455 = vpop.f32.mrb[0].mxu0
        %v2456 = vpop.f32.mrb[0].mxu0
        %2457 = vdwg.mxu0
        %2459 = vrot.lane.b32.xlu0 %v2397, 104
        %v2460 = vpop.permute.xlu0 %2459
        %2462 = vrot.lane.b32.xlu0 %v2401, 104
        %v2463 = vpop.permute.xlu0 %2462
        %v2465 = vsel %vm1684, %v2460, 0
        %v2468 = vsel %vm1684, %v2463, 0
        %2470 = vmatprep.subr.bf16.mxu0 0
        %2471 = vmatpush1.bf16.xpose.msra.mxu0 %v2468
        %2472 = vmatprep.subr.bf16.mxu0 0
        %2473 = vmatpush1.bf16.xpose.msra.mxu0 0
        %2474 = vmatprep.subr.bf16.mxu0 0
        %2475 = vmatpush1.bf16.xpose.msra.mxu0 0
        %2476 = vmatprep.subr.bf16.mxu0 0
        %2477 = vmatpush1.bf16.xpose.msra.mxu0 0
        %2478 = vmatprep.subr.bf16.mxu0 0
        %2479 = vmatpush1.bf16.xpose.msra.mxu0 0
        %2480 = vmatprep.subr.bf16.mxu0 0
        %2481 = vmatpush1.bf16.xpose.msra.mxu0 0
        %2482 = vmatprep.subr.bf16.mxu0 0
        %2483 = vmatpush1.bf16.xpose.msra.mxu0 0
        %2484 = vmatprep.subr.bf16.mxu0 0
        %2485 = vmatpush1.bf16.xpose.msra.mxu0 0
        %2486 = vmatprep.subr.bf16.mxu0 0
        %2487 = vmatpush1.bf16.xpose.msra.mxu0 0
        %2488 = vmatprep.subr.bf16.mxu0 0
        %2489 = vmatpush1.bf16.xpose.msra.mxu0 0
        %2490 = vmatprep.subr.bf16.mxu0 0
        %2491 = vmatpush1.bf16.xpose.msra.mxu0 0
        %2492 = vmatprep.subr.bf16.mxu0 0
        %2493 = vmatpush1.bf16.xpose.msra.mxu0 0
        %2494 = vmatprep.subr.bf16.mxu0 0
        %2495 = vmatpush1.bf16.xpose.msra.mxu0 0
        %2496 = vmatprep.subr.bf16.mxu0 0
        %2497 = vmatpush1.bf16.xpose.msra.mxu0 0
        %2498 = vmatprep.subr.bf16.mxu0 0
        %2499 = vmatpush1.bf16.xpose.msra.mxu0 0
        %2500 = vmatprep.subr.bf16.mxu0 0
        %2501 = vmatpush1.bf16.xpose.msra.mxu0 0
        %2502 = vmatprep.mubr.bf16.mxu0 0
        %2503 = vmatmul.mubr.bf16.gmra.mrb[0].mxu0 %v2465
        %v2504 = vpop.f32.mrb[0].mxu0
        %v2505 = vadd.f32 0.0, %v2504
        %v2506 = vpop.f32.mrb[0].mxu0
        %v2507 = vpop.f32.mrb[0].mxu0
        %v2508 = vpop.f32.mrb[0].mxu0
        %2509 = vdwg.mxu0
        %v2510 = vsel %vm1684, %v2453, -inf
        %2511 = vmax.xlane.f32.xlu0 %v2510
        %v2512 = vpop.xlane.xlu0 %2511
        %v2513 = vsel %vm1684, %v2505, -inf
        %2514 = vmax.xlane.f32.xlu0 %v2513
        %v2515 = vpop.xlane.xlu0 %2514
        %v2516 = vsub.f32 %v2453, %v2512
        %v2517 = vsub.f32 %v2505, %v2515
        %v2518 = vmul.f32 %v2516, 1.442695
        %v2519 = vpow.pop %v2518
        %v2520 = vmul.f32 %v2517, 1.442695
        %v2521 = vpow.pop %v2520
        %v2522 = vsel %vm1684, %v2519, 0.0
        %2523 = vadd.xlane.f32.xlu0 %v2522
        %v2524 = vpop.xlane.xlu0 %2523
        %v2525 = vsel %vm1684, %v2521, 0.0
        %2526 = vadd.xlane.f32.xlu0 %v2525
        %v2527 = vpop.xlane.xlu0 %2526
        %v2528 = vrcp.pop %v2524
        %v2529 = vrcp.pop %v2527
        %v2530 = vmul.f32 %v2519, %v2528
        %v2531 = vmul.f32 %v2521, %v2529
        %v2532 = vpack.c.bf16 %v2530, %v2530
        %v2533 = vpack.c.bf16 %v2531, %v2531
        %2535 = vrot.lane.b32.xlu0 %v2404, 104
        %v2536 = vpop.permute.xlu0 %2535
        %v2538 = vsel %vm1684, %v2532, 0
        %v2541 = vsel %vm1804, %v2536, 0
        %2543 = vmatprep.subr.bf16.mxu0 0
        %2544 = vmatpush1.bf16.msra.mxu0 %v2541
        %2545 = vmatprep.subr.bf16.mxu0 0
        %2546 = vmatpush1.bf16.msra.mxu0 0
        %2547 = vmatprep.subr.bf16.mxu0 0
        %2548 = vmatpush1.bf16.msra.mxu0 0
        %2549 = vmatprep.subr.bf16.mxu0 0
        %2550 = vmatpush1.bf16.msra.mxu0 0
        %2551 = vmatprep.subr.bf16.mxu0 0
        %2552 = vmatpush1.bf16.msra.mxu0 0
        %2553 = vmatprep.subr.bf16.mxu0 0
        %2554 = vmatpush1.bf16.msra.mxu0 0
        %2555 = vmatprep.subr.bf16.mxu0 0
        %2556 = vmatpush1.bf16.msra.mxu0 0
        %2557 = vmatprep.subr.bf16.mxu0 0
        %2558 = vmatpush1.bf16.msra.mxu0 0
        %2559 = vmatprep.subr.bf16.mxu0 0
        %2560 = vmatpush1.bf16.msra.mxu0 0
        %2561 = vmatprep.subr.bf16.mxu0 0
        %2562 = vmatpush1.bf16.msra.mxu0 0
        %2563 = vmatprep.subr.bf16.mxu0 0
        %2564 = vmatpush1.bf16.msra.mxu0 0
        %2565 = vmatprep.subr.bf16.mxu0 0
        %2566 = vmatpush1.bf16.msra.mxu0 0
        %2567 = vmatprep.subr.bf16.mxu0 0
        %2568 = vmatpush1.bf16.msra.mxu0 0
        %2569 = vmatprep.subr.bf16.mxu0 0
        %2570 = vmatpush1.bf16.msra.mxu0 0
        %2571 = vmatprep.subr.bf16.mxu0 0
        %2572 = vmatpush1.bf16.msra.mxu0 0
        %2573 = vmatprep.subr.bf16.mxu0 0
        %2574 = vmatpush1.bf16.msra.mxu0 0
        %2575 = vmatprep.mubr.bf16.mxu0 0
        %2576 = vmatmul.mubr.bf16.gmra.mrb[0].mxu0 %v2538
        %v2577 = vpop.f32.mrb[0].mxu0
        %v2578 = vadd.f32 0.0, %v2577
        %v2579 = vpop.f32.mrb[0].mxu0
        %v2580 = vpop.f32.mrb[0].mxu0
        %v2581 = vpop.f32.mrb[0].mxu0
        %2582 = vdwg.mxu0
        %2584 = vrot.lane.b32.xlu0 %v2405, 104
        %v2585 = vpop.permute.xlu0 %2584
        %v2587 = vsel %vm1684, %v2533, 0
        %v2590 = vsel %vm1804, %v2585, 0
        %2592 = vmatprep.subr.bf16.mxu0 0
        %2593 = vmatpush1.bf16.msra.mxu0 %v2590
        %2594 = vmatprep.subr.bf16.mxu0 0
        %2595 = vmatpush1.bf16.msra.mxu0 0
        %2596 = vmatprep.subr.bf16.mxu0 0
        %2597 = vmatpush1.bf16.msra.mxu0 0
        %2598 = vmatprep.subr.bf16.mxu0 0
        %2599 = vmatpush1.bf16.msra.mxu0 0
        %2600 = vmatprep.subr.bf16.mxu0 0
        %2601 = vmatpush1.bf16.msra.mxu0 0
        %2602 = vmatprep.subr.bf16.mxu0 0
        %2603 = vmatpush1.bf16.msra.mxu0 0
        %2604 = vmatprep.subr.bf16.mxu0 0
        %2605 = vmatpush1.bf16.msra.mxu0 0
        %2606 = vmatprep.subr.bf16.mxu0 0
        %2607 = vmatpush1.bf16.msra.mxu0 0
        %2608 = vmatprep.subr.bf16.mxu0 0
        %2609 = vmatpush1.bf16.msra.mxu0 0
        %2610 = vmatprep.subr.bf16.mxu0 0
        %2611 = vmatpush1.bf16.msra.mxu0 0
        %2612 = vmatprep.subr.bf16.mxu0 0
        %2613 = vmatpush1.bf16.msra.mxu0 0
        %2614 = vmatprep.subr.bf16.mxu0 0
        %2615 = vmatpush1.bf16.msra.mxu0 0
        %2616 = vmatprep.subr.bf16.mxu0 0
        %2617 = vmatpush1.bf16.msra.mxu0 0
        %2618 = vmatprep.subr.bf16.mxu0 0
        %2619 = vmatpush1.bf16.msra.mxu0 0
        %2620 = vmatprep.subr.bf16.mxu0 0
        %2621 = vmatpush1.bf16.msra.mxu0 0
        %2622 = vmatprep.subr.bf16.mxu0 0
        %2623 = vmatpush1.bf16.msra.mxu0 0
        %2624 = vmatprep.mubr.bf16.mxu0 0
        %2625 = vmatmul.mubr.bf16.gmra.mrb[0].mxu0 %v2587
        %v2626 = vpop.f32.mrb[0].mxu0
        %v2627 = vadd.f32 0.0, %v2626
        %v2628 = vpop.f32.mrb[0].mxu0
        %v2629 = vpop.f32.mrb[0].mxu0
        %v2630 = vpop.f32.mrb[0].mxu0
        %2631 = vdwg.mxu0
        %2634 = vrot.lane.b32.xlu0 %v2578, 24
        %v2635 = vpop.permute.xlu0 %2634
        %2636 = vrot.lane.b32.xlu0 %v2627, 24
        %v2637 = vpop.permute.xlu0 %2636
        %vm2640 = vcmask 261312
        %2641 = vst.msk [vmem:[#allocation6] sm:$0xff] %vm2640, %v2635
        %2642 = vst.msk [vmem:[#allocation6 + $0x8] sm:$0xff] %vm2640, %v2637
        %v2643 = vld [vmem:[#allocation6] sm:$0xff]
        %v2644 = vld [vmem:[#allocation6 + $0x8] sm:$0xff]
        %v2645 = vpack.c.bf16 %v2644, %v2643
        %v2646 = vld [vmem:[%s1408] sm:$0xf]
        %v2647 = vld [vmem:[%s1408 + $0x4] sm:$0xf]
        %v2648 = vld [vmem:[%s1408 + $0x8] sm:$0xf]
        %v2649 = vld [vmem:[%s1408 + $0xc] sm:$0xf]
        %v2650 = vld [vmem:[%s1168] sm:$0x1]
        %v2652 = vlaneseq
        %v2653 = vshrl.u32 %v2652, 7
        %v2654 = vsub.s32 0, %v2653
        %v2655 = vrot.slane %v2650, %v2654
        %v2661 = vunpack.c.l.b16 %v2646
        %v2662 = vunpack.c.l.b16 %v2647
        %v2663 = vunpack.c.l.b16 %v2648
        %v2664 = vunpack.c.l.b16 %v2649
        %v2665 = vpack.c.b16 %v2662, %v2661
        %v2666 = vpack.c.b16 %v2664, %v2663
        %v2670 = vsel %vm1493, %v2645, 0
        %2672 = vmatprep.subr.bf16.mxu0 0
        %2673 = vmatpush1.bf16.msra.mxu0 %v2665
        %2674 = vmatprep.subr.bf16.mxu0 0
        %2675 = vmatpush1.bf16.msra.mxu0 %v2666
        %2676 = vmatprep.subr.bf16.mxu0 0
        %2677 = vmatpush1.bf16.msra.mxu0 0
        %2678 = vmatprep.subr.bf16.mxu0 0
        %2679 = vmatpush1.bf16.msra.mxu0 0
        %2680 = vmatprep.subr.bf16.mxu0 0
        %2681 = vmatpush1.bf16.msra.mxu0 0
        %2682 = vmatprep.subr.bf16.mxu0 0
        %2683 = vmatpush1.bf16.msra.mxu0 0
        %2684 = vmatprep.subr.bf16.mxu0 0
        %2685 = vmatpush1.bf16.msra.mxu0 0
        %2686 = vmatprep.subr.bf16.mxu0 0
        %2687 = vmatpush1.bf16.msra.mxu0 0
        %2688 = vmatprep.subr.bf16.mxu0 0
        %2689 = vmatpush1.bf16.msra.mxu0 0
        %2690 = vmatprep.subr.bf16.mxu0 0
        %2691 = vmatpush1.bf16.msra.mxu0 0
        %2692 = vmatprep.subr.bf16.mxu0 0
        %2693 = vmatpush1.bf16.msra.mxu0 0
        %2694 = vmatprep.subr.bf16.mxu0 0
        %2695 = vmatpush1.bf16.msra.mxu0 0
        %2696 = vmatprep.subr.bf16.mxu0 0
        %2697 = vmatpush1.bf16.msra.mxu0 0
        %2698 = vmatprep.subr.bf16.mxu0 0
        %2699 = vmatpush1.bf16.msra.mxu0 0
        %2700 = vmatprep.subr.bf16.mxu0 0
        %2701 = vmatpush1.bf16.msra.mxu0 0
        %2702 = vmatprep.subr.bf16.mxu0 0
        %2703 = vmatpush1.bf16.msra.mxu0 0
        %2704 = vmatprep.mubr.bf16.mxu0 0
        %2705 = vmatmul.mubr.bf16.gmra.mrb[0].mxu0 %v2670
        %v2706 = vpop.f32.mrb[0].mxu0
        %v2707 = vadd.f32 %v2655, %v2706
        %v2708 = vpop.f32.mrb[0].mxu0
        %v2709 = vpop.f32.mrb[0].mxu0
        %v2710 = vadd.f32 %v2655, %v2709
        %v2711 = vpop.f32.mrb[0].mxu0
        %2712 = vdwg.mxu0
        %v2713 = vadd.f32 %v1467, %v2707
        %v2714 = vadd.f32 %v1468, %v2710
        %v2715 = vld [vmem:[%s1192] sm:$0x1]
        %v2716 = vld [vmem:[%s1200] sm:$0x1]
        %v2717 = vsel %vm1493, %v2713, 0.0
        %2718 = vadd.xlane.f32.xlu0 %v2717
        %v2719 = vpop.xlane.xlu0 %2718
        %v2720 = vsel %vm1493, %v2714, 0.0
        %2721 = vadd.xlane.f32.xlu0 %v2720
        %v2722 = vpop.xlane.xlu0 %2721
        %v2723 = vrcp.pop 32.0
        %v2724 = vmul.f32 %v2719, %v2723
        %v2725 = vmul.f32 %v2722, %v2723
        %v2726 = vsub.f32 %v2713, %v2724
        %v2727 = vsub.f32 %v2714, %v2725
        %v2728 = vmul.f32 %v2726, %v2726
        %v2729 = vmul.f32 %v2727, %v2727
        %v2730 = vsel %vm1493, %v2728, 0.0
        %2731 = vadd.xlane.f32.xlu0 %v2730
        %v2732 = vpop.xlane.xlu0 %2731
        %v2733 = vsel %vm1493, %v2729, 0.0
        %2734 = vadd.xlane.f32.xlu0 %v2733
        %v2735 = vpop.xlane.xlu0 %2734
        %v2736 = vmul.f32 %v2732, %v2723
        %v2737 = vmul.f32 %v2735, %v2723
        %v2738 = vadd.f32 %v2736, 1e-05
        %v2739 = vadd.f32 %v2737, 1e-05
        %v2740 = vrsqrt.pop %v2738
        %v2741 = vrsqrt.pop %v2739
        %v2742 = vmul.f32 %v2726, %v2740
        %v2743 = vmul.f32 %v2727, %v2741
        %v2745 = vlaneseq
        %v2746 = vshrl.u32 %v2745, 7
        %v2747 = vsub.s32 0, %v2746
        %v2748 = vrot.slane %v2715, %v2747
        %v2750 = vmul.f32 %v2742, %v2748
        %v2751 = vmul.f32 %v2743, %v2748
        %v2753 = vlaneseq
        %v2754 = vshrl.u32 %v2753, 7
        %v2755 = vsub.s32 0, %v2754
        %v2756 = vrot.slane %v2716, %v2755
        %v2758 = vadd.f32 %v2750, %v2756
        %v2759 = vadd.f32 %v2751, %v2756
        %v2760 = vpack.c.bf16 %v2759, %v2758
        %v2761 = vld [vmem:[%s1413] sm:$0xf]
        %v2762 = vld [vmem:[%s1413 + $0x4] sm:$0xf]
        %v2763 = vld [vmem:[%s1413 + $0x8] sm:$0xf]
        %v2764 = vld [vmem:[%s1413 + $0xc] sm:$0xf]
        %v2765 = vld [vmem:[%s1176] sm:$0x1]
        %v2767 = vlaneseq
        %v2768 = vshrl.u32 %v2767, 7
        %v2769 = vsub.s32 0, %v2768
        %v2770 = vrot.slane %v2765, %v2769
        %v2776 = vunpack.c.l.b16 %v2761
        %v2777 = vunpack.c.l.b16 %v2762
        %v2778 = vunpack.c.l.b16 %v2763
        %v2779 = vunpack.c.l.b16 %v2764
        %v2780 = vpack.c.b16 %v2777, %v2776
        %v2781 = vpack.c.b16 %v2779, %v2778
        %v2785 = vsel %vm1493, %v2760, 0
        %2787 = vmatprep.subr.bf16.mxu0 0
        %2788 = vmatpush1.bf16.msra.mxu0 %v2780
        %2789 = vmatprep.subr.bf16.mxu0 0
        %2790 = vmatpush1.bf16.msra.mxu0 %v2781
        %2791 = vmatprep.subr.bf16.mxu0 0
        %2792 = vmatpush1.bf16.msra.mxu0 0
        %2793 = vmatprep.subr.bf16.mxu0 0
        %2794 = vmatpush1.bf16.msra.mxu0 0
        %2795 = vmatprep.subr.bf16.mxu0 0
        %2796 = vmatpush1.bf16.msra.mxu0 0
        %2797 = vmatprep.subr.bf16.mxu0 0
        %2798 = vmatpush1.bf16.msra.mxu0 0
        %2799 = vmatprep.subr.bf16.mxu0 0
        %2800 = vmatpush1.bf16.msra.mxu0 0
        %2801 = vmatprep.subr.bf16.mxu0 0
        %2802 = vmatpush1.bf16.msra.mxu0 0
        %2803 = vmatprep.subr.bf16.mxu0 0
        %2804 = vmatpush1.bf16.msra.mxu0 0
        %2805 = vmatprep.subr.bf16.mxu0 0
        %2806 = vmatpush1.bf16.msra.mxu0 0
        %2807 = vmatprep.subr.bf16.mxu0 0
        %2808 = vmatpush1.bf16.msra.mxu0 0
        %2809 = vmatprep.subr.bf16.mxu0 0
        %2810 = vmatpush1.bf16.msra.mxu0 0
        %2811 = vmatprep.subr.bf16.mxu0 0
        %2812 = vmatpush1.bf16.msra.mxu0 0
        %2813 = vmatprep.subr.bf16.mxu0 0
        %2814 = vmatpush1.bf16.msra.mxu0 0
        %2815 = vmatprep.subr.bf16.mxu0 0
        %2816 = vmatpush1.bf16.msra.mxu0 0
        %2817 = vmatprep.subr.bf16.mxu0 0
        %2818 = vmatpush1.bf16.msra.mxu0 0
        %2819 = vmatprep.mubr.bf16.mxu0 0
        %2820 = vmatmul.mubr.bf16.gmra.mrb[0].mxu0 %v2785
        %v2821 = vpop.f32.mrb[0].mxu0
        %v2822 = vadd.f32 %v2770, %v2821
        %v2823 = vpop.f32.mrb[0].mxu0
        %v2824 = vpop.f32.mrb[0].mxu0
        %v2825 = vadd.f32 %v2770, %v2824
        %v2826 = vpop.f32.mrb[0].mxu0
        %2827 = vdwg.mxu0
        %v2828 = vmax.f32 %v2822, 0.0
        %v2829 = vmax.f32 %v2825, 0.0
        %v2830 = vpack.c.bf16 %v2829, %v2828
        %v2831 = vld [vmem:[%s1418] sm:$0xf]
        %v2832 = vld [vmem:[%s1418 + $0x4] sm:$0xf]
        %v2833 = vld [vmem:[%s1418 + $0x8] sm:$0xf]
        %v2834 = vld [vmem:[%s1418 + $0xc] sm:$0xf]
        %v2835 = vld [vmem:[%s1418 + $0x10] sm:$0xf]
        %v2836 = vld [vmem:[%s1418 + $0x14] sm:$0xf]
        %v2837 = vld [vmem:[%s1418 + $0x18] sm:$0xf]
        %v2838 = vld [vmem:[%s1418 + $0x1c] sm:$0xf]
        %v2839 = vld [vmem:[%s1418 + $0x20] sm:$0xf]
        %v2840 = vld [vmem:[%s1418 + $0x24] sm:$0xf]
        %v2841 = vld [vmem:[%s1418 + $0x28] sm:$0xf]
        %v2842 = vld [vmem:[%s1418 + $0x2c] sm:$0xf]
        %v2843 = vld [vmem:[%s1418 + $0x30] sm:$0xf]
        %v2844 = vld [vmem:[%s1418 + $0x34] sm:$0xf]
        %v2845 = vld [vmem:[%s1418 + $0x38] sm:$0xf]
        %v2846 = vld [vmem:[%s1418 + $0x3c] sm:$0xf]
        %v2847 = vld [vmem:[%s1184] sm:$0x1]
        %v2849 = vlaneseq
        %v2850 = vshrl.u32 %v2849, 7
        %v2851 = vsub.s32 0, %v2850
        %v2852 = vrot.slane %v2847, %v2851
        %v2870 = vunpack.c.l.b16 %v2831
        %v2871 = vunpack.c.l.b16 %v2832
        %v2872 = vunpack.c.l.b16 %v2833
        %v2873 = vunpack.c.l.b16 %v2834
        %v2874 = vunpack.c.l.b16 %v2835
        %v2875 = vunpack.c.l.b16 %v2836
        %v2876 = vunpack.c.l.b16 %v2837
        %v2877 = vunpack.c.l.b16 %v2838
        %v2878 = vunpack.c.l.b16 %v2839
        %v2879 = vunpack.c.l.b16 %v2840
        %v2880 = vunpack.c.l.b16 %v2841
        %v2881 = vunpack.c.l.b16 %v2842
        %v2882 = vunpack.c.l.b16 %v2843
        %v2883 = vunpack.c.l.b16 %v2844
        %v2884 = vunpack.c.l.b16 %v2845
        %v2885 = vunpack.c.l.b16 %v2846
        %v2886 = vpack.c.b16 %v2871, %v2870
        %v2887 = vpack.c.b16 %v2873, %v2872
        %v2888 = vpack.c.b16 %v2875, %v2874
        %v2889 = vpack.c.b16 %v2877, %v2876
        %v2890 = vpack.c.b16 %v2879, %v2878
        %v2891 = vpack.c.b16 %v2881, %v2880
        %v2892 = vpack.c.b16 %v2883, %v2882
        %v2893 = vpack.c.b16 %v2885, %v2884
        %2902 = vmatprep.subr.bf16.mxu0 0
        %2903 = vmatpush1.bf16.msra.mxu0 %v2886
        %2904 = vmatprep.subr.bf16.mxu0 0
        %2905 = vmatpush1.bf16.msra.mxu0 %v2887
        %2906 = vmatprep.subr.bf16.mxu0 0
        %2907 = vmatpush1.bf16.msra.mxu0 %v2888
        %2908 = vmatprep.subr.bf16.mxu0 0
        %2909 = vmatpush1.bf16.msra.mxu0 %v2889
        %2910 = vmatprep.subr.bf16.mxu0 0
        %2911 = vmatpush1.bf16.msra.mxu0 %v2890
        %2912 = vmatprep.subr.bf16.mxu0 0
        %2913 = vmatpush1.bf16.msra.mxu0 %v2891
        %2914 = vmatprep.subr.bf16.mxu0 0
        %2915 = vmatpush1.bf16.msra.mxu0 %v2892
        %2916 = vmatprep.subr.bf16.mxu0 0
        %2917 = vmatpush1.bf16.msra.mxu0 %v2893
        %2918 = vmatprep.subr.bf16.mxu0 0
        %2919 = vmatpush1.bf16.msra.mxu0 0
        %2920 = vmatprep.subr.bf16.mxu0 0
        %2921 = vmatpush1.bf16.msra.mxu0 0
        %2922 = vmatprep.subr.bf16.mxu0 0
        %2923 = vmatpush1.bf16.msra.mxu0 0
        %2924 = vmatprep.subr.bf16.mxu0 0
        %2925 = vmatpush1.bf16.msra.mxu0 0
        %2926 = vmatprep.subr.bf16.mxu0 0
        %2927 = vmatpush1.bf16.msra.mxu0 0
        %2928 = vmatprep.subr.bf16.mxu0 0
        %2929 = vmatpush1.bf16.msra.mxu0 0
        %2930 = vmatprep.subr.bf16.mxu0 0
        %2931 = vmatpush1.bf16.msra.mxu0 0
        %2932 = vmatprep.subr.bf16.mxu0 0
        %2933 = vmatpush1.bf16.msra.mxu0 0
        %2934 = vmatprep.mubr.bf16.mxu0 0
        %2935 = vmatmul.mubr.bf16.gmra.mrb[0].mxu0 %v2830
        %v2936 = vpop.f32.mrb[0].mxu0
        %v2937 = vadd.f32 %v2852, %v2936
        %v2938 = vpop.f32.mrb[0].mxu0
        %v2939 = vpop.f32.mrb[0].mxu0
        %v2940 = vadd.f32 %v2852, %v2939
        %v2941 = vpop.f32.mrb[0].mxu0
        %2942 = vdwg.mxu0
        %v2943 = vadd.f32 %v2758, %v2937
        %v2944 = vadd.f32 %v2759, %v2940
        %v2945 = vld [vmem:[%s1208] sm:$0x1]
        %v2946 = vld [vmem:[%s1216] sm:$0x1]
        %v2947 = vsel %vm1493, %v2943, 0.0
        %2948 = vadd.xlane.f32.xlu0 %v2947
        %v2949 = vpop.xlane.xlu0 %2948
        %v2950 = vsel %vm1493, %v2944, 0.0
        %2951 = vadd.xlane.f32.xlu0 %v2950
        %v2952 = vpop.xlane.xlu0 %2951
        %v2953 = vmul.f32 %v2949, %v2723
        %v2954 = vmul.f32 %v2952, %v2723
        %v2955 = vsub.f32 %v2943, %v2953
        %v2956 = vsub.f32 %v2944, %v2954
        %v2957 = vmul.f32 %v2955, %v2955
        %v2958 = vmul.f32 %v2956, %v2956
        %v2959 = vsel %vm1493, %v2957, 0.0
        %2960 = vadd.xlane.f32.xlu0 %v2959
        %v2961 = vpop.xlane.xlu0 %2960
        %v2962 = vsel %vm1493, %v2958, 0.0
        %2963 = vadd.xlane.f32.xlu0 %v2962
        %v2964 = vpop.xlane.xlu0 %2963
        %v2965 = vmul.f32 %v2961, %v2723
        %v2966 = vmul.f32 %v2964, %v2723
        %v2967 = vadd.f32 %v2965, 1e-05
        %v2968 = vadd.f32 %v2966, 1e-05
        %v2969 = vrsqrt.pop %v2967
        %v2970 = vrsqrt.pop %v2968
        %v2971 = vmul.f32 %v2955, %v2969
        %v2972 = vmul.f32 %v2956, %v2970
        %v2974 = vlaneseq
        %v2975 = vshrl.u32 %v2974, 7
        %v2976 = vsub.s32 0, %v2975
        %v2977 = vrot.slane %v2945, %v2976
        %v2979 = vmul.f32 %v2971, %v2977
        %v2980 = vmul.f32 %v2972, %v2977
        %v2982 = vlaneseq
        %v2983 = vshrl.u32 %v2982, 7
        %v2984 = vsub.s32 0, %v2983
        %v2985 = vrot.slane %v2946, %v2984
        %v2987 = vadd.f32 %v2979, %v2985
        %v2988 = vadd.f32 %v2980, %v2985
        %2989 = vst.msk [vmem:[#allocation2] sm:$0xff] %vm1493, %v2987
        %2990 = vst.msk [vmem:[#allocation2 + $0x8] sm:$0xff] %vm1493, %v2988
        %p2991 = scmp.eq.s32.totalorder %s81, 1
        // Predicated region
        $region201: #{transformer_operator_forward.1} parent=131 // pred_check
          %p2992 = pneg %p2991
        $region202: #{transformer_operator_forward.1} parent=131 // pred_check_branch
          %2994 = sbr.rel (%p2992) target = $region204
        $region203: #{transformer_operator_forward.1} parent=131 // pred_region
          %v2995 = vsel %vm1493, %v2987, 0.0
          %v2996 = vrot.slane %v2995, 4
          %v2997 = vadd.f32 %v2995, %v2996
          %v2998 = vrot.slane %v2997, 2
          %v2999 = vadd.f32 %v2997, %v2998
          %v3000 = vrot.slane %v2999, 1
          %v3001 = vadd.f32 %v2999, %v3000
          %v3002 = vsel %vm1493, %v2988, 0.0
          %v3003 = vrot.slane %v3002, 4
          %v3004 = vadd.f32 %v3002, %v3003
          %v3005 = vrot.slane %v3004, 2
          %v3006 = vadd.f32 %v3004, %v3005
          %v3007 = vrot.slane %v3006, 1
          %v3008 = vadd.f32 %v3006, %v3007
          %v3009 = vrcp.pop 8.0
          %v3010 = vmul.f32 %v3001, %v3009
          %v3011 = vmul.f32 %v3008, %v3009
          %v3012 = vpack.c.bf16 %v3010, %v3010
          %v3013 = vpack.c.bf16 %v3011, %v3011
          %v3014 = vld [vmem:[%s41] sm:$0xf]
          %v3015 = vld [vmem:[%s41 + $0x4] sm:$0xf]
          %v3016 = vld [vmem:[%s41 + $0x8] sm:$0xf]
          %v3017 = vld [vmem:[%s41 + $0xc] sm:$0xf]
          %v3018 = vld [vmem:[#allocation21] sm:$0x1]
          %v3020 = vlaneseq
          %v3021 = vshrl.u32 %v3020, 7
          %v3022 = vsub.s32 0, %v3021
          %v3023 = vrot.slane %v3018, %v3022
          %v3027 = vunpack.c.l.b16 %v3012
          %v3028 = vunpack.c.l.b16 %v3013
          %vm3029 = vcmask 1041409
          %v3030 = vsel %vm3029, %v3028, %v3027
          %v3031 = vpack.c.b16 %v3030, %v3030
          %v3036 = vunpack.c.l.b16 %v3014
          %v3037 = vunpack.c.l.b16 %v3015
          %v3038 = vunpack.c.l.b16 %v3016
          %v3039 = vunpack.c.l.b16 %v3017
          %v3040 = vpack.c.b16 %v3037, %v3036
          %v3041 = vpack.c.b16 %v3039, %v3038
          %v3045 = vsel %vm1493, %v3031, 0
          %3047 = vmatprep.subr.bf16.mxu0 0
          %3048 = vmatpush1.bf16.msra.mxu0 %v3040
          %3049 = vmatprep.subr.bf16.mxu0 0
          %3050 = vmatpush1.bf16.msra.mxu0 %v3041
          %3051 = vmatprep.subr.bf16.mxu0 0
          %3052 = vmatpush1.bf16.msra.mxu0 0
          %3053 = vmatprep.subr.bf16.mxu0 0
          %3054 = vmatpush1.bf16.msra.mxu0 0
          %3055 = vmatprep.subr.bf16.mxu0 0
          %3056 = vmatpush1.bf16.msra.mxu0 0
          %3057 = vmatprep.subr.bf16.mxu0 0
          %3058 = vmatpush1.bf16.msra.mxu0 0
          %3059 = vmatprep.subr.bf16.mxu0 0
          %3060 = vmatpush1.bf16.msra.mxu0 0
          %3061 = vmatprep.subr.bf16.mxu0 0
          %3062 = vmatpush1.bf16.msra.mxu0 0
          %3063 = vmatprep.subr.bf16.mxu0 0
          %3064 = vmatpush1.bf16.msra.mxu0 0
          %3065 = vmatprep.subr.bf16.mxu0 0
          %3066 = vmatpush1.bf16.msra.mxu0 0
          %3067 = vmatprep.subr.bf16.mxu0 0
          %3068 = vmatpush1.bf16.msra.mxu0 0
          %3069 = vmatprep.subr.bf16.mxu0 0
          %3070 = vmatpush1.bf16.msra.mxu0 0
          %3071 = vmatprep.subr.bf16.mxu0 0
          %3072 = vmatpush1.bf16.msra.mxu0 0
          %3073 = vmatprep.subr.bf16.mxu0 0
          %3074 = vmatpush1.bf16.msra.mxu0 0
          %3075 = vmatprep.subr.bf16.mxu0 0
          %3076 = vmatpush1.bf16.msra.mxu0 0
          %3077 = vmatprep.subr.bf16.mxu0 0
          %3078 = vmatpush1.bf16.msra.mxu0 0
          %3079 = vmatprep.mubr.bf16.mxu0 0
          %3080 = vmatmul.mubr.bf16.gmra.mrb[0].mxu0 %v3045
          %v3081 = vpop.f32.mrb[0].mxu0
          %v3082 = vadd.f32 %v3023, %v3081
          %v3083 = vpop.f32.mrb[0].mxu0
          %v3084 = vpop.f32.mrb[0].mxu0
          %v3085 = vpop.f32.mrb[0].mxu0
          %3086 = vdwg.mxu0
          %v3087 = vmax.f32 %v3082, 0.0
          %v3088 = vpack.c.bf16 %v3087, %v3087
          %v3089 = vld [vmem:[#allocation22] sm:$0xf]
          %v3090 = vld [vmem:[#allocation22 + $0x4] sm:$0xf]
          %v3091 = vld [vmem:[#allocation22 + $0x8] sm:$0xf]
          %v3092 = vld [vmem:[#allocation22 + $0xc] sm:$0xf]
          %v3093 = vld [vmem:[#allocation24] sm:$0x1]
          %v3095 = vlaneseq
          %v3096 = vshrl.u32 %v3095, 7
          %v3097 = vsub.s32 0, %v3096
          %v3098 = vrot.slane %v3093, %v3097
          %v3104 = vunpack.c.l.b16 %v3089
          %v3105 = vunpack.c.l.b16 %v3090
          %v3106 = vunpack.c.l.b16 %v3091
          %v3107 = vunpack.c.l.b16 %v3092
          %v3108 = vpack.c.b16 %v3105, %v3104
          %v3109 = vpack.c.b16 %v3107, %v3106
          %v3113 = vsel %vm1493, %v3088, 0
          %3115 = vmatprep.subr.bf16.mxu0 0
          %3116 = vmatpush1.bf16.msra.mxu0 %v3108
          %3117 = vmatprep.subr.bf16.mxu0 0
          %3118 = vmatpush1.bf16.msra.mxu0 %v3109
          %3119 = vmatprep.subr.bf16.mxu0 0
          %3120 = vmatpush1.bf16.msra.mxu0 0
          %3121 = vmatprep.subr.bf16.mxu0 0
          %3122 = vmatpush1.bf16.msra.mxu0 0
          %3123 = vmatprep.subr.bf16.mxu0 0
          %3124 = vmatpush1.bf16.msra.mxu0 0
          %3125 = vmatprep.subr.bf16.mxu0 0
          %3126 = vmatpush1.bf16.msra.mxu0 0
          %3127 = vmatprep.subr.bf16.mxu0 0
          %3128 = vmatpush1.bf16.msra.mxu0 0
          %3129 = vmatprep.subr.bf16.mxu0 0
          %3130 = vmatpush1.bf16.msra.mxu0 0
          %3131 = vmatprep.subr.bf16.mxu0 0
          %3132 = vmatpush1.bf16.msra.mxu0 0
          %3133 = vmatprep.subr.bf16.mxu0 0
          %3134 = vmatpush1.bf16.msra.mxu0 0
          %3135 = vmatprep.subr.bf16.mxu0 0
          %3136 = vmatpush1.bf16.msra.mxu0 0
          %3137 = vmatprep.subr.bf16.mxu0 0
          %3138 = vmatpush1.bf16.msra.mxu0 0
          %3139 = vmatprep.subr.bf16.mxu0 0
          %3140 = vmatpush1.bf16.msra.mxu0 0
          %3141 = vmatprep.subr.bf16.mxu0 0
          %3142 = vmatpush1.bf16.msra.mxu0 0
          %3143 = vmatprep.subr.bf16.mxu0 0
          %3144 = vmatpush1.bf16.msra.mxu0 0
          %3145 = vmatprep.subr.bf16.mxu0 0
          %3146 = vmatpush1.bf16.msra.mxu0 0
          %3147 = vmatprep.mubr.bf16.mxu0 0
          %3148 = vmatmul.mubr.bf16.gmra.mrb[0].mxu0 %v3113
          %v3149 = vpop.f32.mrb[0].mxu0
          %v3150 = vadd.f32 %v3098, %v3149
          %v3151 = vpop.f32.mrb[0].mxu0
          %v3152 = vpop.f32.mrb[0].mxu0
          %v3153 = vpop.f32.mrb[0].mxu0
          %3154 = vdwg.mxu0
          %v3157 = vunpack.c.l.s4 1966171168
          %v3158 = vunpack.c.0.s8 %v3157
          %v3159 = vlaneseq
          %v3160 = vshrl.u32 %v3159, 7
          %v3161 = vsub.s32 %v3158, %v3160
          %v3162 = vrot.slane %v3150, %v3161
          %v3163 = vcombine.high %v3162, %v3162
          %v3165 = vunpack.c.l.s4 1966171168
          %v3166 = vunpack.c.0.s8 %v3165
          %v3167 = vlaneseq
          %v3168 = vshrl.u32 %v3167, 7
          %v3169 = vsub.s32 %v3166, %v3168
          %v3170 = vrot.slane %v3162, %v3169
          %v3172 = vunpack.c.l.s4 1966171168
          %v3173 = vunpack.c.0.s8 %v3172
          %v3174 = vlaneseq
          %v3175 = vshrl.u32 %v3174, 7
          %v3176 = vsub.s32 %v3173, %v3175
          %v3177 = vrot.slane %v3163, %v3176
          %3180 = vst [vmem:[#allocation28] sm:$0x1] %v3170
          %3181 = vst [vmem:[#allocation28 + $0x1] sm:$0x1] %v3177
          %v3182 = vpack.c.bf16 %v2988, %v2987
          %v3183 = vld [vmem:[%s49] sm:$0xf]
          %v3184 = vld [vmem:[%s49 + $0x4] sm:$0xf]
          %v3185 = vld [vmem:[%s49 + $0x8] sm:$0xf]
          %v3186 = vld [vmem:[%s49 + $0xc] sm:$0xf]
          %v3187 = vld [vmem:[#allocation25] sm:$0x1]
          %v3189 = vlaneseq
          %v3190 = vshrl.u32 %v3189, 7
          %v3191 = vsub.s32 0, %v3190
          %v3192 = vrot.slane %v3187, %v3191
          %v3198 = vunpack.c.l.b16 %v3183
          %v3199 = vunpack.c.l.b16 %v3184
          %v3200 = vunpack.c.l.b16 %v3185
          %v3201 = vunpack.c.l.b16 %v3186
          %v3202 = vpack.c.b16 %v3199, %v3198
          %v3203 = vpack.c.b16 %v3201, %v3200
          %v3207 = vsel %vm1493, %v3182, 0
          %3209 = vmatprep.subr.bf16.mxu0 0
          %3210 = vmatpush1.bf16.msra.mxu0 %v3202
          %3211 = vmatprep.subr.bf16.mxu0 0
          %3212 = vmatpush1.bf16.msra.mxu0 %v3203
          %3213 = vmatprep.subr.bf16.mxu0 0
          %3214 = vmatpush1.bf16.msra.mxu0 0
          %3215 = vmatprep.subr.bf16.mxu0 0
          %3216 = vmatpush1.bf16.msra.mxu0 0
          %3217 = vmatprep.subr.bf16.mxu0 0
          %3218 = vmatpush1.bf16.msra.mxu0 0
          %3219 = vmatprep.subr.bf16.mxu0 0
          %3220 = vmatpush1.bf16.msra.mxu0 0
          %3221 = vmatprep.subr.bf16.mxu0 0
          %3222 = vmatpush1.bf16.msra.mxu0 0
          %3223 = vmatprep.subr.bf16.mxu0 0
          %3224 = vmatpush1.bf16.msra.mxu0 0
          %3225 = vmatprep.subr.bf16.mxu0 0
          %3226 = vmatpush1.bf16.msra.mxu0 0
          %3227 = vmatprep.subr.bf16.mxu0 0
          %3228 = vmatpush1.bf16.msra.mxu0 0
          %3229 = vmatprep.subr.bf16.mxu0 0
          %3230 = vmatpush1.bf16.msra.mxu0 0
          %3231 = vmatprep.subr.bf16.mxu0 0
          %3232 = vmatpush1.bf16.msra.mxu0 0
          %3233 = vmatprep.subr.bf16.mxu0 0
          %3234 = vmatpush1.bf16.msra.mxu0 0
          %3235 = vmatprep.subr.bf16.mxu0 0
          %3236 = vmatpush1.bf16.msra.mxu0 0
          %3237 = vmatprep.subr.bf16.mxu0 0
          %3238 = vmatpush1.bf16.msra.mxu0 0
          %3239 = vmatprep.subr.bf16.mxu0 0
          %3240 = vmatpush1.bf16.msra.mxu0 0
          %3241 = vmatprep.mubr.bf16.mxu0 0
          %3242 = vmatmul.mubr.bf16.gmra.mrb[0].mxu0 %v3207
          %v3243 = vpop.f32.mrb[0].mxu0
          %v3244 = vadd.f32 %v3192, %v3243
          %v3245 = vpop.f32.mrb[0].mxu0
          %v3246 = vpop.f32.mrb[0].mxu0
          %v3247 = vadd.f32 %v3192, %v3246
          %v3248 = vpop.f32.mrb[0].mxu0
          %3249 = vdwg.mxu0
          %v3250 = vmax.f32 %v3244, 0.0
          %v3251 = vmax.f32 %v3247, 0.0
          %v3252 = vpack.c.bf16 %v3251, %v3250
          %v3253 = vld [vmem:[%s53] sm:$0xf]
          %v3254 = vld [vmem:[%s53 + $0x4] sm:$0xf]
          %v3255 = vld [vmem:[%s53 + $0x8] sm:$0xf]
          %v3256 = vld [vmem:[%s53 + $0xc] sm:$0xf]
          %v3257 = vld [vmem:[#allocation27] sm:$0x1]
          %v3259 = vlaneseq
          %v3260 = vshrl.u32 %v3259, 7
          %v3261 = vsub.s32 0, %v3260
          %v3262 = vrot.slane %v3257, %v3261
          %v3268 = vunpack.c.l.b16 %v3253
          %v3269 = vunpack.c.l.b16 %v3254
          %v3270 = vunpack.c.l.b16 %v3255
          %v3271 = vunpack.c.l.b16 %v3256
          %v3272 = vpack.c.b16 %v3269, %v3268
          %v3273 = vpack.c.b16 %v3271, %v3270
          %v3277 = vsel %vm1493, %v3252, 0
          %3279 = vmatprep.subr.bf16.mxu0 0
          %3280 = vmatpush1.bf16.msra.mxu0 %v3272
          %3281 = vmatprep.subr.bf16.mxu0 0
          %3282 = vmatpush1.bf16.msra.mxu0 %v3273
          %3283 = vmatprep.subr.bf16.mxu0 0
          %3284 = vmatpush1.bf16.msra.mxu0 0
          %3285 = vmatprep.subr.bf16.mxu0 0
          %3286 = vmatpush1.bf16.msra.mxu0 0
          %3287 = vmatprep.subr.bf16.mxu0 0
          %3288 = vmatpush1.bf16.msra.mxu0 0
          %3289 = vmatprep.subr.bf16.mxu0 0
          %3290 = vmatpush1.bf16.msra.mxu0 0
          %3291 = vmatprep.subr.bf16.mxu0 0
          %3292 = vmatpush1.bf16.msra.mxu0 0
          %3293 = vmatprep.subr.bf16.mxu0 0
          %3294 = vmatpush1.bf16.msra.mxu0 0
          %3295 = vmatprep.subr.bf16.mxu0 0
          %3296 = vmatpush1.bf16.msra.mxu0 0
          %3297 = vmatprep.subr.bf16.mxu0 0
          %3298 = vmatpush1.bf16.msra.mxu0 0
          %3299 = vmatprep.subr.bf16.mxu0 0
          %3300 = vmatpush1.bf16.msra.mxu0 0
          %3301 = vmatprep.subr.bf16.mxu0 0
          %3302 = vmatpush1.bf16.msra.mxu0 0
          %3303 = vmatprep.subr.bf16.mxu0 0
          %3304 = vmatpush1.bf16.msra.mxu0 0
          %3305 = vmatprep.subr.bf16.mxu0 0
          %3306 = vmatpush1.bf16.msra.mxu0 0
          %3307 = vmatprep.subr.bf16.mxu0 0
          %3308 = vmatpush1.bf16.msra.mxu0 0
          %3309 = vmatprep.subr.bf16.mxu0 0
          %3310 = vmatpush1.bf16.msra.mxu0 0
          %3311 = vmatprep.mubr.bf16.mxu0 0
          %3312 = vmatmul.mubr.bf16.gmra.mrb[0].mxu0 %v3277
          %v3313 = vpop.f32.mrb[0].mxu0
          %v3314 = vadd.f32 %v3262, %v3313
          %v3315 = vpop.f32.mrb[0].mxu0
          %v3316 = vpop.f32.mrb[0].mxu0
          %v3317 = vadd.f32 %v3262, %v3316
          %v3318 = vpop.f32.mrb[0].mxu0
          %3319 = vdwg.mxu0
          %v3320 = vmul.f32 %v3314, %v3314
          %v3321 = vmul.f32 %v3317, %v3317
          %v3322 = vrot.slane %v3320, 4
          %v3323 = vadd.f32 %v3320, %v3322
          %v3324 = vrot.slane %v3323, 2
          %v3325 = vadd.f32 %v3323, %v3324
          %v3326 = vrot.slane %v3325, 1
          %v3327 = vadd.f32 %v3325, %v3326
          %v3328 = vrot.slane %v3321, 4
          %v3329 = vadd.f32 %v3321, %v3328
          %v3330 = vrot.slane %v3329, 2
          %v3331 = vadd.f32 %v3329, %v3330
          %v3332 = vrot.slane %v3331, 1
          %v3333 = vadd.f32 %v3331, %v3332
          %v3334 = vmax.f32 %v3327, 1e-24
          %v3335 = vmax.f32 %v3333, 1e-24
          %v3336 = vrsqrt.pop %v3334
          %v3337 = vrsqrt.pop %v3335
          %v3338 = vmul.f32 %v3314, %v3336
          %v3339 = vmul.f32 %v3317, %v3337
          %3340 = vst [vmem:[%s1424] sm:$0xff] %v3338
          %3341 = vst [vmem:[%s1424 + $0x8] sm:$0xff] %v3339
        $region204: #{transformer_operator_forward.1} parent=131 // pred_fallthru
          _
        %s3342 = smul.u32 2, %s80
        %p3343 = scmp.lt.s32.totalorder %s3342, 1
        %s3344 = scalar_select %p3343, %s3342, 1
        %s3345 = smul.addr %s3344, 8
        %s3346 = scalar_lea.vmem %s59, %s3345
        // Predicated region
        $region205: #{transformer_operator_forward.1} parent=131 // pred_check
          %p3347 = pneg %p779
        $region206: #{transformer_operator_forward.1} parent=131 // pred_check_branch
          %3349 = sbr.rel (%p3347) target = $region208
        $region207: #{transformer_operator_forward.1} parent=131 // pred_region
          %s3350 = smul.u32 2, %s80
          %s3352 = ssub.s32 32, 32
          %3353 = vsyncadd [#allocation9], %s3352
          %s3354 = smul.addr %s3350, 16
          %s3355 = scalar_lea.hbm %s57, %s3354
          %s3356 = sshll.u32 [#allocation28], 4
          %s3357 = int_to_ptr.vmem [resolvable:$true] %s3356
          %3362 = dma.vmem_to_hbm [thread:$0]  %s3357, 32, %s3355, [#allocation9], 16, 16, 1
        $region208: #{transformer_operator_forward.1} parent=131 // pred_fallthru
          _
        // Predicated region
        $region209: #{transformer_operator_forward.1} parent=131 // pred_check
          %p3363 = pneg %p805
        $region210: #{transformer_operator_forward.1} parent=131 // pred_check_branch
          %3365 = sbr.rel (%p3363) target = $region212
        $region211: #{transformer_operator_forward.1} parent=131 // pred_region
          %s3366 = smul.u32 2, %s80
        $region212: #{transformer_operator_forward.1} parent=131 // pred_fallthru
          _
        // Predicated region
        $region213: #{transformer_operator_forward.1} parent=131 // pred_check
          %p3367 = pneg %p779
        $region214: #{transformer_operator_forward.1} parent=131 // pred_check_branch
          %3369 = sbr.rel (%p3367) target = $region216
        $region215: #{transformer_operator_forward.1} parent=131 // pred_region
          %3370 = dma.done [#allocation9], 32
        $region216: #{transformer_operator_forward.1} parent=131 // pred_fallthru
          _
        // Predicated region
        $region217: #{transformer_operator_forward.1} parent=131 // pred_check
          %p3371 = pneg %p805
        $region218: #{transformer_operator_forward.1} parent=131 // pred_check_branch
          %3373 = sbr.rel (%p3371) target = $region220
        $region219: #{transformer_operator_forward.1} parent=131 // pred_region
          %s3374 = smul.u32 2, %s80
          %p3375 = scmp.lt.s32.totalorder %s3374, 1
          %s3376 = scalar_select %p3375, %s3374, 1
          %s3377 = smul.addr %s3376, 8
          %s3378 = scalar_lea.vmem %s59, %s3377
        $region220: #{transformer_operator_forward.1} parent=131 // pred_fallthru
          _
      $region132: #{transformer_operator_forward.1} parent=5 // pred_fallthru
        _
      %p3379 = scmp.le.s32.totalorder 2, %s71
      // Predicated region
      $region221: #{transformer_operator_forward.1} parent=5 // pred_check
        %p3380 = pneg %p3379
      $region222: #{transformer_operator_forward.1} parent=5 // pred_check_branch
        %3382 = sbr.rel (%p3380) target = $region224
      $region223: #{transformer_operator_forward.1} parent=5 // pred_region
        %s3383 = ssub.s32 %s71, 2
      $region224: #{transformer_operator_forward.1} parent=5 // pred_fallthru
        _
    $region6: #{transformer_operator_forward.1} parent=1 // loop_footer
      %s75 = sadd.s32 1, %s71
    $region7: #{transformer_operator_forward.1} parent=1 // loop_footer_branch
      %70 = sbr.rel target = $region3
    $region8: #{transformer_operator_forward.1} parent=1 // loop_exit
      _
    %3384 = vsyncpa [#allocation8], 1
    %s3385 = scalar_lea.sflag [#allocation8], 1
    %3386 = vsyncpa %s3385, 1
    %3387 = vsyncpa [#allocation11], 1
    %3388 = vsyncpa [#allocation23], 1
    %3389 = vsyncpa [#allocation26], 1
    %3390 = vsyncpa [#allocation9], 1
    %s3391 = scalar_lea.sflag [#allocation9], 1
    %3392 = vsyncpa %s3391, 1

</llo_original>
